<compile_context>
chip_gen: v6e
topology: v6e:2x2x1
jax: 0.10.0
libtpu: 0.0.40
codegen_flags: <defaults>
</compile_context>

<pallas_src>
import math
import functools

import jax
import jax.numpy as jnp
from jax import lax
from jax.experimental import pallas as pl
from jax.experimental.pallas import tpu as pltpu


def _recip(x, approx):
    # EUP approximate reciprocal when allowed, exact VPU division otherwise.
    return pl.reciprocal(x, approx=True) if approx else 1.0 / x


def _layer_norm(x, gamma, beta, eps=1e-6):
    # bert_pytorch LayerNorm: unbiased (N-1) std, eps added to std; stats and division in f32
    # (exact division kept here on purpose -- see review correctness concerns).
    h = x.shape[-1]
    mean = jnp.sum(x, axis=-1, keepdims=True) * (1.0 / h)
    d = x - mean
    var = jnp.sum(d * d, axis=-1, keepdims=True) * (1.0 / (h - 1))
    inv = 1.0 / (jnp.sqrt(var) + eps)
    return gamma * (d * inv) + beta


def _gelu_tanh(x):
    # bert_pytorch GELU (tanh approximation), kept in f32.
    c = math.sqrt(2.0 / math.pi)
    return 0.5 * x * (1.0 + jnp.tanh(c * (x + 0.044715 * (x * x * x))))


def transformer_block_kernel(
    x_ref, maskb_ref,
    wq_ref, bq_ref, wkv_ref, bkv_ref, wo_ref,
    w1_ref, b1_ref, w2_ref, vecs_ref,
    o_ref,
    kh_scr, vh_scr,
    *, n_heads, seq_tile, approx_reciprocal,
):
    f32 = jnp.float32
    S = x_ref.shape[1]
    H = x_ref.shape[2]
    dk = H // n_heads
    cdt = wq_ref.dtype                      # matmul compute dtype (bf16 default, f32 exact path)

    # Packed per-channel vectors: g1, be1, g2, be2, bo, b2 (each (1, H)).
    g1, be1 = vecs_ref[0:1], vecs_ref[1:2]
    g2, be2 = vecs_ref[2:3], vecs_ref[3:4]
    bo, b2 = vecs_ref[4:5], vecs_ref[5:6]

    qt = pl.program_id(1)

    # ---- once per batch row (qt == 0): full-sequence LayerNorm + fused K/V projection ----
    # Cached in VMEM scratch and reused by every query tile of this batch row
    # (the qt grid axis is "arbitrary", i.e. strictly sequential).
    @pl.when(qt == 0)
    def _():
        xn_full = _layer_norm(x_ref[0], g1, be1)                       # (S, H) f32
        kv_t = lax.dot_general(                                        # (2H, S) = Wkv @ xn^T
            wkv_ref[...], xn_full.astype(cdt),
            (((1,), (1,)), ((), ())), preferred_element_type=f32,
        ) + bkv_ref[...]
        kh_scr[...] = kv_t[:H].reshape(n_heads, dk, S).astype(cdt)     # (nh, dk, S)
        vh_scr[...] = kv_t[H:].reshape(n_heads, dk, S).astype(cdt)     # (nh, dk, S)

    # ---- per query tile ----
    q0 = pl.multiple_of(qt * seq_tile, seq_tile)
    x_t = x_ref[0, pl.ds(q0, seq_tile), :]                             # (TQ, H) f32 residual

    # -------- sublayer 1: x + MHA(LayerNorm(x)) --------
    xn_t = _layer_norm(x_t, g1, be1)
    # Q projection for this tile only, produced transposed: (H, TQ).
    # 1/sqrt(d_k) is pre-folded into wq / bq in the wrapper.
    q_t = lax.dot_general(
        wq_ref[...], xn_t.astype(cdt),
        (((1,), (1,)), ((), ())), preferred_element_type=f32,
    ) + bq_ref[...]
    q_h = q_t.reshape(n_heads, dk, seq_tile).astype(cdt)               # (nh, dk, TQ)

    # scores[h, i, j] = sum_d q[h,d,i] * k[h,d,j]  -- contract the dk sublane axis of both
    # operands (no swapaxes / lane-padded q layout).
    scores = lax.dot_general(
        q_h, kh_scr[...], (((1,), (1,)), ((0,), (0,))),
        preferred_element_type=f32,
    )                                                                  # (nh, TQ, S) f32
    scores = scores + maskb_ref[...]                                   # additive (1,1,S) mask bias

    smax = jnp.max(scores, axis=-1, keepdims=True)
    p = jnp.exp(scores - smax)
    p = p * _recip(jnp.sum(p, axis=-1, keepdims=True), approx_reciprocal)

    # ctx_t[h, d, i] = sum_j v[h,d,j] * p[h,i,j]
    ctx_t = lax.dot_general(
        vh_scr[...], p.astype(cdt), (((2,), (2,)), ((0,), (0,))),
        preferred_element_type=f32,
    )                                                                  # (nh, dk, TQ)

    # Head re-fuse is a free leading-dim merge; the transpose is folded into the output
    # projection by contracting dim 0 (feature axis) of ctx with dim 0 of wo.
    attn = lax.dot_general(
        ctx_t.reshape(H, seq_tile).astype(cdt), wo_ref[...],
        (((0,), (0,)), ((), ())), preferred_element_type=f32,
    ) + bo                                                             # (TQ, H)
    x_t = x_t + attn

    # -------- sublayer 2: x + FFN(LayerNorm(x)) --------
    xn2 = _layer_norm(x_t, g2, be2)
    h1 = jnp.dot(xn2.astype(cdt), w1_ref[...],
                 preferred_element_type=f32) + b1_ref[...]             # (TQ, FF)
    h1 = _gelu_tanh(h1)
    ff = jnp.dot(h1.astype(cdt), w2_ref[...],
                 preferred_element_type=f32) + b2                      # (TQ, H)
    x_t = x_t + ff

    o_ref[0] = x_t.astype(o_ref.dtype)                                 # lane-dense (TQ, H) store


def _default_vmem_limit():
    # Generation-dependent scoped VMEM limit: generous on v5e/v6e (128 MiB physical),
    # conservative on v7x (64 MiB per TensorCore).
    try:
        cap = pltpu.get_tpu_info().vmem_capacity_bytes
    except Exception:
        cap = 64 * 1024 * 1024
    return int(min(int(cap * 0.7), 100 * 1024 * 1024))


def transformer_block(x, mask, params, *, n_heads, seq_tile=None,
                      param_dtype=jnp.bfloat16, approx_reciprocal=False,
                      alias_input=False, vmem_limit_bytes=None):
    """x: (B, S, H) f32; mask: (B, 1, S, S) bert-style key-padding mask (same key mask for
    every query row); params stored as (in_features, out_features) = transpose of torch
    nn.Linear.weight.  alias_input=True donates x (caller must not reuse it afterwards)."""
    B, S, H = x.shape
    FF = params["w1"].shape[1]
    dk = H // n_heads
    f32 = jnp.float32

    if seq_tile is None:
        seq_tile = S if S <= 256 else 256     # keep >=256 rows for the v6e/v7x 256x256 MXU
    if S % seq_tile != 0 or seq_tile % 8 != 0:
        seq_tile = S
    n_qt = S // seq_tile

    # ---- wrapper-side constant folding (done once at load time in production) ----
    inv_sqrt_dk = 1.0 / math.sqrt(dk)
    wq = (params["wq"].T * inv_sqrt_dk).astype(param_dtype)            # (H, H)  torch (out,in)
    bq = (params["bq"] * inv_sqrt_dk).reshape(H, 1).astype(f32)        # (H, 1)
    wkv = jnp.concatenate([params["wk"].T, params["wv"].T],
                          axis=0).astype(param_dtype)                  # (2H, H) torch (out,in)
    bkv = jnp.concatenate([params["bk"], params["bv"]],
                          axis=1).reshape(2 * H, 1).astype(f32)        # (2H, 1)
    wo = params["wo"].astype(param_dtype)                              # (H, H)  (in,out)
    w1 = params["w1"].astype(param_dtype)                              # (H, FF)
    w2 = params["w2"].astype(param_dtype)                              # (FF, H)
    b1 = params["b1"].reshape(1, FF).astype(f32)
    vecs = jnp.concatenate([
        params["g1"].reshape(1, H), params["be1"].reshape(1, H),
        params["g2"].reshape(1, H), params["be2"].reshape(1, H),
        params["bo"].reshape(1, H), params["b2"].reshape(1, H),
    ], axis=0).astype(f32)                                             # (6, H)

    # bert-style padding mask -> additive (B, 1, S) bias (0 / -1e9), one compare total.
    row_mask = mask.reshape(B, 1, S, S)[:, 0, 0, :]
    mask_bias = jnp.where(row_mask == 0, jnp.float32(-1e9),
                          jnp.float32(0.0)).reshape(B, 1, S)

    if vmem_limit_bytes is None:
        vmem_limit_bytes = _default_vmem_limit()

    kernel = functools.partial(transformer_block_kernel,
                               n_heads=n_heads, seq_tile=seq_tile,
                               approx_reciprocal=approx_reciprocal)

    def build(single_buffer_consts):
        def const_spec(shape):
            nd = len(shape)
            idx = lambda b, q, _nd=nd: (0,) * _nd
            if single_buffer_consts:
                # Constant block index -> a second pipeline buffer is pure VMEM waste.
                return pl.BlockSpec(shape, idx, pipeline_mode=pl.Buffered(1))
            return pl.BlockSpec(shape, idx)

        in_specs = [
            pl.BlockSpec((1, S, H), lambda b, q: (b, 0, 0)),    # x (full sequence per batch row)
            pl.BlockSpec((1, 1, S), lambda b, q: (b, 0, 0)),    # additive mask bias
            const_spec((H, H)), const_spec((H, 1)),             # wq, bq (scale folded)
            const_spec((2 * H, H)), const_spec((2 * H, 1)),     # wkv, bkv
            const_spec((H, H)),                                 # wo
            const_spec((H, FF)), const_spec((1, FF)),           # w1, b1
            const_spec((FF, H)),                                # w2
            const_spec((6, H)),                                 # packed ln gammas/betas + bo/b2
        ]

        return pl.pallas_call(
            kernel,
            out_shape=jax.ShapeDtypeStruct((B, S, H), x.dtype),
            grid_spec=pltpu.PrefetchScalarGridSpec(
                num_scalar_prefetch=0,
                grid=(B, n_qt),
                in_specs=in_specs,
                out_specs=pl.BlockSpec((1, seq_tile, H), lambda b, q: (b, q, 0)),
                scratch_shapes=[
                    pltpu.VMEM((n_heads, dk, S), param_dtype),  # cached K^T per head
                    pltpu.VMEM((n_heads, dk, S), param_dtype),  # cached V^T per head
                ],
            ),
            input_output_aliases=({0: 0} if alias_input else {}),
            compiler_params=pltpu.CompilerParams(
                # qt is "arbitrary": strictly sequential so the K/V scratch computed at qt==0
                # is valid for the remaining tiles of the same batch row.
                dimension_semantics=("parallel", "arbitrary"),
                vmem_limit_bytes=int(vmem_limit_bytes),
            ),
        )

    args = (x, mask_bias, wq, bq, wkv, bkv, wo, w1, b1, w2, vecs)
    try:
        return build(True)(*args)
    except Exception:
        # TODO(synk): pl.Buffered(1) single-buffered constant specs not supported on this jax
        # version -- fall back to default double-buffered pipelining (correct, more VMEM).
        return build(False)(*args)


def transformer_block_ref(x, mask, params, *, n_heads):
    """Pure-JAX reference for correctness checking."""
    B, S, H = x.shape
    d_k = H // n_heads
    m = mask.reshape(B, 1, S, S)

    def ln(x, g, b, eps=1e-6):
        mean = jnp.mean(x, axis=-1, keepdims=True)
        var = jnp.sum((x - mean) ** 2, axis=-1, keepdims=True) / (H - 1)
        return g * (x - mean) / (jnp.sqrt(var) + eps) + b

    xn = ln(x, params["g1"], params["be1"])
    q = xn @ params["wq"] + params["bq"]
    k = xn @ params["wk"] + params["bk"]
    v = xn @ params["wv"] + params["bv"]
    q = q.reshape(B, S, n_heads, d_k).transpose(0, 2, 1, 3)
    k = k.reshape(B, S, n_heads, d_k).transpose(0, 2, 1, 3)
    v = v.reshape(B, S, n_heads, d_k).transpose(0, 2, 1, 3)
    scores = jnp.einsum("bhqd,bhkd->bhqk", q, k) / math.sqrt(d_k)
    scores = jnp.where(m == 0, -1e9, scores)
    p = jax.nn.softmax(scores, axis=-1)
    ctx = jnp.einsum("bhqk,bhkd->bhqd", p, v).transpose(0, 2, 1, 3).reshape(B, S, H)
    x = x + (ctx @ params["wo"] + params["bo"])

    xn2 = ln(x, params["g2"], params["be2"])
    h1 = xn2 @ params["w1"] + params["b1"]
    h1 = 0.5 * h1 * (1.0 + jnp.tanh(math.sqrt(2.0 / math.pi) * (h1 + 0.044715 * h1 ** 3)))
    ff = h1 @ params["w2"] + params["b2"]
    return x + ff


def make_params(key, hidden, ff_hidden):
    ks = jax.random.split(key, 12)
    scale = 0.02
    return {
        "wq": scale * jax.random.normal(ks[0], (hidden, hidden), jnp.float32),
        "wk": scale * jax.random.normal(ks[1], (hidden, hidden), jnp.float32),
        "wv": scale * jax.random.normal(ks[2], (hidden, hidden), jnp.float32),
        "wo": scale * jax.random.normal(ks[3], (hidden, hidden), jnp.float32),
        "bq": 0.01 * jax.random.normal(ks[4], (1, hidden), jnp.float32),
        "bk": 0.01 * jax.random.normal(ks[5], (1, hidden), jnp.float32),
        "bv": 0.01 * jax.random.normal(ks[6], (1, hidden), jnp.float32),
        "bo": 0.01 * jax.random.normal(ks[7], (1, hidden), jnp.float32),
        "w1": scale * jax.random.normal(ks[8], (hidden, ff_hidden), jnp.float32),
        "b1": 0.01 * jax.random.normal(ks[9], (1, ff_hidden), jnp.float32),
        "w2": scale * jax.random.normal(ks[10], (ff_hidden, hidden), jnp.float32),
        "b2": 0.01 * jax.random.normal(ks[11], (1, hidden), jnp.float32),
        "g1": jnp.ones((1, hidden), jnp.float32),
        "be1": jnp.zeros((1, hidden), jnp.float32),
        "g2": jnp.ones((1, hidden), jnp.float32),
        "be2": jnp.zeros((1, hidden), jnp.float32),
    }


if __name__ == "__main__":
    B, S, HIDDEN, HEADS = 2, 16, 32, 4
    FF_HIDDEN = 4 * HIDDEN
    SEQ_TILE = 8    # 2 query tiles per batch row -> exercises K/V-scratch reuse across tiles

    key = jax.random.PRNGKey(0)
    kx, kp = jax.random.split(key, 2)

    x = jax.random.normal(kx, (B, S, HIDDEN), jnp.float32)
    # padding-style mask: last 3 key positions of batch 1 are masked out (same for every query)
    valid = jnp.ones((B, S), jnp.float32).at[1, -3:].set(0.0)
    mask = valid[:, None, None, :] * jnp.ones((B, 1, S, S), jnp.float32)
    # validate the key-padding assumption (all query rows share the same key mask)
    assert bool(jnp.all(mask == mask[:, :, :1, :])), "mask must be a key-padding mask"

    params = make_params(kp, HIDDEN, FF_HIDDEN)
    ref = transformer_block_ref(x, mask, params, n_heads=HEADS)

    # Exact config: f32 matmul operands, exact reciprocals -> strict tolerance.
    out = transformer_block(x, mask, params, n_heads=HEADS, seq_tile=SEQ_TILE,
                            param_dtype=jnp.float32, approx_reciprocal=False)
    out = jax.block_until_ready(out)
    assert out.shape == (B, S, HIDDEN)
    assert jnp.allclose(out, ref, rtol=1e-4, atol=1e-4), "f32 kernel mismatch vs JAX reference"

    # Default perf config: bf16 matmul operands (f32 accumulation) + approx softmax reciprocal.
    out_fast = transformer_block(x, mask, params, n_heads=HEADS, seq_tile=SEQ_TILE,
                                 approx_reciprocal=True)
    out_fast = jax.block_until_ready(out_fast)
    assert jnp.allclose(out_fast, ref, rtol=2e-2, atol=2e-2), "bf16 kernel mismatch vs JAX reference"

    print("KERNEL_OK")
</pallas_src>

<mosaic_0001>
module attributes {stable_mosaic.version = 11 : i64} {
  func.func @transformer_block_kernel(%arg0: i32, %arg1: i32, %arg2: memref<1x16x32xf32, #tpu.memory_space<vmem>>, %arg3: memref<1x1x16xf32, #tpu.memory_space<vmem>>, %arg4: memref<32x32xf32, #tpu.memory_space<vmem>>, %arg5: memref<32x1xf32, #tpu.memory_space<vmem>>, %arg6: memref<64x32xf32, #tpu.memory_space<vmem>>, %arg7: memref<64x1xf32, #tpu.memory_space<vmem>>, %arg8: memref<32x32xf32, #tpu.memory_space<vmem>>, %arg9: memref<32x128xf32, #tpu.memory_space<vmem>>, %arg10: memref<1x128xf32, #tpu.memory_space<vmem>>, %arg11: memref<128x32xf32, #tpu.memory_space<vmem>>, %arg12: memref<6x32xf32, #tpu.memory_space<vmem>>, %arg13: memref<1x8x32xf32, #tpu.memory_space<vmem>>, %arg14: memref<4x8x16xf32, #tpu.memory_space<vmem>>, %arg15: memref<4x8x16xf32, #tpu.memory_space<vmem>>) attributes {dimension_semantics = [#tpu.dimension_semantics<parallel>, #tpu.dimension_semantics<arbitrary>], iteration_bounds = array<i64: 2, 2>, scalar_prefetch = 0 : i64, scratch_operands = 2 : i64, tpu.core_type = #tpu.core_type<tc>, window_params = [{transform_indices = @transform_0, window_bounds = array<i64: 1, 16, 32>}, {transform_indices = @transform_1, window_bounds = array<i64: 1, 1, 16>}, {pipeline_mode = #tpu.pipeline_mode<synchronous>, transform_indices = @transform_2, window_bounds = array<i64: 32, 32>}, {pipeline_mode = #tpu.pipeline_mode<synchronous>, transform_indices = @transform_3, window_bounds = array<i64: 32, 1>}, {pipeline_mode = #tpu.pipeline_mode<synchronous>, transform_indices = @transform_4, window_bounds = array<i64: 64, 32>}, {pipeline_mode = #tpu.pipeline_mode<synchronous>, transform_indices = @transform_5, window_bounds = array<i64: 64, 1>}, {pipeline_mode = #tpu.pipeline_mode<synchronous>, transform_indices = @transform_6, window_bounds = array<i64: 32, 32>}, {pipeline_mode = #tpu.pipeline_mode<synchronous>, transform_indices = @transform_7, window_bounds = array<i64: 32, 128>}, {pipeline_mode = #tpu.pipeline_mode<synchronous>, transform_indices = @transform_8, window_bounds = array<i64: 1, 128>}, {pipeline_mode = #tpu.pipeline_mode<synchronous>, transform_indices = @transform_9, window_bounds = array<i64: 128, 32>}, {pipeline_mode = #tpu.pipeline_mode<synchronous>, transform_indices = @transform_10, window_bounds = array<i64: 6, 32>}, {transform_indices = @transform_11, window_bounds = array<i64: 1, 8, 32>}]} {
    %c0 = arith.constant 0 : index
    %c0_0 = arith.constant 0 : index
    %0 = vector.load %arg12[%c0, %c0_0] : memref<6x32xf32, #tpu.memory_space<vmem>>, vector<1x32xf32>
    %c1 = arith.constant 1 : index
    %c0_1 = arith.constant 0 : index
    %1 = vector.load %arg12[%c1, %c0_1] : memref<6x32xf32, #tpu.memory_space<vmem>>, vector<1x32xf32>
    %c2 = arith.constant 2 : index
    %c0_2 = arith.constant 0 : index
    %2 = vector.load %arg12[%c2, %c0_2] : memref<6x32xf32, #tpu.memory_space<vmem>>, vector<1x32xf32>
    %c3 = arith.constant 3 : index
    %c0_3 = arith.constant 0 : index
    %3 = vector.load %arg12[%c3, %c0_3] : memref<6x32xf32, #tpu.memory_space<vmem>>, vector<1x32xf32>
    %c4 = arith.constant 4 : index
    %c0_4 = arith.constant 0 : index
    %4 = vector.load %arg12[%c4, %c0_4] : memref<6x32xf32, #tpu.memory_space<vmem>>, vector<1x32xf32>
    %c5 = arith.constant 5 : index
    %c0_5 = arith.constant 0 : index
    %5 = vector.load %arg12[%c5, %c0_5] : memref<6x32xf32, #tpu.memory_space<vmem>>, vector<1x32xf32>
    %c0_i32 = arith.constant 0 : i32
    %6 = arith.cmpi eq, %arg1, %c0_i32 : i32
    %7 = arith.extui %6 : i1 to i32
    %c0_i32_6 = arith.constant 0 : i32
    %8 = arith.cmpi ne, %7, %c0_i32_6 : i32
    scf.if %8 {
      %c0_57 = arith.constant 0 : index
      %c0_58 = arith.constant 0 : index
      %c0_59 = arith.constant 0 : index
      %114 = vector.load %arg2[%c0_57, %c0_58, %c0_59] : memref<1x16x32xf32, #tpu.memory_space<vmem>>, vector<1x16x32xf32>
      %115 = vector.shape_cast %114 : vector<1x16x32xf32> to vector<16x32xf32>
      %cst_60 = arith.constant dense<0.000000e+00> : vector<16xf32>
      %116 = vector.multi_reduction <add>, %115, %cst_60 [1] : vector<16x32xf32> to vector<16xf32>
      %117 = vector.shape_cast %116 : vector<16xf32> to vector<16x1xf32>
      %cst_61 = arith.constant 3.125000e-02 : f32
      %118 = vector.broadcast %cst_61 : f32 to vector<16x1xf32>
      %119 = arith.mulf %117, %118 : vector<16x1xf32>
      %120 = vector.broadcast %119 : vector<16x1xf32> to vector<16x32xf32>
      %121 = arith.subf %115, %120 : vector<16x32xf32>
      %122 = arith.mulf %121, %121 : vector<16x32xf32>
      %cst_62 = arith.constant dense<0.000000e+00> : vector<16xf32>
      %123 = vector.multi_reduction <add>, %122, %cst_62 [1] : vector<16x32xf32> to vector<16xf32>
      %124 = vector.shape_cast %123 : vector<16xf32> to vector<16x1xf32>
      %cst_63 = arith.constant 0.0322580636 : f32
      %125 = vector.broadcast %cst_63 : f32 to vector<16x1xf32>
      %126 = arith.mulf %124, %125 : vector<16x1xf32>
      %127 = math.sqrt %126 : vector<16x1xf32>
      %cst_64 = arith.constant 9.99999997E-7 : f32
      %128 = vector.broadcast %cst_64 : f32 to vector<16x1xf32>
      %129 = arith.addf %127, %128 : vector<16x1xf32>
      %cst_65 = arith.constant 1.000000e+00 : f32
      %130 = vector.broadcast %cst_65 : f32 to vector<16x1xf32>
      %131 = arith.divf %130, %129 : vector<16x1xf32>
      %132 = vector.broadcast %131 : vector<16x1xf32> to vector<16x32xf32>
      %133 = arith.mulf %121, %132 : vector<16x32xf32>
      %134 = vector.broadcast %0 : vector<1x32xf32> to vector<16x32xf32>
      %135 = arith.mulf %134, %133 : vector<16x32xf32>
      %136 = vector.broadcast %1 : vector<1x32xf32> to vector<16x32xf32>
      %137 = arith.addf %135, %136 : vector<16x32xf32>
      %c0_66 = arith.constant 0 : index
      %c0_67 = arith.constant 0 : index
      %138 = vector.load %arg6[%c0_66, %c0_67] : memref<64x32xf32, #tpu.memory_space<vmem>>, vector<64x32xf32>
      %cst_68 = arith.constant dense<0.000000e+00> : vector<64x16xf32>
      %139 = tpu.matmul %138, %137, %cst_68 {dimension_numbers = #tpu.dot_dimension_numbers<[1], [1], [0], [0], [0, 0, 1, 0], [], []>} : vector<64x32xf32>, vector<16x32xf32>, vector<64x16xf32> -> vector<64x16xf32>
      %c0_69 = arith.constant 0 : index
      %c0_70 = arith.constant 0 : index
      %140 = vector.load %arg7[%c0_69, %c0_70] : memref<64x1xf32, #tpu.memory_space<vmem>>, vector<64x1xf32>
      %141 = vector.broadcast %140 : vector<64x1xf32> to vector<64x16xf32>
      %142 = arith.addf %139, %141 : vector<64x16xf32>
      %143 = vector.extract_strided_slice %142 {offsets = [0, 0], sizes = [32, 16], strides = [1, 1]} : vector<64x16xf32> to vector<32x16xf32>
      %144 = vector.shape_cast %143 : vector<32x16xf32> to vector<4x8x16xf32>
      %c0_71 = arith.constant 0 : index
      %c0_72 = arith.constant 0 : index
      %c0_73 = arith.constant 0 : index
      %145 = vector.load %arg14[%c0_71, %c0_72, %c0_73] : memref<4x8x16xf32, #tpu.memory_space<vmem>>, vector<4x8x16xf32>
      tpu.vector_store %arg14[%c0_71, %c0_72, %c0_73], %144 {strides = array<i32>} : memref<4x8x16xf32, #tpu.memory_space<vmem>>, vector<4x8x16xf32>,
      %146 = vector.extract_strided_slice %142 {offsets = [32, 0], sizes = [32, 16], strides = [1, 1]} : vector<64x16xf32> to vector<32x16xf32>
      %147 = vector.shape_cast %146 : vector<32x16xf32> to vector<4x8x16xf32>
      %c0_74 = arith.constant 0 : index
      %c0_75 = arith.constant 0 : index
      %c0_76 = arith.constant 0 : index
      %148 = vector.load %arg15[%c0_74, %c0_75, %c0_76] : memref<4x8x16xf32, #tpu.memory_space<vmem>>, vector<4x8x16xf32>
      tpu.vector_store %arg15[%c0_74, %c0_75, %c0_76], %147 {strides = array<i32>} : memref<4x8x16xf32, #tpu.memory_space<vmem>>, vector<4x8x16xf32>,
    } else {
    }
    %c8_i32 = arith.constant 8 : i32
    %9 = arith.muli %arg1, %c8_i32 : i32
    %10 = tpu.assume_multiple %9, 8 : i32
    %c0_7 = arith.constant 0 : index
    %11 = arith.index_cast %10 : i32 to index
    %c0_8 = arith.constant 0 : index
    %12 = vector.load %arg2[%c0_7, %11, %c0_8] : memref<1x16x32xf32, #tpu.memory_space<vmem>>, vector<1x8x32xf32>
    %13 = vector.shape_cast %12 : vector<1x8x32xf32> to vector<8x32xf32>
    %cst = arith.constant dense<0.000000e+00> : vector<8xf32>
    %14 = vector.multi_reduction <add>, %13, %cst [1] : vector<8x32xf32> to vector<8xf32>
    %15 = vector.shape_cast %14 : vector<8xf32> to vector<8x1xf32>
    %cst_9 = arith.constant 3.125000e-02 : f32
    %16 = vector.broadcast %cst_9 : f32 to vector<8x1xf32>
    %17 = arith.mulf %15, %16 : vector<8x1xf32>
    %18 = vector.broadcast %17 : vector<8x1xf32> to vector<8x32xf32>
    %19 = arith.subf %13, %18 : vector<8x32xf32>
    %20 = arith.mulf %19, %19 : vector<8x32xf32>
    %cst_10 = arith.constant dense<0.000000e+00> : vector<8xf32>
    %21 = vector.multi_reduction <add>, %20, %cst_10 [1] : vector<8x32xf32> to vector<8xf32>
    %22 = vector.shape_cast %21 : vector<8xf32> to vector<8x1xf32>
    %cst_11 = arith.constant 0.0322580636 : f32
    %23 = vector.broadcast %cst_11 : f32 to vector<8x1xf32>
    %24 = arith.mulf %22, %23 : vector<8x1xf32>
    %25 = math.sqrt %24 : vector<8x1xf32>
    %cst_12 = arith.constant 9.99999997E-7 : f32
    %26 = vector.broadcast %cst_12 : f32 to vector<8x1xf32>
    %27 = arith.addf %25, %26 : vector<8x1xf32>
    %cst_13 = arith.constant 1.000000e+00 : f32
    %28 = vector.broadcast %cst_13 : f32 to vector<8x1xf32>
    %29 = arith.divf %28, %27 : vector<8x1xf32>
    %30 = vector.broadcast %29 : vector<8x1xf32> to vector<8x32xf32>
    %31 = arith.mulf %19, %30 : vector<8x32xf32>
    %32 = vector.broadcast %0 : vector<1x32xf32> to vector<8x32xf32>
    %33 = arith.mulf %32, %31 : vector<8x32xf32>
    %34 = vector.broadcast %1 : vector<1x32xf32> to vector<8x32xf32>
    %35 = arith.addf %33, %34 : vector<8x32xf32>
    %c0_14 = arith.constant 0 : index
    %c0_15 = arith.constant 0 : index
    %36 = vector.load %arg4[%c0_14, %c0_15] : memref<32x32xf32, #tpu.memory_space<vmem>>, vector<32x32xf32>
    %cst_16 = arith.constant dense<0.000000e+00> : vector<32x8xf32>
    %37 = tpu.matmul %36, %35, %cst_16 {dimension_numbers = #tpu.dot_dimension_numbers<[1], [1], [0], [0], [0, 0, 1, 0], [], []>} : vector<32x32xf32>, vector<8x32xf32>, vector<32x8xf32> -> vector<32x8xf32>
    %c0_17 = arith.constant 0 : index
    %c0_18 = arith.constant 0 : index
    %38 = vector.load %arg5[%c0_17, %c0_18] : memref<32x1xf32, #tpu.memory_space<vmem>>, vector<32x1xf32>
    %39 = vector.broadcast %38 : vector<32x1xf32> to vector<32x8xf32>
    %40 = arith.addf %37, %39 : vector<32x8xf32>
    %41 = vector.shape_cast %40 : vector<32x8xf32> to vector<4x8x8xf32>
    %c0_19 = arith.constant 0 : index
    %c0_20 = arith.constant 0 : index
    %c0_21 = arith.constant 0 : index
    %42 = vector.load %arg14[%c0_19, %c0_20, %c0_21] : memref<4x8x16xf32, #tpu.memory_space<vmem>>, vector<4x8x16xf32>
    %cst_22 = arith.constant dense<0.000000e+00> : vector<4x8x16xf32>
    %43 = tpu.matmul %41, %42, %cst_22 {dimension_numbers = #tpu.dot_dimension_numbers<[1], [1], [2], [2], [0, 0, 0, 2, 1, 2], [0], [0]>} : vector<4x8x8xf32>, vector<4x8x16xf32>, vector<4x8x16xf32> -> vector<4x8x16xf32>
    %c0_23 = arith.constant 0 : index
    %c0_24 = arith.constant 0 : index
    %c0_25 = arith.constant 0 : index
    %44 = vector.load %arg3[%c0_23, %c0_24, %c0_25] : memref<1x1x16xf32, #tpu.memory_space<vmem>>, vector<1x1x16xf32>
    %45 = vector.broadcast %44 : vector<1x1x16xf32> to vector<4x8x16xf32>
    %46 = arith.addf %43, %45 : vector<4x8x16xf32>
    %cst_26 = arith.constant dense<0xFF800000> : vector<4x8xf32>
    %47 = vector.multi_reduction <maximumf>, %46, %cst_26 [2] : vector<4x8x16xf32> to vector<4x8xf32>
    %48 = vector.shape_cast %47 : vector<4x8xf32> to vector<4x8x1xf32>
    %49 = vector.broadcast %48 : vector<4x8x1xf32> to vector<4x8x16xf32>
    %50 = arith.subf %46, %49 : vector<4x8x16xf32>
    %51 = math.exp %50 : vector<4x8x16xf32>
    %cst_27 = arith.constant dense<0.000000e+00> : vector<4x8xf32>
    %52 = vector.multi_reduction <add>, %51, %cst_27 [2] : vector<4x8x16xf32> to vector<4x8xf32>
    %53 = vector.shape_cast %52 : vector<4x8xf32> to vector<4x8x1xf32>
    %cst_28 = arith.constant 1.000000e+00 : f32
    %54 = vector.broadcast %cst_28 : f32 to vector<4x8x1xf32>
    %55 = arith.divf %54, %53 : vector<4x8x1xf32>
    %56 = vector.broadcast %55 : vector<4x8x1xf32> to vector<4x8x16xf32>
    %57 = arith.mulf %51, %56 : vector<4x8x16xf32>
    %c0_29 = arith.constant 0 : index
    %c0_30 = arith.constant 0 : index
    %c0_31 = arith.constant 0 : index
    %58 = vector.load %arg15[%c0_29, %c0_30, %c0_31] : memref<4x8x16xf32, #tpu.memory_space<vmem>>, vector<4x8x16xf32>
    %cst_32 = arith.constant dense<0.000000e+00> : vector<4x8x8xf32>
    %59 = tpu.matmul %58, %57, %cst_32 {dimension_numbers = #tpu.dot_dimension_numbers<[2], [2], [1], [1], [0, 0, 0, 1, 1, 1], [0], [0]>} : vector<4x8x16xf32>, vector<4x8x16xf32>, vector<4x8x8xf32> -> vector<4x8x8xf32>
    %60 = vector.shape_cast %59 : vector<4x8x8xf32> to vector<32x8xf32>
    %c0_33 = arith.constant 0 : index
    %c0_34 = arith.constant 0 : index
    %61 = vector.load %arg8[%c0_33, %c0_34] : memref<32x32xf32, #tpu.memory_space<vmem>>, vector<32x32xf32>
    %cst_35 = arith.constant dense<0.000000e+00> : vector<8x32xf32>
    %62 = tpu.matmul %60, %61, %cst_35 {dimension_numbers = #tpu.dot_dimension_numbers<[0], [0], [1], [1], [0, 1, 1, 1], [], []>} : vector<32x8xf32>, vector<32x32xf32>, vector<8x32xf32> -> vector<8x32xf32>
    %63 = vector.broadcast %4 : vector<1x32xf32> to vector<8x32xf32>
    %64 = arith.addf %62, %63 : vector<8x32xf32>
    %65 = arith.addf %13, %64 : vector<8x32xf32>
    %cst_36 = arith.constant dense<0.000000e+00> : vector<8xf32>
    %66 = vector.multi_reduction <add>, %65, %cst_36 [1] : vector<8x32xf32> to vector<8xf32>
    %67 = vector.shape_cast %66 : vector<8xf32> to vector<8x1xf32>
    %cst_37 = arith.constant 3.125000e-02 : f32
    %68 = vector.broadcast %cst_37 : f32 to vector<8x1xf32>
    %69 = arith.mulf %67, %68 : vector<8x1xf32>
    %70 = vector.broadcast %69 : vector<8x1xf32> to vector<8x32xf32>
    %71 = arith.subf %65, %70 : vector<8x32xf32>
    %72 = arith.mulf %71, %71 : vector<8x32xf32>
    %cst_38 = arith.constant dense<0.000000e+00> : vector<8xf32>
    %73 = vector.multi_reduction <add>, %72, %cst_38 [1] : vector<8x32xf32> to vector<8xf32>
    %74 = vector.shape_cast %73 : vector<8xf32> to vector<8x1xf32>
    %cst_39 = arith.constant 0.0322580636 : f32
    %75 = vector.broadcast %cst_39 : f32 to vector<8x1xf32>
    %76 = arith.mulf %74, %75 : vector<8x1xf32>
    %77 = math.sqrt %76 : vector<8x1xf32>
    %cst_40 = arith.constant 9.99999997E-7 : f32
    %78 = vector.broadcast %cst_40 : f32 to vector<8x1xf32>
    %79 = arith.addf %77, %78 : vector<8x1xf32>
    %cst_41 = arith.constant 1.000000e+00 : f32
    %80 = vector.broadcast %cst_41 : f32 to vector<8x1xf32>
    %81 = arith.divf %80, %79 : vector<8x1xf32>
    %82 = vector.broadcast %81 : vector<8x1xf32> to vector<8x32xf32>
    %83 = arith.mulf %71, %82 : vector<8x32xf32>
    %84 = vector.broadcast %2 : vector<1x32xf32> to vector<8x32xf32>
    %85 = arith.mulf %84, %83 : vector<8x32xf32>
    %86 = vector.broadcast %3 : vector<1x32xf32> to vector<8x32xf32>
    %87 = arith.addf %85, %86 : vector<8x32xf32>
    %c0_42 = arith.constant 0 : index
    %c0_43 = arith.constant 0 : index
    %88 = vector.load %arg9[%c0_42, %c0_43] : memref<32x128xf32, #tpu.memory_space<vmem>>, vector<32x128xf32>
    %cst_44 = arith.constant dense<0.000000e+00> : vector<8x128xf32>
    %89 = tpu.matmul %87, %88, %cst_44 {dimension_numbers = #tpu.dot_dimension_numbers<[1], [0], [0], [1], [0, 0, 1, 1], [], []>} : vector<8x32xf32>, vector<32x128xf32>, vector<8x128xf32> -> vector<8x128xf32>
    %c0_45 = arith.constant 0 : index
    %c0_46 = arith.constant 0 : index
    %90 = vector.load %arg10[%c0_45, %c0_46] : memref<1x128xf32, #tpu.memory_space<vmem>>, vector<1x128xf32>
    %91 = vector.broadcast %90 : vector<1x128xf32> to vector<8x128xf32>
    %92 = arith.addf %89, %91 : vector<8x128xf32>
    %cst_47 = arith.constant 5.000000e-01 : f32
    %93 = vector.broadcast %cst_47 : f32 to vector<8x128xf32>
    %94 = arith.mulf %93, %92 : vector<8x128xf32>
    %95 = arith.mulf %92, %92 : vector<8x128xf32>
    %96 = arith.mulf %95, %92 : vector<8x128xf32>
    %cst_48 = arith.constant 4.471500e-02 : f32
    %97 = vector.broadcast %cst_48 : f32 to vector<8x128xf32>
    %98 = arith.mulf %97, %96 : vector<8x128xf32>
    %99 = arith.addf %92, %98 : vector<8x128xf32>
    %cst_49 = arith.constant 0.797884583 : f32
    %100 = vector.broadcast %cst_49 : f32 to vector<8x128xf32>
    %101 = arith.mulf %100, %99 : vector<8x128xf32>
    %102 = math.tanh %101 : vector<8x128xf32>
    %cst_50 = arith.constant 1.000000e+00 : f32
    %103 = vector.broadcast %cst_50 : f32 to vector<8x128xf32>
    %104 = arith.addf %103, %102 : vector<8x128xf32>
    %105 = arith.mulf %94, %104 : vector<8x128xf32>
    %c0_51 = arith.constant 0 : index
    %c0_52 = arith.constant 0 : index
    %106 = vector.load %arg11[%c0_51, %c0_52] : memref<128x32xf32, #tpu.memory_space<vmem>>, vector<128x32xf32>
    %cst_53 = arith.constant dense<0.000000e+00> : vector<8x32xf32>
    %107 = tpu.matmul %105, %106, %cst_53 {dimension_numbers = #tpu.dot_dimension_numbers<[1], [0], [0], [1], [0, 0, 1, 1], [], []>} : vector<8x128xf32>, vector<128x32xf32>, vector<8x32xf32> -> vector<8x32xf32>
    %108 = vector.broadcast %5 : vector<1x32xf32> to vector<8x32xf32>
    %109 = arith.addf %107, %108 : vector<8x32xf32>
    %110 = arith.addf %65, %109 : vector<8x32xf32>
    %c0_54 = arith.constant 0 : index
    %c0_55 = arith.constant 0 : index
    %c0_56 = arith.constant 0 : index
    %111 = vector.load %arg13[%c0_54, %c0_55, %c0_56] : memref<1x8x32xf32, #tpu.memory_space<vmem>>, vector<1x8x32xf32>
    %112 = vector.shape_cast %111 : vector<1x8x32xf32> to vector<8x32xf32>
    %113 = vector.shape_cast %110 : vector<8x32xf32> to vector<1x8x32xf32>
    tpu.vector_store %arg13[%c0_54, %c0_55, %c0_56], %113 {strides = array<i32>} : memref<1x8x32xf32, #tpu.memory_space<vmem>>, vector<1x8x32xf32>,
    return
  }
  func.func @transform_0(%arg0: i32, %arg1: i32) -> (i32, i32, i32) {
    %c0_i32 = arith.constant 0 : i32
    %c0_i32_0 = arith.constant 0 : i32
    %c0_i32_1 = arith.constant 0 : i32
    return %arg0, %c0_i32, %c0_i32_0 : i32, i32, i32
  }
  func.func @transform_1(%arg0: i32, %arg1: i32) -> (i32, i32, i32) {
    %c0_i32 = arith.constant 0 : i32
    %c0_i32_0 = arith.constant 0 : i32
    %c0_i32_1 = arith.constant 0 : i32
    return %arg0, %c0_i32, %c0_i32_0 : i32, i32, i32
  }
  func.func @transform_2(%arg0: i32, %arg1: i32) -> (i32, i32) {
    %c0_i32 = arith.constant 0 : i32
    %c0_i32_0 = arith.constant 0 : i32
    %c0_i32_1 = arith.constant 0 : i32
    return %c0_i32, %c0_i32_0 : i32, i32
  }
  func.func @transform_3(%arg0: i32, %arg1: i32) -> (i32, i32) {
    %c0_i32 = arith.constant 0 : i32
    %c0_i32_0 = arith.constant 0 : i32
    %c0_i32_1 = arith.constant 0 : i32
    return %c0_i32, %c0_i32_0 : i32, i32
  }
  func.func @transform_4(%arg0: i32, %arg1: i32) -> (i32, i32) {
    %c0_i32 = arith.constant 0 : i32
    %c0_i32_0 = arith.constant 0 : i32
    %c0_i32_1 = arith.constant 0 : i32
    return %c0_i32, %c0_i32_0 : i32, i32
  }
  func.func @transform_5(%arg0: i32, %arg1: i32) -> (i32, i32) {
    %c0_i32 = arith.constant 0 : i32
    %c0_i32_0 = arith.constant 0 : i32
    %c0_i32_1 = arith.constant 0 : i32
    return %c0_i32, %c0_i32_0 : i32, i32
  }
  func.func @transform_6(%arg0: i32, %arg1: i32) -> (i32, i32) {
    %c0_i32 = arith.constant 0 : i32
    %c0_i32_0 = arith.constant 0 : i32
    %c0_i32_1 = arith.constant 0 : i32
    return %c0_i32, %c0_i32_0 : i32, i32
  }
  func.func @transform_7(%arg0: i32, %arg1: i32) -> (i32, i32) {
    %c0_i32 = arith.constant 0 : i32
    %c0_i32_0 = arith.constant 0 : i32
    %c0_i32_1 = arith.constant 0 : i32
    return %c0_i32, %c0_i32_0 : i32, i32
  }
  func.func @transform_8(%arg0: i32, %arg1: i32) -> (i32, i32) {
    %c0_i32 = arith.constant 0 : i32
    %c0_i32_0 = arith.constant 0 : i32
    %c0_i32_1 = arith.constant 0 : i32
    return %c0_i32, %c0_i32_0 : i32, i32
  }
  func.func @transform_9(%arg0: i32, %arg1: i32) -> (i32, i32) {
    %c0_i32 = arith.constant 0 : i32
    %c0_i32_0 = arith.constant 0 : i32
    %c0_i32_1 = arith.constant 0 : i32
    return %c0_i32, %c0_i32_0 : i32, i32
  }
  func.func @transform_10(%arg0: i32, %arg1: i32) -> (i32, i32) {
    %c0_i32 = arith.constant 0 : i32
    %c0_i32_0 = arith.constant 0 : i32
    %c0_i32_1 = arith.constant 0 : i32
    return %c0_i32, %c0_i32_0 : i32, i32
  }
  func.func @transform_11(%arg0: i32, %arg1: i32) -> (i32, i32, i32) {
    %c0_i32 = arith.constant 0 : i32
    %c0_i32_0 = arith.constant 0 : i32
    return %arg0, %arg1, %c0_i32 : i32, i32, i32
  }
}

module attributes {stable_mosaic.version = 11 : i64} {
  func.func @transformer_block_kernel(%arg0: i32, %arg1: i32, %arg2: memref<1x16x32xf32, #tpu.memory_space<vmem>>, %arg3: memref<1x1x16xf32, #tpu.memory_space<vmem>>, %arg4: memref<32x32xf32, #tpu.memory_space<vmem>>, %arg5: memref<32x1xf32, #tpu.memory_space<vmem>>, %arg6: memref<64x32xf32, #tpu.memory_space<vmem>>, %arg7: memref<64x1xf32, #tpu.memory_space<vmem>>, %arg8: memref<32x32xf32, #tpu.memory_space<vmem>>, %arg9: memref<32x128xf32, #tpu.memory_space<vmem>>, %arg10: memref<1x128xf32, #tpu.memory_space<vmem>>, %arg11: memref<128x32xf32, #tpu.memory_space<vmem>>, %arg12: memref<6x32xf32, #tpu.memory_space<vmem>>, %arg13: memref<1x8x32xf32, #tpu.memory_space<vmem>>, %arg14: memref<4x8x16xf32, #tpu.memory_space<vmem>>, %arg15: memref<4x8x16xf32, #tpu.memory_space<vmem>>) attributes {dimension_semantics = [#tpu.dimension_semantics<parallel>, #tpu.dimension_semantics<arbitrary>], iteration_bounds = array<i64: 2, 2>, scalar_prefetch = 0 : i64, scratch_operands = 2 : i64, tpu.core_type = #tpu.core_type<tc>, window_params = [{transform_indices = @transform_0, window_bounds = array<i64: 1, 16, 32>}, {transform_indices = @transform_1, window_bounds = array<i64: 1, 1, 16>}, {pipeline_mode = #tpu.pipeline_mode<synchronous>, transform_indices = @transform_2, window_bounds = array<i64: 32, 32>}, {pipeline_mode = #tpu.pipeline_mode<synchronous>, transform_indices = @transform_3, window_bounds = array<i64: 32, 1>}, {pipeline_mode = #tpu.pipeline_mode<synchronous>, transform_indices = @transform_4, window_bounds = array<i64: 64, 32>}, {pipeline_mode = #tpu.pipeline_mode<synchronous>, transform_indices = @transform_5, window_bounds = array<i64: 64, 1>}, {pipeline_mode = #tpu.pipeline_mode<synchronous>, transform_indices = @transform_6, window_bounds = array<i64: 32, 32>}, {pipeline_mode = #tpu.pipeline_mode<synchronous>, transform_indices = @transform_7, window_bounds = array<i64: 32, 128>}, {pipeline_mode = #tpu.pipeline_mode<synchronous>, transform_indices = @transform_8, window_bounds = array<i64: 1, 128>}, {pipeline_mode = #tpu.pipeline_mode<synchronous>, transform_indices = @transform_9, window_bounds = array<i64: 128, 32>}, {pipeline_mode = #tpu.pipeline_mode<synchronous>, transform_indices = @transform_10, window_bounds = array<i64: 6, 32>}, {transform_indices = @transform_11, window_bounds = array<i64: 1, 8, 32>}]} {
    %c0 = arith.constant 0 : index
    %c0_0 = arith.constant 0 : index
    %0 = vector.load %arg12[%c0, %c0_0] : memref<6x32xf32, #tpu.memory_space<vmem>>, vector<1x32xf32>
    %c1 = arith.constant 1 : index
    %c0_1 = arith.constant 0 : index
    %1 = vector.load %arg12[%c1, %c0_1] : memref<6x32xf32, #tpu.memory_space<vmem>>, vector<1x32xf32>
    %c2 = arith.constant 2 : index
    %c0_2 = arith.constant 0 : index
    %2 = vector.load %arg12[%c2, %c0_2] : memref<6x32xf32, #tpu.memory_space<vmem>>, vector<1x32xf32>
    %c3 = arith.constant 3 : index
    %c0_3 = arith.constant 0 : index
    %3 = vector.load %arg12[%c3, %c0_3] : memref<6x32xf32, #tpu.memory_space<vmem>>, vector<1x32xf32>
    %c4 = arith.constant 4 : index
    %c0_4 = arith.constant 0 : index
    %4 = vector.load %arg12[%c4, %c0_4] : memref<6x32xf32, #tpu.memory_space<vmem>>, vector<1x32xf32>
    %c5 = arith.constant 5 : index
    %c0_5 = arith.constant 0 : index
    %5 = vector.load %arg12[%c5, %c0_5] : memref<6x32xf32, #tpu.memory_space<vmem>>, vector<1x32xf32>
    %c0_i32 = arith.constant 0 : i32
    %6 = arith.cmpi eq, %arg1, %c0_i32 : i32
    %7 = arith.extui %6 : i1 to i32
    %c0_i32_6 = arith.constant 0 : i32
    %8 = arith.cmpi ne, %7, %c0_i32_6 : i32
    scf.if %8 {
      %c0_57 = arith.constant 0 : index
      %c0_58 = arith.constant 0 : index
      %c0_59 = arith.constant 0 : index
      %114 = vector.load %arg2[%c0_57, %c0_58, %c0_59] : memref<1x16x32xf32, #tpu.memory_space<vmem>>, vector<1x16x32xf32>
      %115 = vector.shape_cast %114 : vector<1x16x32xf32> to vector<16x32xf32>
      %cst_60 = arith.constant dense<0.000000e+00> : vector<16xf32>
      %116 = vector.multi_reduction <add>, %115, %cst_60 [1] : vector<16x32xf32> to vector<16xf32>
      %117 = vector.shape_cast %116 : vector<16xf32> to vector<16x1xf32>
      %cst_61 = arith.constant 3.125000e-02 : f32
      %118 = vector.broadcast %cst_61 : f32 to vector<16x1xf32>
      %119 = arith.mulf %117, %118 : vector<16x1xf32>
      %120 = vector.broadcast %119 : vector<16x1xf32> to vector<16x32xf32>
      %121 = arith.subf %115, %120 : vector<16x32xf32>
      %122 = arith.mulf %121, %121 : vector<16x32xf32>
      %cst_62 = arith.constant dense<0.000000e+00> : vector<16xf32>
      %123 = vector.multi_reduction <add>, %122, %cst_62 [1] : vector<16x32xf32> to vector<16xf32>
      %124 = vector.shape_cast %123 : vector<16xf32> to vector<16x1xf32>
      %cst_63 = arith.constant 0.0322580636 : f32
      %125 = vector.broadcast %cst_63 : f32 to vector<16x1xf32>
      %126 = arith.mulf %124, %125 : vector<16x1xf32>
      %127 = math.sqrt %126 : vector<16x1xf32>
      %cst_64 = arith.constant 9.99999997E-7 : f32
      %128 = vector.broadcast %cst_64 : f32 to vector<16x1xf32>
      %129 = arith.addf %127, %128 : vector<16x1xf32>
      %cst_65 = arith.constant 1.000000e+00 : f32
      %130 = vector.broadcast %cst_65 : f32 to vector<16x1xf32>
      %131 = arith.divf %130, %129 : vector<16x1xf32>
      %132 = vector.broadcast %131 : vector<16x1xf32> to vector<16x32xf32>
      %133 = arith.mulf %121, %132 : vector<16x32xf32>
      %134 = vector.broadcast %0 : vector<1x32xf32> to vector<16x32xf32>
      %135 = arith.mulf %134, %133 : vector<16x32xf32>
      %136 = vector.broadcast %1 : vector<1x32xf32> to vector<16x32xf32>
      %137 = arith.addf %135, %136 : vector<16x32xf32>
      %c0_66 = arith.constant 0 : index
      %c0_67 = arith.constant 0 : index
      %138 = vector.load %arg6[%c0_66, %c0_67] : memref<64x32xf32, #tpu.memory_space<vmem>>, vector<64x32xf32>
      %cst_68 = arith.constant dense<0.000000e+00> : vector<64x16xf32>
      %139 = tpu.matmul %138, %137, %cst_68 {dimension_numbers = #tpu.dot_dimension_numbers<[1], [1], [0], [0], [0, 0, 1, 0], [], []>} : vector<64x32xf32>, vector<16x32xf32>, vector<64x16xf32> -> vector<64x16xf32>
      %c0_69 = arith.constant 0 : index
      %c0_70 = arith.constant 0 : index
      %140 = vector.load %arg7[%c0_69, %c0_70] : memref<64x1xf32, #tpu.memory_space<vmem>>, vector<64x1xf32>
      %141 = vector.broadcast %140 : vector<64x1xf32> to vector<64x16xf32>
      %142 = arith.addf %139, %141 : vector<64x16xf32>
      %143 = vector.extract_strided_slice %142 {offsets = [0, 0], sizes = [32, 16], strides = [1, 1]} : vector<64x16xf32> to vector<32x16xf32>
      %144 = vector.shape_cast %143 : vector<32x16xf32> to vector<4x8x16xf32>
      %c0_71 = arith.constant 0 : index
      %c0_72 = arith.constant 0 : index
      %c0_73 = arith.constant 0 : index
      %145 = vector.load %arg14[%c0_71, %c0_72, %c0_73] : memref<4x8x16xf32, #tpu.memory_space<vmem>>, vector<4x8x16xf32>
      tpu.vector_store %arg14[%c0_71, %c0_72, %c0_73], %144 {strides = array<i32>} : memref<4x8x16xf32, #tpu.memory_space<vmem>>, vector<4x8x16xf32>,
      %146 = vector.extract_strided_slice %142 {offsets = [32, 0], sizes = [32, 16], strides = [1, 1]} : vector<64x16xf32> to vector<32x16xf32>
      %147 = vector.shape_cast %146 : vector<32x16xf32> to vector<4x8x16xf32>
      %c0_74 = arith.constant 0 : index
      %c0_75 = arith.constant 0 : index
      %c0_76 = arith.constant 0 : index
      %148 = vector.load %arg15[%c0_74, %c0_75, %c0_76] : memref<4x8x16xf32, #tpu.memory_space<vmem>>, vector<4x8x16xf32>
      tpu.vector_store %arg15[%c0_74, %c0_75, %c0_76], %147 {strides = array<i32>} : memref<4x8x16xf32, #tpu.memory_space<vmem>>, vector<4x8x16xf32>,
    } else {
    }
    %c8_i32 = arith.constant 8 : i32
    %9 = arith.muli %arg1, %c8_i32 : i32
    %10 = tpu.assume_multiple %9, 8 : i32
    %c0_7 = arith.constant 0 : index
    %11 = arith.index_cast %10 : i32 to index
    %c0_8 = arith.constant 0 : index
    %12 = vector.load %arg2[%c0_7, %11, %c0_8] : memref<1x16x32xf32, #tpu.memory_space<vmem>>, vector<1x8x32xf32>
    %13 = vector.shape_cast %12 : vector<1x8x32xf32> to vector<8x32xf32>
    %cst = arith.constant dense<0.000000e+00> : vector<8xf32>
    %14 = vector.multi_reduction <add>, %13, %cst [1] : vector<8x32xf32> to vector<8xf32>
    %15 = vector.shape_cast %14 : vector<8xf32> to vector<8x1xf32>
    %cst_9 = arith.constant 3.125000e-02 : f32
    %16 = vector.broadcast %cst_9 : f32 to vector<8x1xf32>
    %17 = arith.mulf %15, %16 : vector<8x1xf32>
    %18 = vector.broadcast %17 : vector<8x1xf32> to vector<8x32xf32>
    %19 = arith.subf %13, %18 : vector<8x32xf32>
    %20 = arith.mulf %19, %19 : vector<8x32xf32>
    %cst_10 = arith.constant dense<0.000000e+00> : vector<8xf32>
    %21 = vector.multi_reduction <add>, %20, %cst_10 [1] : vector<8x32xf32> to vector<8xf32>
    %22 = vector.shape_cast %21 : vector<8xf32> to vector<8x1xf32>
    %cst_11 = arith.constant 0.0322580636 : f32
    %23 = vector.broadcast %cst_11 : f32 to vector<8x1xf32>
    %24 = arith.mulf %22, %23 : vector<8x1xf32>
    %25 = math.sqrt %24 : vector<8x1xf32>
    %cst_12 = arith.constant 9.99999997E-7 : f32
    %26 = vector.broadcast %cst_12 : f32 to vector<8x1xf32>
    %27 = arith.addf %25, %26 : vector<8x1xf32>
    %cst_13 = arith.constant 1.000000e+00 : f32
    %28 = vector.broadcast %cst_13 : f32 to vector<8x1xf32>
    %29 = arith.divf %28, %27 : vector<8x1xf32>
    %30 = vector.broadcast %29 : vector<8x1xf32> to vector<8x32xf32>
    %31 = arith.mulf %19, %30 : vector<8x32xf32>
    %32 = vector.broadcast %0 : vector<1x32xf32> to vector<8x32xf32>
    %33 = arith.mulf %32, %31 : vector<8x32xf32>
    %34 = vector.broadcast %1 : vector<1x32xf32> to vector<8x32xf32>
    %35 = arith.addf %33, %34 : vector<8x32xf32>
    %c0_14 = arith.constant 0 : index
    %c0_15 = arith.constant 0 : index
    %36 = vector.load %arg4[%c0_14, %c0_15] : memref<32x32xf32, #tpu.memory_space<vmem>>, vector<32x32xf32>
    %cst_16 = arith.constant dense<0.000000e+00> : vector<32x8xf32>
    %37 = tpu.matmul %36, %35, %cst_16 {dimension_numbers = #tpu.dot_dimension_numbers<[1], [1], [0], [0], [0, 0, 1, 0], [], []>} : vector<32x32xf32>, vector<8x32xf32>, vector<32x8xf32> -> vector<32x8xf32>
    %c0_17 = arith.constant 0 : index
    %c0_18 = arith.constant 0 : index
    %38 = vector.load %arg5[%c0_17, %c0_18] : memref<32x1xf32, #tpu.memory_space<vmem>>, vector<32x1xf32>
    %39 = vector.broadcast %38 : vector<32x1xf32> to vector<32x8xf32>
    %40 = arith.addf %37, %39 : vector<32x8xf32>
    %41 = vector.shape_cast %40 : vector<32x8xf32> to vector<4x8x8xf32>
    %c0_19 = arith.constant 0 : index
    %c0_20 = arith.constant 0 : index
    %c0_21 = arith.constant 0 : index
    %42 = vector.load %arg14[%c0_19, %c0_20, %c0_21] : memref<4x8x16xf32, #tpu.memory_space<vmem>>, vector<4x8x16xf32>
    %cst_22 = arith.constant dense<0.000000e+00> : vector<4x8x16xf32>
    %43 = tpu.matmul %41, %42, %cst_22 {dimension_numbers = #tpu.dot_dimension_numbers<[1], [1], [2], [2], [0, 0, 0, 2, 1, 2], [0], [0]>} : vector<4x8x8xf32>, vector<4x8x16xf32>, vector<4x8x16xf32> -> vector<4x8x16xf32>
    %c0_23 = arith.constant 0 : index
    %c0_24 = arith.constant 0 : index
    %c0_25 = arith.constant 0 : index
    %44 = vector.load %arg3[%c0_23, %c0_24, %c0_25] : memref<1x1x16xf32, #tpu.memory_space<vmem>>, vector<1x1x16xf32>
    %45 = vector.broadcast %44 : vector<1x1x16xf32> to vector<4x8x16xf32>
    %46 = arith.addf %43, %45 : vector<4x8x16xf32>
    %cst_26 = arith.constant dense<0xFF800000> : vector<4x8xf32>
    %47 = vector.multi_reduction <maximumf>, %46, %cst_26 [2] : vector<4x8x16xf32> to vector<4x8xf32>
    %48 = vector.shape_cast %47 : vector<4x8xf32> to vector<4x8x1xf32>
    %49 = vector.broadcast %48 : vector<4x8x1xf32> to vector<4x8x16xf32>
    %50 = arith.subf %46, %49 : vector<4x8x16xf32>
    %51 = math.exp %50 : vector<4x8x16xf32>
    %cst_27 = arith.constant dense<0.000000e+00> : vector<4x8xf32>
    %52 = vector.multi_reduction <add>, %51, %cst_27 [2] : vector<4x8x16xf32> to vector<4x8xf32>
    %53 = vector.shape_cast %52 : vector<4x8xf32> to vector<4x8x1xf32>
    %cst_28 = arith.constant 1.000000e+00 : f32
    %54 = vector.broadcast %cst_28 : f32 to vector<4x8x1xf32>
    %55 = arith.divf %54, %53 : vector<4x8x1xf32>
    %56 = vector.broadcast %55 : vector<4x8x1xf32> to vector<4x8x16xf32>
    %57 = arith.mulf %51, %56 : vector<4x8x16xf32>
    %c0_29 = arith.constant 0 : index
    %c0_30 = arith.constant 0 : index
    %c0_31 = arith.constant 0 : index
    %58 = vector.load %arg15[%c0_29, %c0_30, %c0_31] : memref<4x8x16xf32, #tpu.memory_space<vmem>>, vector<4x8x16xf32>
    %cst_32 = arith.constant dense<0.000000e+00> : vector<4x8x8xf32>
    %59 = tpu.matmul %58, %57, %cst_32 {dimension_numbers = #tpu.dot_dimension_numbers<[2], [2], [1], [1], [0, 0, 0, 1, 1, 1], [0], [0]>} : vector<4x8x16xf32>, vector<4x8x16xf32>, vector<4x8x8xf32> -> vector<4x8x8xf32>
    %60 = vector.shape_cast %59 : vector<4x8x8xf32> to vector<32x8xf32>
    %c0_33 = arith.constant 0 : index
    %c0_34 = arith.constant 0 : index
    %61 = vector.load %arg8[%c0_33, %c0_34] : memref<32x32xf32, #tpu.memory_space<vmem>>, vector<32x32xf32>
    %cst_35 = arith.constant dense<0.000000e+00> : vector<8x32xf32>
    %62 = tpu.matmul %60, %61, %cst_35 {dimension_numbers = #tpu.dot_dimension_numbers<[0], [0], [1], [1], [0, 1, 1, 1], [], []>} : vector<32x8xf32>, vector<32x32xf32>, vector<8x32xf32> -> vector<8x32xf32>
    %63 = vector.broadcast %4 : vector<1x32xf32> to vector<8x32xf32>
    %64 = arith.addf %62, %63 : vector<8x32xf32>
    %65 = arith.addf %13, %64 : vector<8x32xf32>
    %cst_36 = arith.constant dense<0.000000e+00> : vector<8xf32>
    %66 = vector.multi_reduction <add>, %65, %cst_36 [1] : vector<8x32xf32> to vector<8xf32>
    %67 = vector.shape_cast %66 : vector<8xf32> to vector<8x1xf32>
    %cst_37 = arith.constant 3.125000e-02 : f32
    %68 = vector.broadcast %cst_37 : f32 to vector<8x1xf32>
    %69 = arith.mulf %67, %68 : vector<8x1xf32>
    %70 = vector.broadcast %69 : vector<8x1xf32> to vector<8x32xf32>
    %71 = arith.subf %65, %70 : vector<8x32xf32>
    %72 = arith.mulf %71, %71 : vector<8x32xf32>
    %cst_38 = arith.constant dense<0.000000e+00> : vector<8xf32>
    %73 = vector.multi_reduction <add>, %72, %cst_38 [1] : vector<8x32xf32> to vector<8xf32>
    %74 = vector.shape_cast %73 : vector<8xf32> to vector<8x1xf32>
    %cst_39 = arith.constant 0.0322580636 : f32
    %75 = vector.broadcast %cst_39 : f32 to vector<8x1xf32>
    %76 = arith.mulf %74, %75 : vector<8x1xf32>
    %77 = math.sqrt %76 : vector<8x1xf32>
    %cst_40 = arith.constant 9.99999997E-7 : f32
    %78 = vector.broadcast %cst_40 : f32 to vector<8x1xf32>
    %79 = arith.addf %77, %78 : vector<8x1xf32>
    %cst_41 = arith.constant 1.000000e+00 : f32
    %80 = vector.broadcast %cst_41 : f32 to vector<8x1xf32>
    %81 = arith.divf %80, %79 : vector<8x1xf32>
    %82 = vector.broadcast %81 : vector<8x1xf32> to vector<8x32xf32>
    %83 = arith.mulf %71, %82 : vector<8x32xf32>
    %84 = vector.broadcast %2 : vector<1x32xf32> to vector<8x32xf32>
    %85 = arith.mulf %84, %83 : vector<8x32xf32>
    %86 = vector.broadcast %3 : vector<1x32xf32> to vector<8x32xf32>
    %87 = arith.addf %85, %86 : vector<8x32xf32>
    %c0_42 = arith.constant 0 : index
    %c0_43 = arith.constant 0 : index
    %88 = vector.load %arg9[%c0_42, %c0_43] : memref<32x128xf32, #tpu.memory_space<vmem>>, vector<32x128xf32>
    %cst_44 = arith.constant dense<0.000000e+00> : vector<8x128xf32>
    %89 = tpu.matmul %87, %88, %cst_44 {dimension_numbers = #tpu.dot_dimension_numbers<[1], [0], [0], [1], [0, 0, 1, 1], [], []>} : vector<8x32xf32>, vector<32x128xf32>, vector<8x128xf32> -> vector<8x128xf32>
    %c0_45 = arith.constant 0 : index
    %c0_46 = arith.constant 0 : index
    %90 = vector.load %arg10[%c0_45, %c0_46] : memref<1x128xf32, #tpu.memory_space<vmem>>, vector<1x128xf32>
    %91 = vector.broadcast %90 : vector<1x128xf32> to vector<8x128xf32>
    %92 = arith.addf %89, %91 : vector<8x128xf32>
    %cst_47 = arith.constant 5.000000e-01 : f32
    %93 = vector.broadcast %cst_47 : f32 to vector<8x128xf32>
    %94 = arith.mulf %93, %92 : vector<8x128xf32>
    %95 = arith.mulf %92, %92 : vector<8x128xf32>
    %96 = arith.mulf %95, %92 : vector<8x128xf32>
    %cst_48 = arith.constant 4.471500e-02 : f32
    %97 = vector.broadcast %cst_48 : f32 to vector<8x128xf32>
    %98 = arith.mulf %97, %96 : vector<8x128xf32>
    %99 = arith.addf %92, %98 : vector<8x128xf32>
    %cst_49 = arith.constant 0.797884583 : f32
    %100 = vector.broadcast %cst_49 : f32 to vector<8x128xf32>
    %101 = arith.mulf %100, %99 : vector<8x128xf32>
    %102 = math.tanh %101 : vector<8x128xf32>
    %cst_50 = arith.constant 1.000000e+00 : f32
    %103 = vector.broadcast %cst_50 : f32 to vector<8x128xf32>
    %104 = arith.addf %103, %102 : vector<8x128xf32>
    %105 = arith.mulf %94, %104 : vector<8x128xf32>
    %c0_51 = arith.constant 0 : index
    %c0_52 = arith.constant 0 : index
    %106 = vector.load %arg11[%c0_51, %c0_52] : memref<128x32xf32, #tpu.memory_space<vmem>>, vector<128x32xf32>
    %cst_53 = arith.constant dense<0.000000e+00> : vector<8x32xf32>
    %107 = tpu.matmul %105, %106, %cst_53 {dimension_numbers = #tpu.dot_dimension_numbers<[1], [0], [0], [1], [0, 0, 1, 1], [], []>} : vector<8x128xf32>, vector<128x32xf32>, vector<8x32xf32> -> vector<8x32xf32>
    %108 = vector.broadcast %5 : vector<1x32xf32> to vector<8x32xf32>
    %109 = arith.addf %107, %108 : vector<8x32xf32>
    %110 = arith.addf %65, %109 : vector<8x32xf32>
    %c0_54 = arith.constant 0 : index
    %c0_55 = arith.constant 0 : index
    %c0_56 = arith.constant 0 : index
    %111 = vector.load %arg13[%c0_54, %c0_55, %c0_56] : memref<1x8x32xf32, #tpu.memory_space<vmem>>, vector<1x8x32xf32>
    %112 = vector.shape_cast %111 : vector<1x8x32xf32> to vector<8x32xf32>
    %113 = vector.shape_cast %110 : vector<8x32xf32> to vector<1x8x32xf32>
    tpu.vector_store %arg13[%c0_54, %c0_55, %c0_56], %113 {strides = array<i32>} : memref<1x8x32xf32, #tpu.memory_space<vmem>>, vector<1x8x32xf32>,
    return
  }
  func.func @transform_0(%arg0: i32, %arg1: i32) -> (i32, i32, i32) {
    %c0_i32 = arith.constant 0 : i32
    %c0_i32_0 = arith.constant 0 : i32
    %c0_i32_1 = arith.constant 0 : i32
    return %arg0, %c0_i32, %c0_i32_0 : i32, i32, i32
  }
  func.func @transform_1(%arg0: i32, %arg1: i32) -> (i32, i32, i32) {
    %c0_i32 = arith.constant 0 : i32
    %c0_i32_0 = arith.constant 0 : i32
    %c0_i32_1 = arith.constant 0 : i32
    return %arg0, %c0_i32, %c0_i32_0 : i32, i32, i32
  }
  func.func @transform_2(%arg0: i32, %arg1: i32) -> (i32, i32) {
    %c0_i32 = arith.constant 0 : i32
    %c0_i32_0 = arith.constant 0 : i32
    %c0_i32_1 = arith.constant 0 : i32
    return %c0_i32, %c0_i32_0 : i32, i32
  }
  func.func @transform_3(%arg0: i32, %arg1: i32) -> (i32, i32) {
    %c0_i32 = arith.constant 0 : i32
    %c0_i32_0 = arith.constant 0 : i32
    %c0_i32_1 = arith.constant 0 : i32
    return %c0_i32, %c0_i32_0 : i32, i32
  }
  func.func @transform_4(%arg0: i32, %arg1: i32) -> (i32, i32) {
    %c0_i32 = arith.constant 0 : i32
    %c0_i32_0 = arith.constant 0 : i32
    %c0_i32_1 = arith.constant 0 : i32
    return %c0_i32, %c0_i32_0 : i32, i32
  }
  func.func @transform_5(%arg0: i32, %arg1: i32) -> (i32, i32) {
    %c0_i32 = arith.constant 0 : i32
    %c0_i32_0 = arith.constant 0 : i32
    %c0_i32_1 = arith.constant 0 : i32
    return %c0_i32, %c0_i32_0 : i32, i32
  }
  func.func @transform_6(%arg0: i32, %arg1: i32) -> (i32, i32) {
    %c0_i32 = arith.constant 0 : i32
    %c0_i32_0 = arith.constant 0 : i32
    %c0_i32_1 = arith.constant 0 : i32
    return %c0_i32, %c0_i32_0 : i32, i32
  }
  func.func @transform_7(%arg0: i32, %arg1: i32) -> (i32, i32) {
    %c0_i32 = arith.constant 0 : i32
    %c0_i32_0 = arith.constant 0 : i32
    %c0_i32_1 = arith.constant 0 : i32
    return %c0_i32, %c0_i32_0 : i32, i32
  }
  func.func @transform_8(%arg0: i32, %arg1: i32) -> (i32, i32) {
    %c0_i32 = arith.constant 0 : i32
    %c0_i32_0 = arith.constant 0 : i32
    %c0_i32_1 = arith.constant 0 : i32
    return %c0_i32, %c0_i32_0 : i32, i32
  }
  func.func @transform_9(%arg0: i32, %arg1: i32) -> (i32, i32) {
    %c0_i32 = arith.constant 0 : i32
    %c0_i32_0 = arith.constant 0 : i32
    %c0_i32_1 = arith.constant 0 : i32
    return %c0_i32, %c0_i32_0 : i32, i32
  }
  func.func @transform_10(%arg0: i32, %arg1: i32) -> (i32, i32) {
    %c0_i32 = arith.constant 0 : i32
    %c0_i32_0 = arith.constant 0 : i32
    %c0_i32_1 = arith.constant 0 : i32
    return %c0_i32, %c0_i32_0 : i32, i32
  }
  func.func @transform_11(%arg0: i32, %arg1: i32) -> (i32, i32, i32) {
    %c0_i32 = arith.constant 0 : i32
    %c0_i32_0 = arith.constant 0 : i32
    return %arg0, %arg1, %c0_i32 : i32, i32, i32
  }
}

</mosaic_0001>

<llo_original>
// kernel: tpu_custom_call.1
$region0: #{tpu_custom_call.1}
  #allocation0 [shape = 'u32[]', space=smem, size = 0x4, offset = 0x4, fixed_abs, tag = 'smem constant byte address 0x4 - core index']
  #allocation1 [shape = 'u32[144,128]{1,0:T(1,128)}', space=vmem, size = 0x12000, scoped, tag = 'internal scratch']
  #allocation2 [shape = 'f32[4,8,16]{2,1,0:T(8,128)}', space=vmem, size = 0x4000, scoped, tag = 'scratch operand']
  #allocation3 [shape = 'f32[4,8,16]{2,1,0:T(8,128)}', space=vmem, size = 0x4000, scoped, tag = 'scratch operand']
  %s0 = inlined_call_operand.vmem [shape: f32[2,16,32], index: 0, kind: input, shape index: {}]
  %s1 = inlined_call_operand.vmem [shape: f32[2,1,16], index: 1, kind: input, shape index: {}]
  %s2 = inlined_call_operand.vmem [shape: f32[32,32], index: 2, kind: input, shape index: {}]
  %s3 = inlined_call_operand.vmem [shape: f32[32,1], index: 3, kind: input, shape index: {}]
  %s4 = inlined_call_operand.vmem [shape: f32[64,32], index: 4, kind: input, shape index: {}]
  %s5 = inlined_call_operand.vmem [shape: f32[64,1], index: 5, kind: input, shape index: {}]
  %s6 = inlined_call_operand.vmem [shape: f32[32,32], index: 6, kind: input, shape index: {}]
  %s7 = inlined_call_operand.vmem [shape: f32[32,128], index: 7, kind: input, shape index: {}]
  %s8 = inlined_call_operand.vmem [shape: f32[1,128], index: 8, kind: input, shape index: {}]
  %s9 = inlined_call_operand.vmem [shape: f32[128,32], index: 9, kind: input, shape index: {}]
  %s10 = inlined_call_operand.vmem [shape: f32[6,32], index: 10, kind: input, shape index: {}]
  %s11 = inlined_call_operand.hbm [shape: f32[2,16,32], index: 11, kind: output, shape index: {}]
  %s12 = sld [smem:[#allocation0]]
  $region81: #{tpu_custom_call.1} parent=0
    _
  %s14 = ssub.s32 1, %s12
  %s15 = scalar_select 0, %s14, %s12
  $region1: #{tpu_custom_call.1} parent=0
    #allocation4 [shape = 'u8[8192]{0}', space=vmem, size = 0x2000, scoped, tag = 'output window, operand 0']
    #allocation5 [shape = 's32[2]{0}', space=sflag, size = 0x8, scoped, tag = 'scoped memory for tpu_custom_call.1']
    %16 = vsyncpa [#allocation5], 0
    %s17 = scalar_lea.sflag [#allocation5], 1
    %18 = vsyncpa %s17, 0
    loop: start=0, step=1, limit=6
    $region2: #{tpu_custom_call.1} parent=1 // loop_pre_header
      _
    $region3: #{tpu_custom_call.1} parent=1 // loop_header
      %s20 = sphi 0, %s24
      %p21 = scmp.ge.s32.totalorder %s20, 6
      %s27 = sphi 0, %s39
      %s28 = sphi 0, %s35
      %s29 = sphi 0, %s27
      %s30 = sphi 0, %s28
      %s31 = sphi 0, %s29
      %s32 = sphi 0, %s30
      %s42 = sphi 0, %s44
      %s45 = sphi 0, %s42
      %s46 = sphi 0, %s45
      %s62 = sphi 0, %s46
      %s68 = sphi 0, %s70
      %s71 = sphi 0, %s68
      %s72 = sphi 0, %s71
      %s88 = sphi 0, %s72
      %s92 = sphi 0, %s92
      %s94 = sphi 0, %s92
      %s95 = sphi 0, %s94
      %s109 = sphi 0, %s95
      %s113 = sphi 0, %s113
      %s115 = sphi 0, %s113
      %s116 = sphi 0, %s115
      %s130 = sphi 0, %s116
      %s134 = sphi 0, %s134
      %s136 = sphi 0, %s134
      %s137 = sphi 0, %s136
      %s151 = sphi 0, %s137
      %s155 = sphi 0, %s155
      %s157 = sphi 0, %s155
      %s158 = sphi 0, %s157
      %s172 = sphi 0, %s158
      %s176 = sphi 0, %s176
      %s178 = sphi 0, %s176
      %s179 = sphi 0, %s178
      %s193 = sphi 0, %s179
      %s197 = sphi 0, %s197
      %s199 = sphi 0, %s197
      %s200 = sphi 0, %s199
      %s214 = sphi 0, %s200
      %s218 = sphi 0, %s218
      %s220 = sphi 0, %s218
      %s221 = sphi 0, %s220
      %s235 = sphi 0, %s221
      %s239 = sphi 0, %s239
      %s241 = sphi 0, %s239
      %s242 = sphi 0, %s241
      %s256 = sphi 0, %s242
      %s260 = sphi 0, %s260
      %s262 = sphi 0, %s260
      %s263 = sphi 0, %s262
      %s277 = sphi 0, %s263
      %s285 = sphi 0, %s287
      %s288 = sphi 0, %s285
      %s289 = sphi 0, %s288
      %s305 = sphi 0, %s289
    $region4: #{tpu_custom_call.1} parent=1 // loop_header_branch
      %23 = sbr.rel (%p21) target = $region8
    $region5: #{tpu_custom_call.1} parent=1 // loop_body
      %s25 = ssub.s32 %s20, 1
      %s26 = ssub.s32 %s20, 2
      %s33 = sadd.s32 1, %s28
      %p34 = scmp.ge.s32.totalorder %s33, 2
      %s35 = scalar_select %p34, 0, %s33
      %s36 = sadd.s32 1, %s27
      %s37 = scalar_select %p34, %s36, %s27
      %p38 = scmp.ge.s32.totalorder %s37, 2
      %s39 = scalar_select %p38, 0, %s37
      %s40 = ssub.s32 %s27, %s39
      %p41 = scmp.eq.s32.totalorder %s40, 0
      %s43 = sadd.s32 %s42, 1
      %s44 = scalar_select %p41, %s42, %s43
      %p47 = pneg %p41
      %p48 = scmp.eq.s32.totalorder %s20, 3
      %p49 = por %p47, %p48
      %p50 = scmp.ne.s32.totalorder %s42, %s45
      %p51 = scmp.eq.s32.totalorder %s20, 0
      %p52 = por %p50, %p51
      %p53 = scmp.ne.s32.totalorder %s42, %s45
      %p54 = scmp.eq.s32.totalorder %s25, 3
      %p55 = por %p53, %p54
      %p56 = scmp.ne.s32.totalorder %s45, %s46
      %p57 = scmp.eq.s32.totalorder %s25, 0
      %p58 = por %p56, %p57
      %p59 = scmp.ne.s32.totalorder %s45, %s46
      %p60 = scmp.eq.s32.totalorder %s26, 3
      %p61 = por %p59, %p60
      %p63 = scmp.ne.s32.totalorder %s46, %s62
      %p64 = scmp.eq.s32.totalorder %s26, 0
      %p65 = por %p63, %p64
      %s66 = ssub.s32 %s27, %s39
      %p67 = scmp.eq.s32.totalorder %s66, 0
      %s69 = sadd.s32 %s68, 1
      %s70 = scalar_select %p67, %s68, %s69
      %p73 = pneg %p67
      %p74 = scmp.eq.s32.totalorder %s20, 3
      %p75 = por %p73, %p74
      %p76 = scmp.ne.s32.totalorder %s68, %s71
      %p77 = scmp.eq.s32.totalorder %s20, 0
      %p78 = por %p76, %p77
      %p79 = scmp.ne.s32.totalorder %s68, %s71
      %p80 = scmp.eq.s32.totalorder %s25, 3
      %p81 = por %p79, %p80
      %p82 = scmp.ne.s32.totalorder %s71, %s72
      %p83 = scmp.eq.s32.totalorder %s25, 0
      %p84 = por %p82, %p83
      %p85 = scmp.ne.s32.totalorder %s71, %s72
      %p86 = scmp.eq.s32.totalorder %s26, 3
      %p87 = por %p85, %p86
      %p89 = scmp.ne.s32.totalorder %s72, %s88
      %p90 = scmp.eq.s32.totalorder %s26, 0
      %p91 = por %p89, %p90
      %s93 = sadd.s32 %s92, 1
      %p96 = scmp.eq.s32.totalorder %s20, 3
      %p97 = scmp.ne.s32.totalorder %s92, %s94
      %p98 = scmp.eq.s32.totalorder %s20, 0
      %p99 = por %p97, %p98
      %p100 = scmp.ne.s32.totalorder %s92, %s94
      %p101 = scmp.eq.s32.totalorder %s25, 3
      %p102 = por %p100, %p101
      %p103 = scmp.ne.s32.totalorder %s94, %s95
      %p104 = scmp.eq.s32.totalorder %s25, 0
      %p105 = por %p103, %p104
      %p106 = scmp.ne.s32.totalorder %s94, %s95
      %p107 = scmp.eq.s32.totalorder %s26, 3
      %p108 = por %p106, %p107
      %p110 = scmp.ne.s32.totalorder %s95, %s109
      %p111 = scmp.eq.s32.totalorder %s26, 0
      %p112 = por %p110, %p111
      %s114 = sadd.s32 %s113, 1
      %p117 = scmp.eq.s32.totalorder %s20, 3
      %p118 = scmp.ne.s32.totalorder %s113, %s115
      %p119 = scmp.eq.s32.totalorder %s20, 0
      %p120 = por %p118, %p119
      %p121 = scmp.ne.s32.totalorder %s113, %s115
      %p122 = scmp.eq.s32.totalorder %s25, 3
      %p123 = por %p121, %p122
      %p124 = scmp.ne.s32.totalorder %s115, %s116
      %p125 = scmp.eq.s32.totalorder %s25, 0
      %p126 = por %p124, %p125
      %p127 = scmp.ne.s32.totalorder %s115, %s116
      %p128 = scmp.eq.s32.totalorder %s26, 3
      %p129 = por %p127, %p128
      %p131 = scmp.ne.s32.totalorder %s116, %s130
      %p132 = scmp.eq.s32.totalorder %s26, 0
      %p133 = por %p131, %p132
      %s135 = sadd.s32 %s134, 1
      %p138 = scmp.eq.s32.totalorder %s20, 3
      %p139 = scmp.ne.s32.totalorder %s134, %s136
      %p140 = scmp.eq.s32.totalorder %s20, 0
      %p141 = por %p139, %p140
      %p142 = scmp.ne.s32.totalorder %s134, %s136
      %p143 = scmp.eq.s32.totalorder %s25, 3
      %p144 = por %p142, %p143
      %p145 = scmp.ne.s32.totalorder %s136, %s137
      %p146 = scmp.eq.s32.totalorder %s25, 0
      %p147 = por %p145, %p146
      %p148 = scmp.ne.s32.totalorder %s136, %s137
      %p149 = scmp.eq.s32.totalorder %s26, 3
      %p150 = por %p148, %p149
      %p152 = scmp.ne.s32.totalorder %s137, %s151
      %p153 = scmp.eq.s32.totalorder %s26, 0
      %p154 = por %p152, %p153
      %s156 = sadd.s32 %s155, 1
      %p159 = scmp.eq.s32.totalorder %s20, 3
      %p160 = scmp.ne.s32.totalorder %s155, %s157
      %p161 = scmp.eq.s32.totalorder %s20, 0
      %p162 = por %p160, %p161
      %p163 = scmp.ne.s32.totalorder %s155, %s157
      %p164 = scmp.eq.s32.totalorder %s25, 3
      %p165 = por %p163, %p164
      %p166 = scmp.ne.s32.totalorder %s157, %s158
      %p167 = scmp.eq.s32.totalorder %s25, 0
      %p168 = por %p166, %p167
      %p169 = scmp.ne.s32.totalorder %s157, %s158
      %p170 = scmp.eq.s32.totalorder %s26, 3
      %p171 = por %p169, %p170
      %p173 = scmp.ne.s32.totalorder %s158, %s172
      %p174 = scmp.eq.s32.totalorder %s26, 0
      %p175 = por %p173, %p174
      %s177 = sadd.s32 %s176, 1
      %p180 = scmp.eq.s32.totalorder %s20, 3
      %p181 = scmp.ne.s32.totalorder %s176, %s178
      %p182 = scmp.eq.s32.totalorder %s20, 0
      %p183 = por %p181, %p182
      %p184 = scmp.ne.s32.totalorder %s176, %s178
      %p185 = scmp.eq.s32.totalorder %s25, 3
      %p186 = por %p184, %p185
      %p187 = scmp.ne.s32.totalorder %s178, %s179
      %p188 = scmp.eq.s32.totalorder %s25, 0
      %p189 = por %p187, %p188
      %p190 = scmp.ne.s32.totalorder %s178, %s179
      %p191 = scmp.eq.s32.totalorder %s26, 3
      %p192 = por %p190, %p191
      %p194 = scmp.ne.s32.totalorder %s179, %s193
      %p195 = scmp.eq.s32.totalorder %s26, 0
      %p196 = por %p194, %p195
      %s198 = sadd.s32 %s197, 1
      %p201 = scmp.eq.s32.totalorder %s20, 3
      %p202 = scmp.ne.s32.totalorder %s197, %s199
      %p203 = scmp.eq.s32.totalorder %s20, 0
      %p204 = por %p202, %p203
      %p205 = scmp.ne.s32.totalorder %s197, %s199
      %p206 = scmp.eq.s32.totalorder %s25, 3
      %p207 = por %p205, %p206
      %p208 = scmp.ne.s32.totalorder %s199, %s200
      %p209 = scmp.eq.s32.totalorder %s25, 0
      %p210 = por %p208, %p209
      %p211 = scmp.ne.s32.totalorder %s199, %s200
      %p212 = scmp.eq.s32.totalorder %s26, 3
      %p213 = por %p211, %p212
      %p215 = scmp.ne.s32.totalorder %s200, %s214
      %p216 = scmp.eq.s32.totalorder %s26, 0
      %p217 = por %p215, %p216
      %s219 = sadd.s32 %s218, 1
      %p222 = scmp.eq.s32.totalorder %s20, 3
      %p223 = scmp.ne.s32.totalorder %s218, %s220
      %p224 = scmp.eq.s32.totalorder %s20, 0
      %p225 = por %p223, %p224
      %p226 = scmp.ne.s32.totalorder %s218, %s220
      %p227 = scmp.eq.s32.totalorder %s25, 3
      %p228 = por %p226, %p227
      %p229 = scmp.ne.s32.totalorder %s220, %s221
      %p230 = scmp.eq.s32.totalorder %s25, 0
      %p231 = por %p229, %p230
      %p232 = scmp.ne.s32.totalorder %s220, %s221
      %p233 = scmp.eq.s32.totalorder %s26, 3
      %p234 = por %p232, %p233
      %p236 = scmp.ne.s32.totalorder %s221, %s235
      %p237 = scmp.eq.s32.totalorder %s26, 0
      %p238 = por %p236, %p237
      %s240 = sadd.s32 %s239, 1
      %p243 = scmp.eq.s32.totalorder %s20, 3
      %p244 = scmp.ne.s32.totalorder %s239, %s241
      %p245 = scmp.eq.s32.totalorder %s20, 0
      %p246 = por %p244, %p245
      %p247 = scmp.ne.s32.totalorder %s239, %s241
      %p248 = scmp.eq.s32.totalorder %s25, 3
      %p249 = por %p247, %p248
      %p250 = scmp.ne.s32.totalorder %s241, %s242
      %p251 = scmp.eq.s32.totalorder %s25, 0
      %p252 = por %p250, %p251
      %p253 = scmp.ne.s32.totalorder %s241, %s242
      %p254 = scmp.eq.s32.totalorder %s26, 3
      %p255 = por %p253, %p254
      %p257 = scmp.ne.s32.totalorder %s242, %s256
      %p258 = scmp.eq.s32.totalorder %s26, 0
      %p259 = por %p257, %p258
      %s261 = sadd.s32 %s260, 1
      %p264 = scmp.eq.s32.totalorder %s20, 3
      %p265 = scmp.ne.s32.totalorder %s260, %s262
      %p266 = scmp.eq.s32.totalorder %s20, 0
      %p267 = por %p265, %p266
      %p268 = scmp.ne.s32.totalorder %s260, %s262
      %p269 = scmp.eq.s32.totalorder %s25, 3
      %p270 = por %p268, %p269
      %p271 = scmp.ne.s32.totalorder %s262, %s263
      %p272 = scmp.eq.s32.totalorder %s25, 0
      %p273 = por %p271, %p272
      %p274 = scmp.ne.s32.totalorder %s262, %s263
      %p275 = scmp.eq.s32.totalorder %s26, 3
      %p276 = por %p274, %p275
      %p278 = scmp.ne.s32.totalorder %s263, %s277
      %p279 = scmp.eq.s32.totalorder %s26, 0
      %p280 = por %p278, %p279
      %s281 = ssub.s32 %s27, %s39
      %s282 = ssub.s32 %s28, %s35
      %s283 = sor.u32 %s281, %s282
      %p284 = scmp.eq.s32.totalorder %s283, 0
      %s286 = sadd.s32 %s285, 1
      %s287 = scalar_select %p284, %s285, %s286
      %p290 = pneg %p284
      %p291 = scmp.eq.s32.totalorder %s20, 3
      %p292 = por %p290, %p291
      %p293 = scmp.ne.s32.totalorder %s285, %s288
      %p294 = scmp.eq.s32.totalorder %s20, 0
      %p295 = por %p293, %p294
      %p296 = scmp.ne.s32.totalorder %s285, %s288
      %p297 = scmp.eq.s32.totalorder %s25, 3
      %p298 = por %p296, %p297
      %p299 = scmp.ne.s32.totalorder %s288, %s289
      %p300 = scmp.eq.s32.totalorder %s25, 0
      %p301 = por %p299, %p300
      %p302 = scmp.ne.s32.totalorder %s288, %s289
      %p303 = scmp.eq.s32.totalorder %s26, 3
      %p304 = por %p302, %p303
      %p306 = scmp.ne.s32.totalorder %s289, %s305
      %p307 = scmp.eq.s32.totalorder %s26, 0
      %p308 = por %p306, %p307
      %p309 = scmp.le.s32.totalorder 1, %s20
      %p310 = scmp.lt.s32.totalorder %s20, 5
      %p311 = pnand %p309, %p310
      %p312 = pneg %p311
      // Predicated region
      $region9: #{tpu_custom_call.1} parent=5 // pred_check
        _
      $region10: #{tpu_custom_call.1} parent=5 // pred_check_branch
        %314 = sbr.rel (%p311) target = $region12
      $region11: #{tpu_custom_call.1} parent=5 // pred_region
        %s315 = ssub.s32 %s20, 1
        // Predicated region
        $region13: #{tpu_custom_call.1} parent=11 // pred_check
          %p316 = pneg %p105
        $region14: #{tpu_custom_call.1} parent=11 // pred_check_branch
          %318 = sbr.rel (%p316) target = $region16
        $region15: #{tpu_custom_call.1} parent=11 // pred_region
          _
        $region16: #{tpu_custom_call.1} parent=11 // pred_fallthru
          _
        // Predicated region
        $region17: #{tpu_custom_call.1} parent=11 // pred_check
          %p319 = pneg %p126
        $region18: #{tpu_custom_call.1} parent=11 // pred_check_branch
          %321 = sbr.rel (%p319) target = $region20
        $region19: #{tpu_custom_call.1} parent=11 // pred_region
          _
        $region20: #{tpu_custom_call.1} parent=11 // pred_fallthru
          _
        // Predicated region
        $region21: #{tpu_custom_call.1} parent=11 // pred_check
          %p322 = pneg %p147
        $region22: #{tpu_custom_call.1} parent=11 // pred_check_branch
          %324 = sbr.rel (%p322) target = $region24
        $region23: #{tpu_custom_call.1} parent=11 // pred_region
          _
        $region24: #{tpu_custom_call.1} parent=11 // pred_fallthru
          _
        // Predicated region
        $region25: #{tpu_custom_call.1} parent=11 // pred_check
          %p325 = pneg %p168
        $region26: #{tpu_custom_call.1} parent=11 // pred_check_branch
          %327 = sbr.rel (%p325) target = $region28
        $region27: #{tpu_custom_call.1} parent=11 // pred_region
          _
        $region28: #{tpu_custom_call.1} parent=11 // pred_fallthru
          _
        // Predicated region
        $region29: #{tpu_custom_call.1} parent=11 // pred_check
          %p328 = pneg %p189
        $region30: #{tpu_custom_call.1} parent=11 // pred_check_branch
          %330 = sbr.rel (%p328) target = $region32
        $region31: #{tpu_custom_call.1} parent=11 // pred_region
          _
        $region32: #{tpu_custom_call.1} parent=11 // pred_fallthru
          _
        // Predicated region
        $region33: #{tpu_custom_call.1} parent=11 // pred_check
          %p331 = pneg %p210
        $region34: #{tpu_custom_call.1} parent=11 // pred_check_branch
          %333 = sbr.rel (%p331) target = $region36
        $region35: #{tpu_custom_call.1} parent=11 // pred_region
          _
        $region36: #{tpu_custom_call.1} parent=11 // pred_fallthru
          _
        // Predicated region
        $region37: #{tpu_custom_call.1} parent=11 // pred_check
          %p334 = pneg %p231
        $region38: #{tpu_custom_call.1} parent=11 // pred_check_branch
          %336 = sbr.rel (%p334) target = $region40
        $region39: #{tpu_custom_call.1} parent=11 // pred_region
          _
        $region40: #{tpu_custom_call.1} parent=11 // pred_fallthru
          _
        // Predicated region
        $region41: #{tpu_custom_call.1} parent=11 // pred_check
          %p337 = pneg %p252
        $region42: #{tpu_custom_call.1} parent=11 // pred_check_branch
          %339 = sbr.rel (%p337) target = $region44
        $region43: #{tpu_custom_call.1} parent=11 // pred_region
          _
        $region44: #{tpu_custom_call.1} parent=11 // pred_fallthru
          _
        // Predicated region
        $region45: #{tpu_custom_call.1} parent=11 // pred_check
          %p340 = pneg %p273
        $region46: #{tpu_custom_call.1} parent=11 // pred_check_branch
          %342 = sbr.rel (%p340) target = $region48
        $region47: #{tpu_custom_call.1} parent=11 // pred_region
          _
        $region48: #{tpu_custom_call.1} parent=11 // pred_fallthru
          _
      $region12: #{tpu_custom_call.1} parent=5 // pred_fallthru
        _
      %p343 = scmp.lt.s32.totalorder %s20, 4
      // Predicated region
      $region49: #{tpu_custom_call.1} parent=5 // pred_check
        %p344 = pneg %p343
      $region50: #{tpu_custom_call.1} parent=5 // pred_check_branch
        %346 = sbr.rel (%p344) target = $region52
      $region51: #{tpu_custom_call.1} parent=5 // pred_region
        // Predicated region
        $region53: #{tpu_custom_call.1} parent=51 // pred_check
          %p347 = pneg %p52
        $region54: #{tpu_custom_call.1} parent=51 // pred_check_branch
          %349 = sbr.rel (%p347) target = $region56
        $region55: #{tpu_custom_call.1} parent=51 // pred_region
          %p350 = scmp.lt.s32.totalorder %s27, 1
          %s351 = scalar_select %p350, %s27, 1
          %s352 = smul.addr %s351, 2
          %s353 = smul.addr %s352, 8
          %s354 = scalar_lea.vmem %s0, %s353
        $region56: #{tpu_custom_call.1} parent=51 // pred_fallthru
          _
        // Predicated region
        $region57: #{tpu_custom_call.1} parent=51 // pred_check
          %p355 = pneg %p78
        $region58: #{tpu_custom_call.1} parent=51 // pred_check_branch
          %357 = sbr.rel (%p355) target = $region60
        $region59: #{tpu_custom_call.1} parent=51 // pred_region
          %p358 = scmp.lt.s32.totalorder %s27, 1
          %s359 = scalar_select %p358, %s27, 1
          %s360 = scalar_lea.vmem %s1, %s359
        $region60: #{tpu_custom_call.1} parent=51 // pred_fallthru
          _
      $region52: #{tpu_custom_call.1} parent=5 // pred_fallthru
        _
      %p361 = scmp.le.s32.totalorder 1, %s20
      %p362 = scmp.lt.s32.totalorder %s20, 5
      %p363 = pnand %p361, %p362
      %p364 = pneg %p363
      // Predicated region
      $region61: #{tpu_custom_call.1} parent=5 // pred_check
        _
      $region62: #{tpu_custom_call.1} parent=5 // pred_check_branch
        %366 = sbr.rel (%p363) target = $region64
      $region63: #{tpu_custom_call.1} parent=5 // pred_region
        %s367 = ssub.s32 %s20, 1
        %p368 = scmp.lt.s32.totalorder %s29, 1
        %s369 = scalar_select %p368, %s29, 1
        %s370 = smul.addr %s369, 2
        %s371 = smul.addr %s370, 8
        %s372 = scalar_lea.vmem %s0, %s371
        %p373 = pneg %p58
        %p374 = pneg %p55
        %p375 = scmp.lt.s32.totalorder %s29, 1
        %s376 = scalar_select %p375, %s29, 1
        %s377 = scalar_lea.vmem %s1, %s376
        %p378 = pneg %p84
        %p379 = pneg %p81
        %p380 = pneg %p105
        %p381 = pneg %p102
        %p382 = pneg %p126
        %p383 = pneg %p123
        %p384 = pneg %p147
        %p385 = pneg %p144
        %p386 = pneg %p168
        %p387 = pneg %p165
        %p388 = pneg %p189
        %p389 = pneg %p186
        %p390 = pneg %p210
        %p391 = pneg %p207
        %p392 = pneg %p231
        %p393 = pneg %p228
        %p394 = pneg %p252
        %p395 = pneg %p249
        %p396 = pneg %p273
        %p397 = pneg %p270
        %p398 = pneg %p301
        %p399 = pneg %p298
        %s400 = sand.u32 %s288, 1
        %s401 = scalar_lea.sflag [#allocation5], %s400
        %s402 = sand.u32 %s288, 1
        %s403 = smul.addr %s402, 8
        %s404 = scalar_lea.vmem [#allocation4], %s403
        %p405 = scmp.lt.s32.totalorder %s29, 1
        %s406 = scalar_select %p405, %s29, 1
        %s407 = smul.addr %s406, 2
        %s408 = smul.addr %s407, 8
        %s409 = scalar_lea.vmem %s0, %s408
        %p410 = scmp.lt.s32.totalorder %s29, 1
        %s411 = scalar_select %p410, %s29, 1
        %s412 = scalar_lea.vmem %s1, %s411
        %v413 = vld [vmem:[%s10] sm:$0x1]
        %v414 = vld [vmem:[%s10 + $0x1] sm:$0x1]
        %v415 = vld [vmem:[%s10 + $0x2] sm:$0x1]
        %v416 = vld [vmem:[%s10 + $0x3] sm:$0x1]
        %v417 = vld [vmem:[%s10 + $0x4] sm:$0x1]
        %v418 = vld [vmem:[%s10 + $0x5] sm:$0x1]
        %p419 = scmp.eq.s32.totalorder %s30, 0
        // Predicated region
        $region65: #{tpu_custom_call.1} parent=63 // pred_check
          %p420 = pneg %p419
        $region66: #{tpu_custom_call.1} parent=63 // pred_check_branch
          %422 = sbr.rel (%p420) target = $region68
        $region67: #{tpu_custom_call.1} parent=63 // pred_region
          %v423 = vld [vmem:[%s409] sm:$0xff]
          %v424 = vld [vmem:[%s409 + $0x8] sm:$0xff]
          %vm425 = vcmask 261120
          %v426 = vsel %vm425, %v423, 0.0
          %427 = vadd.xlane.f32.xlu0 %v426
          %v428 = vpop.xlane.xlu0 %427
          %v429 = vsel %vm425, %v424, 0.0
          %430 = vadd.xlane.f32.xlu0 %v429
          %v431 = vpop.xlane.xlu0 %430
          %v432 = vmul.f32 %v428, 0.03125
          %v433 = vmul.f32 %v431, 0.03125
          %v434 = vsub.f32 %v423, %v432
          %v435 = vsub.f32 %v424, %v433
          %v436 = vmul.f32 %v434, %v434
          %v437 = vmul.f32 %v435, %v435
          %v438 = vsel %vm425, %v436, 0.0
          %439 = vadd.xlane.f32.xlu0 %v438
          %v440 = vpop.xlane.xlu0 %439
          %v441 = vsel %vm425, %v437, 0.0
          %442 = vadd.xlane.f32.xlu0 %v441
          %v443 = vpop.xlane.xlu0 %442
          %v444 = vmul.f32 %v440, 0.032258064
          %v445 = vmul.f32 %v443, 0.032258064
          %v446 = vrsqrt.pop %v444
          %v447 = vmul.f32 %v444, %v446
          %vm448 = vcmp.eq.f32.partialorder %v444, inf
          %v449 = vsel %vm448, %v444, %v447
          %vm450 = vcmp.eq.f32.partialorder %v444, 0.0
          %v451 = vand.u32 %v444, 2147483648
          %v452 = vsel %vm450, %v451, %v449
          %v453 = vrsqrt.pop %v445
          %v454 = vmul.f32 %v445, %v453
          %vm455 = vcmp.eq.f32.partialorder %v445, inf
          %v456 = vsel %vm455, %v445, %v454
          %vm457 = vcmp.eq.f32.partialorder %v445, 0.0
          %v458 = vand.u32 %v445, 2147483648
          %v459 = vsel %vm457, %v458, %v456
          %v460 = vadd.f32 %v452, 1e-06
          %v461 = vadd.f32 %v459, 1e-06
          %v462 = vrcp.pop %v460
          %v463 = vmul.f32 1.0, %v462
          %v464 = vrcp.pop %v461
          %v465 = vmul.f32 1.0, %v464
          %v466 = vmul.f32 %v434, %v463
          %v467 = vmul.f32 %v435, %v465
          %v468 = vlaneseq
          %v469 = vshrl.u32 %v468, 7
          %v470 = vsub.s32 0, %v469
          %v471 = vrot.slane %v413, %v470
          %v472 = vmul.f32 %v471, %v466
          %v473 = vmul.f32 %v471, %v467
          %v474 = vlaneseq
          %v475 = vshrl.u32 %v474, 7
          %v476 = vsub.s32 0, %v475
          %v477 = vrot.slane %v414, %v476
          %v478 = vadd.f32 %v472, %v477
          %v479 = vadd.f32 %v473, %v477
          %v480 = vld [vmem:[%s4] sm:$0xff]
          %v481 = vld [vmem:[%s4 + $0x8] sm:$0xff]
          %v482 = vld [vmem:[%s4 + $0x10] sm:$0xff]
          %v483 = vld [vmem:[%s4 + $0x18] sm:$0xff]
          %v484 = vld [vmem:[%s4 + $0x20] sm:$0xff]
          %v485 = vld [vmem:[%s4 + $0x28] sm:$0xff]
          %v486 = vld [vmem:[%s4 + $0x30] sm:$0xff]
          %v487 = vld [vmem:[%s4 + $0x38] sm:$0xff]
          %v488 = vld [vmem:[%s5] sm:$0xff]
          %v489 = vld [vmem:[%s5 + $0x8] sm:$0xff]
          %v490 = vld [vmem:[%s5 + $0x10] sm:$0xff]
          %v491 = vld [vmem:[%s5 + $0x18] sm:$0xff]
          %v492 = vld [vmem:[%s5 + $0x20] sm:$0xff]
          %v493 = vld [vmem:[%s5 + $0x28] sm:$0xff]
          %v494 = vld [vmem:[%s5 + $0x30] sm:$0xff]
          %v495 = vld [vmem:[%s5 + $0x38] sm:$0xff]
          %497 = vset.pattern.permute.xlu0 0
          %498 = vperm.xlu0 %497, %v488
          %v499 = vpop.permute.xlu0 %498
          %502 = vset.pattern.permute.xlu0 0
          %503 = vperm.xlu0 %502, %v489
          %v504 = vpop.permute.xlu0 %503
          %507 = vset.pattern.permute.xlu0 0
          %508 = vperm.xlu0 %507, %v490
          %v509 = vpop.permute.xlu0 %508
          %512 = vset.pattern.permute.xlu0 0
          %513 = vperm.xlu0 %512, %v491
          %v514 = vpop.permute.xlu0 %513
          %517 = vset.pattern.permute.xlu0 0
          %518 = vperm.xlu0 %517, %v492
          %v519 = vpop.permute.xlu0 %518
          %522 = vset.pattern.permute.xlu0 0
          %523 = vperm.xlu0 %522, %v493
          %v524 = vpop.permute.xlu0 %523
          %527 = vset.pattern.permute.xlu0 0
          %528 = vperm.xlu0 %527, %v494
          %v529 = vpop.permute.xlu0 %528
          %532 = vset.pattern.permute.xlu0 0
          %533 = vperm.xlu0 %532, %v495
          %v534 = vpop.permute.xlu0 %533
          %v537 = vsel %vm425, %v480, 0
          %v540 = vsel %vm425, %v481, 0
          %v543 = vsel %vm425, %v482, 0
          %v546 = vsel %vm425, %v483, 0
          %v549 = vsel %vm425, %v484, 0
          %v552 = vsel %vm425, %v485, 0
          %v555 = vsel %vm425, %v486, 0
          %v558 = vsel %vm425, %v487, 0
          %v561 = vsel %vm425, %v478, 0
          %v564 = vsel %vm425, %v479, 0
          %566 = vmatprep.subr.mxu0 0.0
          %567 = vmatpush1.xpose.msra.mxu0 0.0
          %568 = vmatprep.subr.mxu0 0.0
          %569 = vmatpush1.xpose.msra.mxu0 0.0
          %570 = vmatprep.subr.mxu0 0.0
          %571 = vmatpush1.xpose.msra.mxu0 0.0
          %572 = vmatprep.subr.mxu0 0.0
          %573 = vmatpush1.xpose.msra.mxu0 0.0
          %574 = vmatprep.subr.mxu0 0.0
          %575 = vmatpush1.xpose.msra.mxu0 0.0
          %576 = vmatprep.subr.mxu0 0.0
          %577 = vmatpush1.xpose.msra.mxu0 0.0
          %578 = vmatprep.subr.mxu0 0.0
          %579 = vmatpush1.xpose.msra.mxu0 0.0
          %580 = vmatprep.subr.mxu0 0.0
          %581 = vmatpush1.xpose.msra.mxu0 0.0
          %582 = vmatprep.subr.mxu0 0.0
          %583 = vmatpush1.xpose.msra.mxu0 0.0
          %584 = vmatprep.subr.mxu0 0.0
          %585 = vmatpush1.xpose.msra.mxu0 0.0
          %586 = vmatprep.subr.mxu0 0.0
          %587 = vmatpush1.xpose.msra.mxu0 0.0
          %588 = vmatprep.subr.mxu0 0.0
          %589 = vmatpush1.xpose.msra.mxu0 0.0
          %590 = vmatprep.subr.mxu0 0.0
          %591 = vmatpush1.xpose.msra.mxu0 0.0
          %592 = vmatprep.subr.mxu0 0.0
          %593 = vmatpush1.xpose.msra.mxu0 0.0
          %594 = vmatprep.subr.mxu0 0.0
          %595 = vmatpush1.xpose.msra.mxu0 %v564
          %596 = vmatprep.subr.mxu0 0.0
          %597 = vmatpush1.xpose.msra.mxu0 %v561
          %598 = vmatprep.subr.mxu0 0.0
          %599 = vmatpush2.xpose.msra.mxu0 0.0
          %600 = vmatprep.subr.mxu0 0.0
          %601 = vmatpush2.xpose.msra.mxu0 0.0
          %602 = vmatprep.subr.mxu0 0.0
          %603 = vmatpush2.xpose.msra.mxu0 0.0
          %604 = vmatprep.subr.mxu0 0.0
          %605 = vmatpush2.xpose.msra.mxu0 0.0
          %606 = vmatprep.subr.mxu0 0.0
          %607 = vmatpush2.xpose.msra.mxu0 0.0
          %608 = vmatprep.subr.mxu0 0.0
          %609 = vmatpush2.xpose.msra.mxu0 0.0
          %610 = vmatprep.subr.mxu0 0.0
          %611 = vmatpush2.xpose.msra.mxu0 0.0
          %612 = vmatprep.subr.mxu0 0.0
          %613 = vmatpush2.xpose.msra.mxu0 0.0
          %614 = vmatprep.subr.mxu0 0.0
          %615 = vmatpush2.xpose.msra.mxu0 0.0
          %616 = vmatprep.subr.mxu0 0.0
          %617 = vmatpush2.xpose.msra.mxu0 0.0
          %618 = vmatprep.subr.mxu0 0.0
          %619 = vmatpush2.xpose.msra.mxu0 0.0
          %620 = vmatprep.subr.mxu0 0.0
          %621 = vmatpush2.xpose.msra.mxu0 0.0
          %622 = vmatprep.subr.mxu0 0.0
          %623 = vmatpush2.xpose.msra.mxu0 0.0
          %624 = vmatprep.subr.mxu0 0.0
          %625 = vmatpush2.xpose.msra.mxu0 0.0
          %626 = vmatprep.subr.mxu0 0.0
          %627 = vmatpush2.xpose.msra.mxu0 0.0
          %628 = vmatprep.subr.mxu0 0.0
          %629 = vmatpush2.xpose.msra.mxu0 0.0
          %630 = vmatprep.mubr.f32.mxu0 0.0
          %631 = vmatmul.mubr.f32.gmra.mxu0 %v537
          %v632 = vpop.f32.mrf.mxu0
          %v633 = vadd.f32 %v499, %v632
          %v634 = vpop.f32.mrf.mxu0
          %635 = vmatprep.mubr.f32.mxu0 0.0
          %636 = vmatmul.mubr.f32.gmra.mxu0 %v540
          %v637 = vpop.f32.mrf.mxu0
          %v638 = vadd.f32 %v504, %v637
          %v639 = vpop.f32.mrf.mxu0
          %640 = vmatprep.mubr.f32.mxu0 0.0
          %641 = vmatmul.mubr.f32.gmra.mxu0 %v543
          %v642 = vpop.f32.mrf.mxu0
          %v643 = vadd.f32 %v509, %v642
          %v644 = vpop.f32.mrf.mxu0
          %645 = vmatprep.mubr.f32.mxu0 0.0
          %646 = vmatmul.mubr.f32.gmra.mxu0 %v546
          %v647 = vpop.f32.mrf.mxu0
          %v648 = vadd.f32 %v514, %v647
          %v649 = vpop.f32.mrf.mxu0
          %650 = vmatprep.mubr.f32.mxu0 0.0
          %651 = vmatmul.mubr.f32.gmra.mxu0 %v549
          %v652 = vpop.f32.mrf.mxu0
          %v653 = vadd.f32 %v519, %v652
          %v654 = vpop.f32.mrf.mxu0
          %655 = vmatprep.mubr.f32.mxu0 0.0
          %656 = vmatmul.mubr.f32.gmra.mxu0 %v552
          %v657 = vpop.f32.mrf.mxu0
          %v658 = vadd.f32 %v524, %v657
          %v659 = vpop.f32.mrf.mxu0
          %660 = vmatprep.mubr.f32.mxu0 0.0
          %661 = vmatmul.mubr.f32.gmra.mxu0 %v555
          %v662 = vpop.f32.mrf.mxu0
          %v663 = vadd.f32 %v529, %v662
          %v664 = vpop.f32.mrf.mxu0
          %665 = vmatprep.mubr.f32.mxu0 0.0
          %666 = vmatmul.mubr.f32.gmra.mxu0 %v558
          %v667 = vpop.f32.mrf.mxu0
          %v668 = vadd.f32 %v534, %v667
          %v669 = vpop.f32.mrf.mxu0
          %670 = vdwg.mxu0
          %vm671 = vcmask 130048
          %672 = vst.msk [vmem:[#allocation2] sm:$0xff] %vm671, %v633
          %673 = vst.msk [vmem:[#allocation2 + $0x8] sm:$0xff] %vm671, %v638
          %674 = vst.msk [vmem:[#allocation2 + $0x10] sm:$0xff] %vm671, %v643
          %675 = vst.msk [vmem:[#allocation2 + $0x18] sm:$0xff] %vm671, %v648
          %676 = vst.msk [vmem:[#allocation3] sm:$0xff] %vm671, %v653
          %677 = vst.msk [vmem:[#allocation3 + $0x8] sm:$0xff] %vm671, %v658
          %678 = vst.msk [vmem:[#allocation3 + $0x10] sm:$0xff] %vm671, %v663
          %679 = vst.msk [vmem:[#allocation3 + $0x18] sm:$0xff] %vm671, %v668
        $region68: #{tpu_custom_call.1} parent=63 // pred_fallthru
          _
        %s680 = smul.u32 %s30, 8
        %s681 = scalar_lea.vmem %s409, %s680
        %v682 = vld [vmem:[%s681] sm:$0xff]
        %vm683 = vcmask 261120
        %v684 = vsel %vm683, %v682, 0.0
        %685 = vadd.xlane.f32.xlu0 %v684
        %v686 = vpop.xlane.xlu0 %685
        %v687 = vmul.f32 %v686, 0.03125
        %v688 = vsub.f32 %v682, %v687
        %v689 = vmul.f32 %v688, %v688
        %v690 = vsel %vm683, %v689, 0.0
        %691 = vadd.xlane.f32.xlu0 %v690
        %v692 = vpop.xlane.xlu0 %691
        %v693 = vmul.f32 %v692, 0.032258064
        %v694 = vrsqrt.pop %v693
        %v695 = vmul.f32 %v693, %v694
        %vm696 = vcmp.eq.f32.partialorder %v693, inf
        %v697 = vsel %vm696, %v693, %v695
        %vm698 = vcmp.eq.f32.partialorder %v693, 0.0
        %v699 = vand.u32 %v693, 2147483648
        %v700 = vsel %vm698, %v699, %v697
        %v701 = vadd.f32 %v700, 1e-06
        %v702 = vrcp.pop %v701
        %v703 = vmul.f32 1.0, %v702
        %v704 = vmul.f32 %v688, %v703
        %v705 = vlaneseq
        %v706 = vshrl.u32 %v705, 7
        %v707 = vsub.s32 0, %v706
        %v708 = vrot.slane %v413, %v707
        %v709 = vmul.f32 %v708, %v704
        %v710 = vlaneseq
        %v711 = vshrl.u32 %v710, 7
        %v712 = vsub.s32 0, %v711
        %v713 = vrot.slane %v414, %v712
        %v714 = vadd.f32 %v709, %v713
        %v715 = vld [vmem:[%s2] sm:$0xff]
        %v716 = vld [vmem:[%s2 + $0x8] sm:$0xff]
        %v717 = vld [vmem:[%s2 + $0x10] sm:$0xff]
        %v718 = vld [vmem:[%s2 + $0x18] sm:$0xff]
        %v719 = vld [vmem:[%s3] sm:$0xff]
        %v720 = vld [vmem:[%s3 + $0x8] sm:$0xff]
        %v721 = vld [vmem:[%s3 + $0x10] sm:$0xff]
        %v722 = vld [vmem:[%s3 + $0x18] sm:$0xff]
        %724 = vset.pattern.permute.xlu0 0
        %725 = vperm.xlu0 %724, %v719
        %v726 = vpop.permute.xlu0 %725
        %729 = vset.pattern.permute.xlu0 0
        %730 = vperm.xlu0 %729, %v720
        %v731 = vpop.permute.xlu0 %730
        %734 = vset.pattern.permute.xlu0 0
        %735 = vperm.xlu0 %734, %v721
        %v736 = vpop.permute.xlu0 %735
        %739 = vset.pattern.permute.xlu0 0
        %740 = vperm.xlu0 %739, %v722
        %v741 = vpop.permute.xlu0 %740
        %v744 = vsel %vm683, %v715, 0
        %v747 = vsel %vm683, %v716, 0
        %v750 = vsel %vm683, %v717, 0
        %v753 = vsel %vm683, %v718, 0
        %v756 = vsel %vm683, %v714, 0
        %758 = vmatprep.subr.mxu0 0.0
        %759 = vmatpush1.xpose.msra.mxu0 0.0
        %760 = vmatprep.subr.mxu0 0.0
        %761 = vmatpush1.xpose.msra.mxu0 0.0
        %762 = vmatprep.subr.mxu0 0.0
        %763 = vmatpush1.xpose.msra.mxu0 0.0
        %764 = vmatprep.subr.mxu0 0.0
        %765 = vmatpush1.xpose.msra.mxu0 0.0
        %766 = vmatprep.subr.mxu0 0.0
        %767 = vmatpush1.xpose.msra.mxu0 0.0
        %768 = vmatprep.subr.mxu0 0.0
        %769 = vmatpush1.xpose.msra.mxu0 0.0
        %770 = vmatprep.subr.mxu0 0.0
        %771 = vmatpush1.xpose.msra.mxu0 0.0
        %772 = vmatprep.subr.mxu0 0.0
        %773 = vmatpush1.xpose.msra.mxu0 0.0
        %774 = vmatprep.subr.mxu0 0.0
        %775 = vmatpush1.xpose.msra.mxu0 0.0
        %776 = vmatprep.subr.mxu0 0.0
        %777 = vmatpush1.xpose.msra.mxu0 0.0
        %778 = vmatprep.subr.mxu0 0.0
        %779 = vmatpush1.xpose.msra.mxu0 0.0
        %780 = vmatprep.subr.mxu0 0.0
        %781 = vmatpush1.xpose.msra.mxu0 0.0
        %782 = vmatprep.subr.mxu0 0.0
        %783 = vmatpush1.xpose.msra.mxu0 0.0
        %784 = vmatprep.subr.mxu0 0.0
        %785 = vmatpush1.xpose.msra.mxu0 0.0
        %786 = vmatprep.subr.mxu0 0.0
        %787 = vmatpush1.xpose.msra.mxu0 0.0
        %788 = vmatprep.subr.mxu0 0.0
        %789 = vmatpush1.xpose.msra.mxu0 %v756
        %790 = vmatprep.subr.mxu0 0.0
        %791 = vmatpush2.xpose.msra.mxu0 0.0
        %792 = vmatprep.subr.mxu0 0.0
        %793 = vmatpush2.xpose.msra.mxu0 0.0
        %794 = vmatprep.subr.mxu0 0.0
        %795 = vmatpush2.xpose.msra.mxu0 0.0
        %796 = vmatprep.subr.mxu0 0.0
        %797 = vmatpush2.xpose.msra.mxu0 0.0
        %798 = vmatprep.subr.mxu0 0.0
        %799 = vmatpush2.xpose.msra.mxu0 0.0
        %800 = vmatprep.subr.mxu0 0.0
        %801 = vmatpush2.xpose.msra.mxu0 0.0
        %802 = vmatprep.subr.mxu0 0.0
        %803 = vmatpush2.xpose.msra.mxu0 0.0
        %804 = vmatprep.subr.mxu0 0.0
        %805 = vmatpush2.xpose.msra.mxu0 0.0
        %806 = vmatprep.subr.mxu0 0.0
        %807 = vmatpush2.xpose.msra.mxu0 0.0
        %808 = vmatprep.subr.mxu0 0.0
        %809 = vmatpush2.xpose.msra.mxu0 0.0
        %810 = vmatprep.subr.mxu0 0.0
        %811 = vmatpush2.xpose.msra.mxu0 0.0
        %812 = vmatprep.subr.mxu0 0.0
        %813 = vmatpush2.xpose.msra.mxu0 0.0
        %814 = vmatprep.subr.mxu0 0.0
        %815 = vmatpush2.xpose.msra.mxu0 0.0
        %816 = vmatprep.subr.mxu0 0.0
        %817 = vmatpush2.xpose.msra.mxu0 0.0
        %818 = vmatprep.subr.mxu0 0.0
        %819 = vmatpush2.xpose.msra.mxu0 0.0
        %820 = vmatprep.subr.mxu0 0.0
        %821 = vmatpush2.xpose.msra.mxu0 0.0
        %822 = vmatprep.mubr.f32.mxu0 0.0
        %823 = vmatmul.mubr.f32.gmra.mxu0 %v744
        %v824 = vpop.f32.mrf.mxu0
        %v825 = vadd.f32 %v726, %v824
        %v826 = vpop.f32.mrf.mxu0
        %827 = vmatprep.mubr.f32.mxu0 0.0
        %828 = vmatmul.mubr.f32.gmra.mxu0 %v747
        %v829 = vpop.f32.mrf.mxu0
        %v830 = vadd.f32 %v731, %v829
        %v831 = vpop.f32.mrf.mxu0
        %832 = vmatprep.mubr.f32.mxu0 0.0
        %833 = vmatmul.mubr.f32.gmra.mxu0 %v750
        %v834 = vpop.f32.mrf.mxu0
        %v835 = vadd.f32 %v736, %v834
        %v836 = vpop.f32.mrf.mxu0
        %837 = vmatprep.mubr.f32.mxu0 0.0
        %838 = vmatmul.mubr.f32.gmra.mxu0 %v753
        %v839 = vpop.f32.mrf.mxu0
        %v840 = vadd.f32 %v741, %v839
        %v841 = vpop.f32.mrf.mxu0
        %842 = vdwg.mxu0
        %v843 = vld [vmem:[#allocation2] sm:$0xff]
        %v844 = vld [vmem:[#allocation2 + $0x8] sm:$0xff]
        %v845 = vld [vmem:[#allocation2 + $0x10] sm:$0xff]
        %v846 = vld [vmem:[#allocation2 + $0x18] sm:$0xff]
        %v847 = vld [vmem:[%s412] sm:$0x1]
        %v849 = vlaneseq
        %v850 = vshrl.u32 %v849, 7
        %v851 = vsub.s32 0, %v850
        %v852 = vrot.slane %v847, %v851
        %854 = vxpose.xlu0.b32.start [1/16] %v825, 128
        %855 = vxpose.xlu0.b32.cont [2/16] 0.0, 128
        %856 = vxpose.xlu0.b32.cont [3/16] 0.0, 128
        %857 = vxpose.xlu0.b32.cont [4/16] 0.0, 128
        %858 = vxpose.xlu0.b32.cont [5/16] 0.0, 128
        %859 = vxpose.xlu0.b32.cont [6/16] 0.0, 128
        %860 = vxpose.xlu0.b32.cont [7/16] 0.0, 128
        %861 = vxpose.xlu0.b32.cont [8/16] 0.0, 128
        %862 = vxpose.xlu0.b32.cont [9/16] 0.0, 128
        %863 = vxpose.xlu0.b32.cont [10/16] 0.0, 128
        %864 = vxpose.xlu0.b32.cont [11/16] 0.0, 128
        %865 = vxpose.xlu0.b32.cont [12/16] 0.0, 128
        %866 = vxpose.xlu0.b32.cont [13/16] 0.0, 128
        %867 = vxpose.xlu0.b32.cont [14/16] 0.0, 128
        %868 = vxpose.xlu0.b32.cont [15/16] 0.0, 128
        %869 = vxpose.xlu0.b32.end [16/16] 0.0, 128
        %v870 = vpop.trf.xlu0
        %v871 = vpop.trf.xlu0
        %v872 = vpop.trf.xlu0
        %v873 = vpop.trf.xlu0
        %v874 = vpop.trf.xlu0
        %v875 = vpop.trf.xlu0
        %v876 = vpop.trf.xlu0
        %v877 = vpop.trf.xlu0
        %v878 = vpop.trf.xlu0
        %v879 = vpop.trf.xlu0
        %v880 = vpop.trf.xlu0
        %v881 = vpop.trf.xlu0
        %v882 = vpop.trf.xlu0
        %v883 = vpop.trf.xlu0
        %v884 = vpop.trf.xlu0
        %v885 = vpop.trf.xlu0
        %vm886 = vcmask 64512
        %v888 = vsel %vm886, %v870, 0
        %890 = vmatprep.subr.mxu0 0.0
        %891 = vmatpush1.msra.mxu0 0.0
        %892 = vmatprep.subr.mxu0 0.0
        %893 = vmatpush1.msra.mxu0 0.0
        %894 = vmatprep.subr.mxu0 0.0
        %895 = vmatpush1.msra.mxu0 0.0
        %896 = vmatprep.subr.mxu0 0.0
        %897 = vmatpush1.msra.mxu0 0.0
        %898 = vmatprep.subr.mxu0 0.0
        %899 = vmatpush1.msra.mxu0 0.0
        %900 = vmatprep.subr.mxu0 0.0
        %901 = vmatpush1.msra.mxu0 0.0
        %902 = vmatprep.subr.mxu0 0.0
        %903 = vmatpush1.msra.mxu0 0.0
        %904 = vmatprep.subr.mxu0 0.0
        %905 = vmatpush1.msra.mxu0 0.0
        %906 = vmatprep.subr.mxu0 0.0
        %907 = vmatpush1.msra.mxu0 0.0
        %908 = vmatprep.subr.mxu0 0.0
        %909 = vmatpush1.msra.mxu0 0.0
        %910 = vmatprep.subr.mxu0 0.0
        %911 = vmatpush1.msra.mxu0 0.0
        %912 = vmatprep.subr.mxu0 0.0
        %913 = vmatpush1.msra.mxu0 0.0
        %914 = vmatprep.subr.mxu0 0.0
        %915 = vmatpush1.msra.mxu0 0.0
        %916 = vmatprep.subr.mxu0 0.0
        %917 = vmatpush1.msra.mxu0 0.0
        %918 = vmatprep.subr.mxu0 0.0
        %919 = vmatpush1.msra.mxu0 0.0
        %920 = vmatprep.subr.mxu0 0.0
        %921 = vmatpush1.msra.mxu0 %v843
        %922 = vmatprep.subr.mxu0 0.0
        %923 = vmatpush2.msra.mxu0 0.0
        %924 = vmatprep.subr.mxu0 0.0
        %925 = vmatpush2.msra.mxu0 0.0
        %926 = vmatprep.subr.mxu0 0.0
        %927 = vmatpush2.msra.mxu0 0.0
        %928 = vmatprep.subr.mxu0 0.0
        %929 = vmatpush2.msra.mxu0 0.0
        %930 = vmatprep.subr.mxu0 0.0
        %931 = vmatpush2.msra.mxu0 0.0
        %932 = vmatprep.subr.mxu0 0.0
        %933 = vmatpush2.msra.mxu0 0.0
        %934 = vmatprep.subr.mxu0 0.0
        %935 = vmatpush2.msra.mxu0 0.0
        %936 = vmatprep.subr.mxu0 0.0
        %937 = vmatpush2.msra.mxu0 0.0
        %938 = vmatprep.subr.mxu0 0.0
        %939 = vmatpush2.msra.mxu0 0.0
        %940 = vmatprep.subr.mxu0 0.0
        %941 = vmatpush2.msra.mxu0 0.0
        %942 = vmatprep.subr.mxu0 0.0
        %943 = vmatpush2.msra.mxu0 0.0
        %944 = vmatprep.subr.mxu0 0.0
        %945 = vmatpush2.msra.mxu0 0.0
        %946 = vmatprep.subr.mxu0 0.0
        %947 = vmatpush2.msra.mxu0 0.0
        %948 = vmatprep.subr.mxu0 0.0
        %949 = vmatpush2.msra.mxu0 0.0
        %950 = vmatprep.subr.mxu0 0.0
        %951 = vmatpush2.msra.mxu0 0.0
        %952 = vmatprep.subr.mxu0 0.0
        %953 = vmatpush2.msra.mxu0 0.0
        %954 = vmatprep.mubr.f32.mxu0 0.0
        %955 = vmatmul.mubr.f32.gmra.mxu0 %v888
        %v956 = vpop.f32.mrf.mxu0
        %v957 = vadd.f32 %v852, %v956
        %v958 = vpop.f32.mrf.mxu0
        %959 = vdwg.mxu0
        %960 = vxpose.xlu0.b32.start [1/16] %v830, 128
        %961 = vxpose.xlu0.b32.cont [2/16] 0.0, 128
        %962 = vxpose.xlu0.b32.cont [3/16] 0.0, 128
        %963 = vxpose.xlu0.b32.cont [4/16] 0.0, 128
        %964 = vxpose.xlu0.b32.cont [5/16] 0.0, 128
        %965 = vxpose.xlu0.b32.cont [6/16] 0.0, 128
        %966 = vxpose.xlu0.b32.cont [7/16] 0.0, 128
        %967 = vxpose.xlu0.b32.cont [8/16] 0.0, 128
        %968 = vxpose.xlu0.b32.cont [9/16] 0.0, 128
        %969 = vxpose.xlu0.b32.cont [10/16] 0.0, 128
        %970 = vxpose.xlu0.b32.cont [11/16] 0.0, 128
        %971 = vxpose.xlu0.b32.cont [12/16] 0.0, 128
        %972 = vxpose.xlu0.b32.cont [13/16] 0.0, 128
        %973 = vxpose.xlu0.b32.cont [14/16] 0.0, 128
        %974 = vxpose.xlu0.b32.cont [15/16] 0.0, 128
        %975 = vxpose.xlu0.b32.end [16/16] 0.0, 128
        %v976 = vpop.trf.xlu0
        %v977 = vpop.trf.xlu0
        %v978 = vpop.trf.xlu0
        %v979 = vpop.trf.xlu0
        %v980 = vpop.trf.xlu0
        %v981 = vpop.trf.xlu0
        %v982 = vpop.trf.xlu0
        %v983 = vpop.trf.xlu0
        %v984 = vpop.trf.xlu0
        %v985 = vpop.trf.xlu0
        %v986 = vpop.trf.xlu0
        %v987 = vpop.trf.xlu0
        %v988 = vpop.trf.xlu0
        %v989 = vpop.trf.xlu0
        %v990 = vpop.trf.xlu0
        %v991 = vpop.trf.xlu0
        %v993 = vsel %vm886, %v976, 0
        %995 = vmatprep.subr.mxu0 0.0
        %996 = vmatpush1.msra.mxu0 0.0
        %997 = vmatprep.subr.mxu0 0.0
        %998 = vmatpush1.msra.mxu0 0.0
        %999 = vmatprep.subr.mxu0 0.0
        %1000 = vmatpush1.msra.mxu0 0.0
        %1001 = vmatprep.subr.mxu0 0.0
        %1002 = vmatpush1.msra.mxu0 0.0
        %1003 = vmatprep.subr.mxu0 0.0
        %1004 = vmatpush1.msra.mxu0 0.0
        %1005 = vmatprep.subr.mxu0 0.0
        %1006 = vmatpush1.msra.mxu0 0.0
        %1007 = vmatprep.subr.mxu0 0.0
        %1008 = vmatpush1.msra.mxu0 0.0
        %1009 = vmatprep.subr.mxu0 0.0
        %1010 = vmatpush1.msra.mxu0 0.0
        %1011 = vmatprep.subr.mxu0 0.0
        %1012 = vmatpush1.msra.mxu0 0.0
        %1013 = vmatprep.subr.mxu0 0.0
        %1014 = vmatpush1.msra.mxu0 0.0
        %1015 = vmatprep.subr.mxu0 0.0
        %1016 = vmatpush1.msra.mxu0 0.0
        %1017 = vmatprep.subr.mxu0 0.0
        %1018 = vmatpush1.msra.mxu0 0.0
        %1019 = vmatprep.subr.mxu0 0.0
        %1020 = vmatpush1.msra.mxu0 0.0
        %1021 = vmatprep.subr.mxu0 0.0
        %1022 = vmatpush1.msra.mxu0 0.0
        %1023 = vmatprep.subr.mxu0 0.0
        %1024 = vmatpush1.msra.mxu0 0.0
        %1025 = vmatprep.subr.mxu0 0.0
        %1026 = vmatpush1.msra.mxu0 %v844
        %1027 = vmatprep.subr.mxu0 0.0
        %1028 = vmatpush2.msra.mxu0 0.0
        %1029 = vmatprep.subr.mxu0 0.0
        %1030 = vmatpush2.msra.mxu0 0.0
        %1031 = vmatprep.subr.mxu0 0.0
        %1032 = vmatpush2.msra.mxu0 0.0
        %1033 = vmatprep.subr.mxu0 0.0
        %1034 = vmatpush2.msra.mxu0 0.0
        %1035 = vmatprep.subr.mxu0 0.0
        %1036 = vmatpush2.msra.mxu0 0.0
        %1037 = vmatprep.subr.mxu0 0.0
        %1038 = vmatpush2.msra.mxu0 0.0
        %1039 = vmatprep.subr.mxu0 0.0
        %1040 = vmatpush2.msra.mxu0 0.0
        %1041 = vmatprep.subr.mxu0 0.0
        %1042 = vmatpush2.msra.mxu0 0.0
        %1043 = vmatprep.subr.mxu0 0.0
        %1044 = vmatpush2.msra.mxu0 0.0
        %1045 = vmatprep.subr.mxu0 0.0
        %1046 = vmatpush2.msra.mxu0 0.0
        %1047 = vmatprep.subr.mxu0 0.0
        %1048 = vmatpush2.msra.mxu0 0.0
        %1049 = vmatprep.subr.mxu0 0.0
        %1050 = vmatpush2.msra.mxu0 0.0
        %1051 = vmatprep.subr.mxu0 0.0
        %1052 = vmatpush2.msra.mxu0 0.0
        %1053 = vmatprep.subr.mxu0 0.0
        %1054 = vmatpush2.msra.mxu0 0.0
        %1055 = vmatprep.subr.mxu0 0.0
        %1056 = vmatpush2.msra.mxu0 0.0
        %1057 = vmatprep.subr.mxu0 0.0
        %1058 = vmatpush2.msra.mxu0 0.0
        %1059 = vmatprep.mubr.f32.mxu0 0.0
        %1060 = vmatmul.mubr.f32.gmra.mxu0 %v993
        %v1061 = vpop.f32.mrf.mxu0
        %v1062 = vadd.f32 %v852, %v1061
        %v1063 = vpop.f32.mrf.mxu0
        %1064 = vdwg.mxu0
        %1065 = vxpose.xlu0.b32.start [1/16] %v835, 128
        %1066 = vxpose.xlu0.b32.cont [2/16] 0.0, 128
        %1067 = vxpose.xlu0.b32.cont [3/16] 0.0, 128
        %1068 = vxpose.xlu0.b32.cont [4/16] 0.0, 128
        %1069 = vxpose.xlu0.b32.cont [5/16] 0.0, 128
        %1070 = vxpose.xlu0.b32.cont [6/16] 0.0, 128
        %1071 = vxpose.xlu0.b32.cont [7/16] 0.0, 128
        %1072 = vxpose.xlu0.b32.cont [8/16] 0.0, 128
        %1073 = vxpose.xlu0.b32.cont [9/16] 0.0, 128
        %1074 = vxpose.xlu0.b32.cont [10/16] 0.0, 128
        %1075 = vxpose.xlu0.b32.cont [11/16] 0.0, 128
        %1076 = vxpose.xlu0.b32.cont [12/16] 0.0, 128
        %1077 = vxpose.xlu0.b32.cont [13/16] 0.0, 128
        %1078 = vxpose.xlu0.b32.cont [14/16] 0.0, 128
        %1079 = vxpose.xlu0.b32.cont [15/16] 0.0, 128
        %1080 = vxpose.xlu0.b32.end [16/16] 0.0, 128
        %v1081 = vpop.trf.xlu0
        %v1082 = vpop.trf.xlu0
        %v1083 = vpop.trf.xlu0
        %v1084 = vpop.trf.xlu0
        %v1085 = vpop.trf.xlu0
        %v1086 = vpop.trf.xlu0
        %v1087 = vpop.trf.xlu0
        %v1088 = vpop.trf.xlu0
        %v1089 = vpop.trf.xlu0
        %v1090 = vpop.trf.xlu0
        %v1091 = vpop.trf.xlu0
        %v1092 = vpop.trf.xlu0
        %v1093 = vpop.trf.xlu0
        %v1094 = vpop.trf.xlu0
        %v1095 = vpop.trf.xlu0
        %v1096 = vpop.trf.xlu0
        %v1098 = vsel %vm886, %v1081, 0
        %1100 = vmatprep.subr.mxu0 0.0
        %1101 = vmatpush1.msra.mxu0 0.0
        %1102 = vmatprep.subr.mxu0 0.0
        %1103 = vmatpush1.msra.mxu0 0.0
        %1104 = vmatprep.subr.mxu0 0.0
        %1105 = vmatpush1.msra.mxu0 0.0
        %1106 = vmatprep.subr.mxu0 0.0
        %1107 = vmatpush1.msra.mxu0 0.0
        %1108 = vmatprep.subr.mxu0 0.0
        %1109 = vmatpush1.msra.mxu0 0.0
        %1110 = vmatprep.subr.mxu0 0.0
        %1111 = vmatpush1.msra.mxu0 0.0
        %1112 = vmatprep.subr.mxu0 0.0
        %1113 = vmatpush1.msra.mxu0 0.0
        %1114 = vmatprep.subr.mxu0 0.0
        %1115 = vmatpush1.msra.mxu0 0.0
        %1116 = vmatprep.subr.mxu0 0.0
        %1117 = vmatpush1.msra.mxu0 0.0
        %1118 = vmatprep.subr.mxu0 0.0
        %1119 = vmatpush1.msra.mxu0 0.0
        %1120 = vmatprep.subr.mxu0 0.0
        %1121 = vmatpush1.msra.mxu0 0.0
        %1122 = vmatprep.subr.mxu0 0.0
        %1123 = vmatpush1.msra.mxu0 0.0
        %1124 = vmatprep.subr.mxu0 0.0
        %1125 = vmatpush1.msra.mxu0 0.0
        %1126 = vmatprep.subr.mxu0 0.0
        %1127 = vmatpush1.msra.mxu0 0.0
        %1128 = vmatprep.subr.mxu0 0.0
        %1129 = vmatpush1.msra.mxu0 0.0
        %1130 = vmatprep.subr.mxu0 0.0
        %1131 = vmatpush1.msra.mxu0 %v845
        %1132 = vmatprep.subr.mxu0 0.0
        %1133 = vmatpush2.msra.mxu0 0.0
        %1134 = vmatprep.subr.mxu0 0.0
        %1135 = vmatpush2.msra.mxu0 0.0
        %1136 = vmatprep.subr.mxu0 0.0
        %1137 = vmatpush2.msra.mxu0 0.0
        %1138 = vmatprep.subr.mxu0 0.0
        %1139 = vmatpush2.msra.mxu0 0.0
        %1140 = vmatprep.subr.mxu0 0.0
        %1141 = vmatpush2.msra.mxu0 0.0
        %1142 = vmatprep.subr.mxu0 0.0
        %1143 = vmatpush2.msra.mxu0 0.0
        %1144 = vmatprep.subr.mxu0 0.0
        %1145 = vmatpush2.msra.mxu0 0.0
        %1146 = vmatprep.subr.mxu0 0.0
        %1147 = vmatpush2.msra.mxu0 0.0
        %1148 = vmatprep.subr.mxu0 0.0
        %1149 = vmatpush2.msra.mxu0 0.0
        %1150 = vmatprep.subr.mxu0 0.0
        %1151 = vmatpush2.msra.mxu0 0.0
        %1152 = vmatprep.subr.mxu0 0.0
        %1153 = vmatpush2.msra.mxu0 0.0
        %1154 = vmatprep.subr.mxu0 0.0
        %1155 = vmatpush2.msra.mxu0 0.0
        %1156 = vmatprep.subr.mxu0 0.0
        %1157 = vmatpush2.msra.mxu0 0.0
        %1158 = vmatprep.subr.mxu0 0.0
        %1159 = vmatpush2.msra.mxu0 0.0
        %1160 = vmatprep.subr.mxu0 0.0
        %1161 = vmatpush2.msra.mxu0 0.0
        %1162 = vmatprep.subr.mxu0 0.0
        %1163 = vmatpush2.msra.mxu0 0.0
        %1164 = vmatprep.mubr.f32.mxu0 0.0
        %1165 = vmatmul.mubr.f32.gmra.mxu0 %v1098
        %v1166 = vpop.f32.mrf.mxu0
        %v1167 = vadd.f32 %v852, %v1166
        %v1168 = vpop.f32.mrf.mxu0
        %1169 = vdwg.mxu0
        %1170 = vxpose.xlu0.b32.start [1/16] %v840, 128
        %1171 = vxpose.xlu0.b32.cont [2/16] 0.0, 128
        %1172 = vxpose.xlu0.b32.cont [3/16] 0.0, 128
        %1173 = vxpose.xlu0.b32.cont [4/16] 0.0, 128
        %1174 = vxpose.xlu0.b32.cont [5/16] 0.0, 128
        %1175 = vxpose.xlu0.b32.cont [6/16] 0.0, 128
        %1176 = vxpose.xlu0.b32.cont [7/16] 0.0, 128
        %1177 = vxpose.xlu0.b32.cont [8/16] 0.0, 128
        %1178 = vxpose.xlu0.b32.cont [9/16] 0.0, 128
        %1179 = vxpose.xlu0.b32.cont [10/16] 0.0, 128
        %1180 = vxpose.xlu0.b32.cont [11/16] 0.0, 128
        %1181 = vxpose.xlu0.b32.cont [12/16] 0.0, 128
        %1182 = vxpose.xlu0.b32.cont [13/16] 0.0, 128
        %1183 = vxpose.xlu0.b32.cont [14/16] 0.0, 128
        %1184 = vxpose.xlu0.b32.cont [15/16] 0.0, 128
        %1185 = vxpose.xlu0.b32.end [16/16] 0.0, 128
        %v1186 = vpop.trf.xlu0
        %v1187 = vpop.trf.xlu0
        %v1188 = vpop.trf.xlu0
        %v1189 = vpop.trf.xlu0
        %v1190 = vpop.trf.xlu0
        %v1191 = vpop.trf.xlu0
        %v1192 = vpop.trf.xlu0
        %v1193 = vpop.trf.xlu0
        %v1194 = vpop.trf.xlu0
        %v1195 = vpop.trf.xlu0
        %v1196 = vpop.trf.xlu0
        %v1197 = vpop.trf.xlu0
        %v1198 = vpop.trf.xlu0
        %v1199 = vpop.trf.xlu0
        %v1200 = vpop.trf.xlu0
        %v1201 = vpop.trf.xlu0
        %v1203 = vsel %vm886, %v1186, 0
        %1205 = vmatprep.subr.mxu0 0.0
        %1206 = vmatpush1.msra.mxu0 0.0
        %1207 = vmatprep.subr.mxu0 0.0
        %1208 = vmatpush1.msra.mxu0 0.0
        %1209 = vmatprep.subr.mxu0 0.0
        %1210 = vmatpush1.msra.mxu0 0.0
        %1211 = vmatprep.subr.mxu0 0.0
        %1212 = vmatpush1.msra.mxu0 0.0
        %1213 = vmatprep.subr.mxu0 0.0
        %1214 = vmatpush1.msra.mxu0 0.0
        %1215 = vmatprep.subr.mxu0 0.0
        %1216 = vmatpush1.msra.mxu0 0.0
        %1217 = vmatprep.subr.mxu0 0.0
        %1218 = vmatpush1.msra.mxu0 0.0
        %1219 = vmatprep.subr.mxu0 0.0
        %1220 = vmatpush1.msra.mxu0 0.0
        %1221 = vmatprep.subr.mxu0 0.0
        %1222 = vmatpush1.msra.mxu0 0.0
        %1223 = vmatprep.subr.mxu0 0.0
        %1224 = vmatpush1.msra.mxu0 0.0
        %1225 = vmatprep.subr.mxu0 0.0
        %1226 = vmatpush1.msra.mxu0 0.0
        %1227 = vmatprep.subr.mxu0 0.0
        %1228 = vmatpush1.msra.mxu0 0.0
        %1229 = vmatprep.subr.mxu0 0.0
        %1230 = vmatpush1.msra.mxu0 0.0
        %1231 = vmatprep.subr.mxu0 0.0
        %1232 = vmatpush1.msra.mxu0 0.0
        %1233 = vmatprep.subr.mxu0 0.0
        %1234 = vmatpush1.msra.mxu0 0.0
        %1235 = vmatprep.subr.mxu0 0.0
        %1236 = vmatpush1.msra.mxu0 %v846
        %1237 = vmatprep.subr.mxu0 0.0
        %1238 = vmatpush2.msra.mxu0 0.0
        %1239 = vmatprep.subr.mxu0 0.0
        %1240 = vmatpush2.msra.mxu0 0.0
        %1241 = vmatprep.subr.mxu0 0.0
        %1242 = vmatpush2.msra.mxu0 0.0
        %1243 = vmatprep.subr.mxu0 0.0
        %1244 = vmatpush2.msra.mxu0 0.0
        %1245 = vmatprep.subr.mxu0 0.0
        %1246 = vmatpush2.msra.mxu0 0.0
        %1247 = vmatprep.subr.mxu0 0.0
        %1248 = vmatpush2.msra.mxu0 0.0
        %1249 = vmatprep.subr.mxu0 0.0
        %1250 = vmatpush2.msra.mxu0 0.0
        %1251 = vmatprep.subr.mxu0 0.0
        %1252 = vmatpush2.msra.mxu0 0.0
        %1253 = vmatprep.subr.mxu0 0.0
        %1254 = vmatpush2.msra.mxu0 0.0
        %1255 = vmatprep.subr.mxu0 0.0
        %1256 = vmatpush2.msra.mxu0 0.0
        %1257 = vmatprep.subr.mxu0 0.0
        %1258 = vmatpush2.msra.mxu0 0.0
        %1259 = vmatprep.subr.mxu0 0.0
        %1260 = vmatpush2.msra.mxu0 0.0
        %1261 = vmatprep.subr.mxu0 0.0
        %1262 = vmatpush2.msra.mxu0 0.0
        %1263 = vmatprep.subr.mxu0 0.0
        %1264 = vmatpush2.msra.mxu0 0.0
        %1265 = vmatprep.subr.mxu0 0.0
        %1266 = vmatpush2.msra.mxu0 0.0
        %1267 = vmatprep.subr.mxu0 0.0
        %1268 = vmatpush2.msra.mxu0 0.0
        %1269 = vmatprep.mubr.f32.mxu0 0.0
        %1270 = vmatmul.mubr.f32.gmra.mxu0 %v1203
        %v1271 = vpop.f32.mrf.mxu0
        %v1272 = vadd.f32 %v852, %v1271
        %v1273 = vpop.f32.mrf.mxu0
        %1274 = vdwg.mxu0
        %vm1275 = vcmask 130048
        %v1276 = vsel %vm1275, %v957, -inf
        %1277 = vmax.xlane.f32.xlu0 %v1276
        %v1278 = vpop.xlane.xlu0 %1277
        %v1279 = vsel %vm1275, %v1062, -inf
        %1280 = vmax.xlane.f32.xlu0 %v1279
        %v1281 = vpop.xlane.xlu0 %1280
        %v1282 = vsel %vm1275, %v1167, -inf
        %1283 = vmax.xlane.f32.xlu0 %v1282
        %v1284 = vpop.xlane.xlu0 %1283
        %v1285 = vsel %vm1275, %v1272, -inf
        %1286 = vmax.xlane.f32.xlu0 %v1285
        %v1287 = vpop.xlane.xlu0 %1286
        %v1288 = vsub.f32 %v957, %v1278
        %v1289 = vsub.f32 %v1062, %v1281
        %v1290 = vsub.f32 %v1167, %v1284
        %v1291 = vsub.f32 %v1272, %v1287
        %v1292 = vmul.f32 %v1288, 1.442695
        %v1293 = vpow.pop %v1292
        %v1294 = vmul.f32 %v1289, 1.442695
        %v1295 = vpow.pop %v1294
        %v1296 = vmul.f32 %v1290, 1.442695
        %v1297 = vpow.pop %v1296
        %v1298 = vmul.f32 %v1291, 1.442695
        %v1299 = vpow.pop %v1298
        %v1300 = vsel %vm1275, %v1293, 0.0
        %1301 = vadd.xlane.f32.xlu0 %v1300
        %v1302 = vpop.xlane.xlu0 %1301
        %v1303 = vsel %vm1275, %v1295, 0.0
        %1304 = vadd.xlane.f32.xlu0 %v1303
        %v1305 = vpop.xlane.xlu0 %1304
        %v1306 = vsel %vm1275, %v1297, 0.0
        %1307 = vadd.xlane.f32.xlu0 %v1306
        %v1308 = vpop.xlane.xlu0 %1307
        %v1309 = vsel %vm1275, %v1299, 0.0
        %1310 = vadd.xlane.f32.xlu0 %v1309
        %v1311 = vpop.xlane.xlu0 %1310
        %v1312 = vrcp.pop %v1302
        %v1313 = vmul.f32 1.0, %v1312
        %v1314 = vrcp.pop %v1305
        %v1315 = vmul.f32 1.0, %v1314
        %v1316 = vrcp.pop %v1308
        %v1317 = vmul.f32 1.0, %v1316
        %v1318 = vrcp.pop %v1311
        %v1319 = vmul.f32 1.0, %v1318
        %v1320 = vmul.f32 %v1293, %v1313
        %v1321 = vmul.f32 %v1295, %v1315
        %v1322 = vmul.f32 %v1297, %v1317
        %v1323 = vmul.f32 %v1299, %v1319
        %v1324 = vld [vmem:[#allocation3] sm:$0xff]
        %v1325 = vld [vmem:[#allocation3 + $0x8] sm:$0xff]
        %v1326 = vld [vmem:[#allocation3 + $0x10] sm:$0xff]
        %v1327 = vld [vmem:[#allocation3 + $0x18] sm:$0xff]
        %v1329 = vsel %vm1275, %v1324, 0
        %v1332 = vsel %vm1275, %v1320, 0
        %1334 = vmatprep.subr.mxu0 0.0
        %1335 = vmatpush1.xpose.msra.mxu0 0.0
        %1336 = vmatprep.subr.mxu0 0.0
        %1337 = vmatpush1.xpose.msra.mxu0 0.0
        %1338 = vmatprep.subr.mxu0 0.0
        %1339 = vmatpush1.xpose.msra.mxu0 0.0
        %1340 = vmatprep.subr.mxu0 0.0
        %1341 = vmatpush1.xpose.msra.mxu0 0.0
        %1342 = vmatprep.subr.mxu0 0.0
        %1343 = vmatpush1.xpose.msra.mxu0 0.0
        %1344 = vmatprep.subr.mxu0 0.0
        %1345 = vmatpush1.xpose.msra.mxu0 0.0
        %1346 = vmatprep.subr.mxu0 0.0
        %1347 = vmatpush1.xpose.msra.mxu0 0.0
        %1348 = vmatprep.subr.mxu0 0.0
        %1349 = vmatpush1.xpose.msra.mxu0 0.0
        %1350 = vmatprep.subr.mxu0 0.0
        %1351 = vmatpush1.xpose.msra.mxu0 0.0
        %1352 = vmatprep.subr.mxu0 0.0
        %1353 = vmatpush1.xpose.msra.mxu0 0.0
        %1354 = vmatprep.subr.mxu0 0.0
        %1355 = vmatpush1.xpose.msra.mxu0 0.0
        %1356 = vmatprep.subr.mxu0 0.0
        %1357 = vmatpush1.xpose.msra.mxu0 0.0
        %1358 = vmatprep.subr.mxu0 0.0
        %1359 = vmatpush1.xpose.msra.mxu0 0.0
        %1360 = vmatprep.subr.mxu0 0.0
        %1361 = vmatpush1.xpose.msra.mxu0 0.0
        %1362 = vmatprep.subr.mxu0 0.0
        %1363 = vmatpush1.xpose.msra.mxu0 0.0
        %1364 = vmatprep.subr.mxu0 0.0
        %1365 = vmatpush1.xpose.msra.mxu0 %v1332
        %1366 = vmatprep.subr.mxu0 0.0
        %1367 = vmatpush2.xpose.msra.mxu0 0.0
        %1368 = vmatprep.subr.mxu0 0.0
        %1369 = vmatpush2.xpose.msra.mxu0 0.0
        %1370 = vmatprep.subr.mxu0 0.0
        %1371 = vmatpush2.xpose.msra.mxu0 0.0
        %1372 = vmatprep.subr.mxu0 0.0
        %1373 = vmatpush2.xpose.msra.mxu0 0.0
        %1374 = vmatprep.subr.mxu0 0.0
        %1375 = vmatpush2.xpose.msra.mxu0 0.0
        %1376 = vmatprep.subr.mxu0 0.0
        %1377 = vmatpush2.xpose.msra.mxu0 0.0
        %1378 = vmatprep.subr.mxu0 0.0
        %1379 = vmatpush2.xpose.msra.mxu0 0.0
        %1380 = vmatprep.subr.mxu0 0.0
        %1381 = vmatpush2.xpose.msra.mxu0 0.0
        %1382 = vmatprep.subr.mxu0 0.0
        %1383 = vmatpush2.xpose.msra.mxu0 0.0
        %1384 = vmatprep.subr.mxu0 0.0
        %1385 = vmatpush2.xpose.msra.mxu0 0.0
        %1386 = vmatprep.subr.mxu0 0.0
        %1387 = vmatpush2.xpose.msra.mxu0 0.0
        %1388 = vmatprep.subr.mxu0 0.0
        %1389 = vmatpush2.xpose.msra.mxu0 0.0
        %1390 = vmatprep.subr.mxu0 0.0
        %1391 = vmatpush2.xpose.msra.mxu0 0.0
        %1392 = vmatprep.subr.mxu0 0.0
        %1393 = vmatpush2.xpose.msra.mxu0 0.0
        %1394 = vmatprep.subr.mxu0 0.0
        %1395 = vmatpush2.xpose.msra.mxu0 0.0
        %1396 = vmatprep.subr.mxu0 0.0
        %1397 = vmatpush2.xpose.msra.mxu0 0.0
        %1398 = vmatprep.mubr.f32.mxu0 0.0
        %1399 = vmatmul.mubr.f32.gmra.mxu0 %v1329
        %v1400 = vpop.f32.mrf.mxu0
        %v1401 = vadd.f32 0.0, %v1400
        %v1402 = vpop.f32.mrf.mxu0
        %1403 = vdwg.mxu0
        %v1405 = vsel %vm1275, %v1325, 0
        %v1408 = vsel %vm1275, %v1321, 0
        %1410 = vmatprep.subr.mxu0 0.0
        %1411 = vmatpush1.xpose.msra.mxu0 0.0
        %1412 = vmatprep.subr.mxu0 0.0
        %1413 = vmatpush1.xpose.msra.mxu0 0.0
        %1414 = vmatprep.subr.mxu0 0.0
        %1415 = vmatpush1.xpose.msra.mxu0 0.0
        %1416 = vmatprep.subr.mxu0 0.0
        %1417 = vmatpush1.xpose.msra.mxu0 0.0
        %1418 = vmatprep.subr.mxu0 0.0
        %1419 = vmatpush1.xpose.msra.mxu0 0.0
        %1420 = vmatprep.subr.mxu0 0.0
        %1421 = vmatpush1.xpose.msra.mxu0 0.0
        %1422 = vmatprep.subr.mxu0 0.0
        %1423 = vmatpush1.xpose.msra.mxu0 0.0
        %1424 = vmatprep.subr.mxu0 0.0
        %1425 = vmatpush1.xpose.msra.mxu0 0.0
        %1426 = vmatprep.subr.mxu0 0.0
        %1427 = vmatpush1.xpose.msra.mxu0 0.0
        %1428 = vmatprep.subr.mxu0 0.0
        %1429 = vmatpush1.xpose.msra.mxu0 0.0
        %1430 = vmatprep.subr.mxu0 0.0
        %1431 = vmatpush1.xpose.msra.mxu0 0.0
        %1432 = vmatprep.subr.mxu0 0.0
        %1433 = vmatpush1.xpose.msra.mxu0 0.0
        %1434 = vmatprep.subr.mxu0 0.0
        %1435 = vmatpush1.xpose.msra.mxu0 0.0
        %1436 = vmatprep.subr.mxu0 0.0
        %1437 = vmatpush1.xpose.msra.mxu0 0.0
        %1438 = vmatprep.subr.mxu0 0.0
        %1439 = vmatpush1.xpose.msra.mxu0 0.0
        %1440 = vmatprep.subr.mxu0 0.0
        %1441 = vmatpush1.xpose.msra.mxu0 %v1408
        %1442 = vmatprep.subr.mxu0 0.0
        %1443 = vmatpush2.xpose.msra.mxu0 0.0
        %1444 = vmatprep.subr.mxu0 0.0
        %1445 = vmatpush2.xpose.msra.mxu0 0.0
        %1446 = vmatprep.subr.mxu0 0.0
        %1447 = vmatpush2.xpose.msra.mxu0 0.0
        %1448 = vmatprep.subr.mxu0 0.0
        %1449 = vmatpush2.xpose.msra.mxu0 0.0
        %1450 = vmatprep.subr.mxu0 0.0
        %1451 = vmatpush2.xpose.msra.mxu0 0.0
        %1452 = vmatprep.subr.mxu0 0.0
        %1453 = vmatpush2.xpose.msra.mxu0 0.0
        %1454 = vmatprep.subr.mxu0 0.0
        %1455 = vmatpush2.xpose.msra.mxu0 0.0
        %1456 = vmatprep.subr.mxu0 0.0
        %1457 = vmatpush2.xpose.msra.mxu0 0.0
        %1458 = vmatprep.subr.mxu0 0.0
        %1459 = vmatpush2.xpose.msra.mxu0 0.0
        %1460 = vmatprep.subr.mxu0 0.0
        %1461 = vmatpush2.xpose.msra.mxu0 0.0
        %1462 = vmatprep.subr.mxu0 0.0
        %1463 = vmatpush2.xpose.msra.mxu0 0.0
        %1464 = vmatprep.subr.mxu0 0.0
        %1465 = vmatpush2.xpose.msra.mxu0 0.0
        %1466 = vmatprep.subr.mxu0 0.0
        %1467 = vmatpush2.xpose.msra.mxu0 0.0
        %1468 = vmatprep.subr.mxu0 0.0
        %1469 = vmatpush2.xpose.msra.mxu0 0.0
        %1470 = vmatprep.subr.mxu0 0.0
        %1471 = vmatpush2.xpose.msra.mxu0 0.0
        %1472 = vmatprep.subr.mxu0 0.0
        %1473 = vmatpush2.xpose.msra.mxu0 0.0
        %1474 = vmatprep.mubr.f32.mxu0 0.0
        %1475 = vmatmul.mubr.f32.gmra.mxu0 %v1405
        %v1476 = vpop.f32.mrf.mxu0
        %v1477 = vadd.f32 0.0, %v1476
        %v1478 = vpop.f32.mrf.mxu0
        %1479 = vdwg.mxu0
        %v1481 = vsel %vm1275, %v1326, 0
        %v1484 = vsel %vm1275, %v1322, 0
        %1486 = vmatprep.subr.mxu0 0.0
        %1487 = vmatpush1.xpose.msra.mxu0 0.0
        %1488 = vmatprep.subr.mxu0 0.0
        %1489 = vmatpush1.xpose.msra.mxu0 0.0
        %1490 = vmatprep.subr.mxu0 0.0
        %1491 = vmatpush1.xpose.msra.mxu0 0.0
        %1492 = vmatprep.subr.mxu0 0.0
        %1493 = vmatpush1.xpose.msra.mxu0 0.0
        %1494 = vmatprep.subr.mxu0 0.0
        %1495 = vmatpush1.xpose.msra.mxu0 0.0
        %1496 = vmatprep.subr.mxu0 0.0
        %1497 = vmatpush1.xpose.msra.mxu0 0.0
        %1498 = vmatprep.subr.mxu0 0.0
        %1499 = vmatpush1.xpose.msra.mxu0 0.0
        %1500 = vmatprep.subr.mxu0 0.0
        %1501 = vmatpush1.xpose.msra.mxu0 0.0
        %1502 = vmatprep.subr.mxu0 0.0
        %1503 = vmatpush1.xpose.msra.mxu0 0.0
        %1504 = vmatprep.subr.mxu0 0.0
        %1505 = vmatpush1.xpose.msra.mxu0 0.0
        %1506 = vmatprep.subr.mxu0 0.0
        %1507 = vmatpush1.xpose.msra.mxu0 0.0
        %1508 = vmatprep.subr.mxu0 0.0
        %1509 = vmatpush1.xpose.msra.mxu0 0.0
        %1510 = vmatprep.subr.mxu0 0.0
        %1511 = vmatpush1.xpose.msra.mxu0 0.0
        %1512 = vmatprep.subr.mxu0 0.0
        %1513 = vmatpush1.xpose.msra.mxu0 0.0
        %1514 = vmatprep.subr.mxu0 0.0
        %1515 = vmatpush1.xpose.msra.mxu0 0.0
        %1516 = vmatprep.subr.mxu0 0.0
        %1517 = vmatpush1.xpose.msra.mxu0 %v1484
        %1518 = vmatprep.subr.mxu0 0.0
        %1519 = vmatpush2.xpose.msra.mxu0 0.0
        %1520 = vmatprep.subr.mxu0 0.0
        %1521 = vmatpush2.xpose.msra.mxu0 0.0
        %1522 = vmatprep.subr.mxu0 0.0
        %1523 = vmatpush2.xpose.msra.mxu0 0.0
        %1524 = vmatprep.subr.mxu0 0.0
        %1525 = vmatpush2.xpose.msra.mxu0 0.0
        %1526 = vmatprep.subr.mxu0 0.0
        %1527 = vmatpush2.xpose.msra.mxu0 0.0
        %1528 = vmatprep.subr.mxu0 0.0
        %1529 = vmatpush2.xpose.msra.mxu0 0.0
        %1530 = vmatprep.subr.mxu0 0.0
        %1531 = vmatpush2.xpose.msra.mxu0 0.0
        %1532 = vmatprep.subr.mxu0 0.0
        %1533 = vmatpush2.xpose.msra.mxu0 0.0
        %1534 = vmatprep.subr.mxu0 0.0
        %1535 = vmatpush2.xpose.msra.mxu0 0.0
        %1536 = vmatprep.subr.mxu0 0.0
        %1537 = vmatpush2.xpose.msra.mxu0 0.0
        %1538 = vmatprep.subr.mxu0 0.0
        %1539 = vmatpush2.xpose.msra.mxu0 0.0
        %1540 = vmatprep.subr.mxu0 0.0
        %1541 = vmatpush2.xpose.msra.mxu0 0.0
        %1542 = vmatprep.subr.mxu0 0.0
        %1543 = vmatpush2.xpose.msra.mxu0 0.0
        %1544 = vmatprep.subr.mxu0 0.0
        %1545 = vmatpush2.xpose.msra.mxu0 0.0
        %1546 = vmatprep.subr.mxu0 0.0
        %1547 = vmatpush2.xpose.msra.mxu0 0.0
        %1548 = vmatprep.subr.mxu0 0.0
        %1549 = vmatpush2.xpose.msra.mxu0 0.0
        %1550 = vmatprep.mubr.f32.mxu0 0.0
        %1551 = vmatmul.mubr.f32.gmra.mxu0 %v1481
        %v1552 = vpop.f32.mrf.mxu0
        %v1553 = vadd.f32 0.0, %v1552
        %v1554 = vpop.f32.mrf.mxu0
        %1555 = vdwg.mxu0
        %v1557 = vsel %vm1275, %v1327, 0
        %v1560 = vsel %vm1275, %v1323, 0
        %1562 = vmatprep.subr.mxu0 0.0
        %1563 = vmatpush1.xpose.msra.mxu0 0.0
        %1564 = vmatprep.subr.mxu0 0.0
        %1565 = vmatpush1.xpose.msra.mxu0 0.0
        %1566 = vmatprep.subr.mxu0 0.0
        %1567 = vmatpush1.xpose.msra.mxu0 0.0
        %1568 = vmatprep.subr.mxu0 0.0
        %1569 = vmatpush1.xpose.msra.mxu0 0.0
        %1570 = vmatprep.subr.mxu0 0.0
        %1571 = vmatpush1.xpose.msra.mxu0 0.0
        %1572 = vmatprep.subr.mxu0 0.0
        %1573 = vmatpush1.xpose.msra.mxu0 0.0
        %1574 = vmatprep.subr.mxu0 0.0
        %1575 = vmatpush1.xpose.msra.mxu0 0.0
        %1576 = vmatprep.subr.mxu0 0.0
        %1577 = vmatpush1.xpose.msra.mxu0 0.0
        %1578 = vmatprep.subr.mxu0 0.0
        %1579 = vmatpush1.xpose.msra.mxu0 0.0
        %1580 = vmatprep.subr.mxu0 0.0
        %1581 = vmatpush1.xpose.msra.mxu0 0.0
        %1582 = vmatprep.subr.mxu0 0.0
        %1583 = vmatpush1.xpose.msra.mxu0 0.0
        %1584 = vmatprep.subr.mxu0 0.0
        %1585 = vmatpush1.xpose.msra.mxu0 0.0
        %1586 = vmatprep.subr.mxu0 0.0
        %1587 = vmatpush1.xpose.msra.mxu0 0.0
        %1588 = vmatprep.subr.mxu0 0.0
        %1589 = vmatpush1.xpose.msra.mxu0 0.0
        %1590 = vmatprep.subr.mxu0 0.0
        %1591 = vmatpush1.xpose.msra.mxu0 0.0
        %1592 = vmatprep.subr.mxu0 0.0
        %1593 = vmatpush1.xpose.msra.mxu0 %v1560
        %1594 = vmatprep.subr.mxu0 0.0
        %1595 = vmatpush2.xpose.msra.mxu0 0.0
        %1596 = vmatprep.subr.mxu0 0.0
        %1597 = vmatpush2.xpose.msra.mxu0 0.0
        %1598 = vmatprep.subr.mxu0 0.0
        %1599 = vmatpush2.xpose.msra.mxu0 0.0
        %1600 = vmatprep.subr.mxu0 0.0
        %1601 = vmatpush2.xpose.msra.mxu0 0.0
        %1602 = vmatprep.subr.mxu0 0.0
        %1603 = vmatpush2.xpose.msra.mxu0 0.0
        %1604 = vmatprep.subr.mxu0 0.0
        %1605 = vmatpush2.xpose.msra.mxu0 0.0
        %1606 = vmatprep.subr.mxu0 0.0
        %1607 = vmatpush2.xpose.msra.mxu0 0.0
        %1608 = vmatprep.subr.mxu0 0.0
        %1609 = vmatpush2.xpose.msra.mxu0 0.0
        %1610 = vmatprep.subr.mxu0 0.0
        %1611 = vmatpush2.xpose.msra.mxu0 0.0
        %1612 = vmatprep.subr.mxu0 0.0
        %1613 = vmatpush2.xpose.msra.mxu0 0.0
        %1614 = vmatprep.subr.mxu0 0.0
        %1615 = vmatpush2.xpose.msra.mxu0 0.0
        %1616 = vmatprep.subr.mxu0 0.0
        %1617 = vmatpush2.xpose.msra.mxu0 0.0
        %1618 = vmatprep.subr.mxu0 0.0
        %1619 = vmatpush2.xpose.msra.mxu0 0.0
        %1620 = vmatprep.subr.mxu0 0.0
        %1621 = vmatpush2.xpose.msra.mxu0 0.0
        %1622 = vmatprep.subr.mxu0 0.0
        %1623 = vmatpush2.xpose.msra.mxu0 0.0
        %1624 = vmatprep.subr.mxu0 0.0
        %1625 = vmatpush2.xpose.msra.mxu0 0.0
        %1626 = vmatprep.mubr.f32.mxu0 0.0
        %1627 = vmatmul.mubr.f32.gmra.mxu0 %v1557
        %v1628 = vpop.f32.mrf.mxu0
        %v1629 = vadd.f32 0.0, %v1628
        %v1630 = vpop.f32.mrf.mxu0
        %1631 = vdwg.mxu0
        %v1632 = vld [vmem:[%s6] sm:$0xff]
        %v1633 = vld [vmem:[%s6 + $0x8] sm:$0xff]
        %v1634 = vld [vmem:[%s6 + $0x10] sm:$0xff]
        %v1635 = vld [vmem:[%s6 + $0x18] sm:$0xff]
        %v1636 = vlaneseq
        %v1637 = vshrl.u32 %v1636, 7
        %v1638 = vsub.s32 0, %v1637
        %v1639 = vrot.slane %v417, %v1638
        %1640 = vxpose.xlu0.b32.start [1/16] %v1401, 128
        %1641 = vxpose.xlu0.b32.cont [2/16] %v1477, 128
        %1642 = vxpose.xlu0.b32.cont [3/16] %v1553, 128
        %1643 = vxpose.xlu0.b32.cont [4/16] %v1629, 128
        %1644 = vxpose.xlu0.b32.cont [5/16] 0.0, 128
        %1645 = vxpose.xlu0.b32.cont [6/16] 0.0, 128
        %1646 = vxpose.xlu0.b32.cont [7/16] 0.0, 128
        %1647 = vxpose.xlu0.b32.cont [8/16] 0.0, 128
        %1648 = vxpose.xlu0.b32.cont [9/16] 0.0, 128
        %1649 = vxpose.xlu0.b32.cont [10/16] 0.0, 128
        %1650 = vxpose.xlu0.b32.cont [11/16] 0.0, 128
        %1651 = vxpose.xlu0.b32.cont [12/16] 0.0, 128
        %1652 = vxpose.xlu0.b32.cont [13/16] 0.0, 128
        %1653 = vxpose.xlu0.b32.cont [14/16] 0.0, 128
        %1654 = vxpose.xlu0.b32.cont [15/16] 0.0, 128
        %1655 = vxpose.xlu0.b32.end [16/16] 0.0, 128
        %v1656 = vpop.trf.xlu0
        %v1657 = vpop.trf.xlu0
        %v1658 = vpop.trf.xlu0
        %v1659 = vpop.trf.xlu0
        %v1660 = vpop.trf.xlu0
        %v1661 = vpop.trf.xlu0
        %v1662 = vpop.trf.xlu0
        %v1663 = vpop.trf.xlu0
        %v1664 = vpop.trf.xlu0
        %v1665 = vpop.trf.xlu0
        %v1666 = vpop.trf.xlu0
        %v1667 = vpop.trf.xlu0
        %v1668 = vpop.trf.xlu0
        %v1669 = vpop.trf.xlu0
        %v1670 = vpop.trf.xlu0
        %v1671 = vpop.trf.xlu0
        %v1673 = vsel %vm683, %v1656, 0
        %1675 = vmatprep.subr.mxu0 0.0
        %1676 = vmatpush1.msra.mxu0 0.0
        %1677 = vmatprep.subr.mxu0 0.0
        %1678 = vmatpush1.msra.mxu0 0.0
        %1679 = vmatprep.subr.mxu0 0.0
        %1680 = vmatpush1.msra.mxu0 0.0
        %1681 = vmatprep.subr.mxu0 0.0
        %1682 = vmatpush1.msra.mxu0 0.0
        %1683 = vmatprep.subr.mxu0 0.0
        %1684 = vmatpush1.msra.mxu0 0.0
        %1685 = vmatprep.subr.mxu0 0.0
        %1686 = vmatpush1.msra.mxu0 0.0
        %1687 = vmatprep.subr.mxu0 0.0
        %1688 = vmatpush1.msra.mxu0 0.0
        %1689 = vmatprep.subr.mxu0 0.0
        %1690 = vmatpush1.msra.mxu0 0.0
        %1691 = vmatprep.subr.mxu0 0.0
        %1692 = vmatpush1.msra.mxu0 0.0
        %1693 = vmatprep.subr.mxu0 0.0
        %1694 = vmatpush1.msra.mxu0 0.0
        %1695 = vmatprep.subr.mxu0 0.0
        %1696 = vmatpush1.msra.mxu0 0.0
        %1697 = vmatprep.subr.mxu0 0.0
        %1698 = vmatpush1.msra.mxu0 0.0
        %1699 = vmatprep.subr.mxu0 0.0
        %1700 = vmatpush1.msra.mxu0 %v1635
        %1701 = vmatprep.subr.mxu0 0.0
        %1702 = vmatpush1.msra.mxu0 %v1634
        %1703 = vmatprep.subr.mxu0 0.0
        %1704 = vmatpush1.msra.mxu0 %v1633
        %1705 = vmatprep.subr.mxu0 0.0
        %1706 = vmatpush1.msra.mxu0 %v1632
        %1707 = vmatprep.subr.mxu0 0.0
        %1708 = vmatpush2.msra.mxu0 0.0
        %1709 = vmatprep.subr.mxu0 0.0
        %1710 = vmatpush2.msra.mxu0 0.0
        %1711 = vmatprep.subr.mxu0 0.0
        %1712 = vmatpush2.msra.mxu0 0.0
        %1713 = vmatprep.subr.mxu0 0.0
        %1714 = vmatpush2.msra.mxu0 0.0
        %1715 = vmatprep.subr.mxu0 0.0
        %1716 = vmatpush2.msra.mxu0 0.0
        %1717 = vmatprep.subr.mxu0 0.0
        %1718 = vmatpush2.msra.mxu0 0.0
        %1719 = vmatprep.subr.mxu0 0.0
        %1720 = vmatpush2.msra.mxu0 0.0
        %1721 = vmatprep.subr.mxu0 0.0
        %1722 = vmatpush2.msra.mxu0 0.0
        %1723 = vmatprep.subr.mxu0 0.0
        %1724 = vmatpush2.msra.mxu0 0.0
        %1725 = vmatprep.subr.mxu0 0.0
        %1726 = vmatpush2.msra.mxu0 0.0
        %1727 = vmatprep.subr.mxu0 0.0
        %1728 = vmatpush2.msra.mxu0 0.0
        %1729 = vmatprep.subr.mxu0 0.0
        %1730 = vmatpush2.msra.mxu0 0.0
        %1731 = vmatprep.subr.mxu0 0.0
        %1732 = vmatpush2.msra.mxu0 0.0
        %1733 = vmatprep.subr.mxu0 0.0
        %1734 = vmatpush2.msra.mxu0 0.0
        %1735 = vmatprep.subr.mxu0 0.0
        %1736 = vmatpush2.msra.mxu0 0.0
        %1737 = vmatprep.subr.mxu0 0.0
        %1738 = vmatpush2.msra.mxu0 0.0
        %1739 = vmatprep.mubr.f32.mxu0 0.0
        %1740 = vmatmul.mubr.f32.gmra.mxu0 %v1673
        %v1741 = vpop.f32.mrf.mxu0
        %v1742 = vadd.f32 %v1639, %v1741
        %v1743 = vpop.f32.mrf.mxu0
        %1744 = vdwg.mxu0
        %v1745 = vadd.f32 %v682, %v1742
        %v1746 = vsel %vm683, %v1745, 0.0
        %1747 = vadd.xlane.f32.xlu0 %v1746
        %v1748 = vpop.xlane.xlu0 %1747
        %v1749 = vmul.f32 %v1748, 0.03125
        %v1750 = vsub.f32 %v1745, %v1749
        %v1751 = vmul.f32 %v1750, %v1750
        %v1752 = vsel %vm683, %v1751, 0.0
        %1753 = vadd.xlane.f32.xlu0 %v1752
        %v1754 = vpop.xlane.xlu0 %1753
        %v1755 = vmul.f32 %v1754, 0.032258064
        %v1756 = vrsqrt.pop %v1755
        %v1757 = vmul.f32 %v1755, %v1756
        %vm1758 = vcmp.eq.f32.partialorder %v1755, inf
        %v1759 = vsel %vm1758, %v1755, %v1757
        %vm1760 = vcmp.eq.f32.partialorder %v1755, 0.0
        %v1761 = vand.u32 %v1755, 2147483648
        %v1762 = vsel %vm1760, %v1761, %v1759
        %v1763 = vadd.f32 %v1762, 1e-06
        %v1764 = vrcp.pop %v1763
        %v1765 = vmul.f32 1.0, %v1764
        %v1766 = vmul.f32 %v1750, %v1765
        %v1767 = vlaneseq
        %v1768 = vshrl.u32 %v1767, 7
        %v1769 = vsub.s32 0, %v1768
        %v1770 = vrot.slane %v415, %v1769
        %v1771 = vmul.f32 %v1770, %v1766
        %v1772 = vlaneseq
        %v1773 = vshrl.u32 %v1772, 7
        %v1774 = vsub.s32 0, %v1773
        %v1775 = vrot.slane %v416, %v1774
        %v1776 = vadd.f32 %v1771, %v1775
        %v1777 = vld [vmem:[%s7] sm:$0xff]
        %v1778 = vld [vmem:[%s7 + $0x8] sm:$0xff]
        %v1779 = vld [vmem:[%s7 + $0x10] sm:$0xff]
        %v1780 = vld [vmem:[%s7 + $0x18] sm:$0xff]
        %v1781 = vld [vmem:[%s8] sm:$0x1]
        %v1783 = vlaneseq
        %v1784 = vshrl.u32 %v1783, 7
        %v1785 = vsub.s32 0, %v1784
        %v1786 = vrot.slane %v1781, %v1785
        %v1789 = vsel %vm683, %v1776, 0
        %1791 = vmatprep.subr.mxu0 0.0
        %1792 = vmatpush1.msra.mxu0 0.0
        %1793 = vmatprep.subr.mxu0 0.0
        %1794 = vmatpush1.msra.mxu0 0.0
        %1795 = vmatprep.subr.mxu0 0.0
        %1796 = vmatpush1.msra.mxu0 0.0
        %1797 = vmatprep.subr.mxu0 0.0
        %1798 = vmatpush1.msra.mxu0 0.0
        %1799 = vmatprep.subr.mxu0 0.0
        %1800 = vmatpush1.msra.mxu0 0.0
        %1801 = vmatprep.subr.mxu0 0.0
        %1802 = vmatpush1.msra.mxu0 0.0
        %1803 = vmatprep.subr.mxu0 0.0
        %1804 = vmatpush1.msra.mxu0 0.0
        %1805 = vmatprep.subr.mxu0 0.0
        %1806 = vmatpush1.msra.mxu0 0.0
        %1807 = vmatprep.subr.mxu0 0.0
        %1808 = vmatpush1.msra.mxu0 0.0
        %1809 = vmatprep.subr.mxu0 0.0
        %1810 = vmatpush1.msra.mxu0 0.0
        %1811 = vmatprep.subr.mxu0 0.0
        %1812 = vmatpush1.msra.mxu0 0.0
        %1813 = vmatprep.subr.mxu0 0.0
        %1814 = vmatpush1.msra.mxu0 0.0
        %1815 = vmatprep.subr.mxu0 0.0
        %1816 = vmatpush1.msra.mxu0 %v1780
        %1817 = vmatprep.subr.mxu0 0.0
        %1818 = vmatpush1.msra.mxu0 %v1779
        %1819 = vmatprep.subr.mxu0 0.0
        %1820 = vmatpush1.msra.mxu0 %v1778
        %1821 = vmatprep.subr.mxu0 0.0
        %1822 = vmatpush1.msra.mxu0 %v1777
        %1823 = vmatprep.subr.mxu0 0.0
        %1824 = vmatpush2.msra.mxu0 0.0
        %1825 = vmatprep.subr.mxu0 0.0
        %1826 = vmatpush2.msra.mxu0 0.0
        %1827 = vmatprep.subr.mxu0 0.0
        %1828 = vmatpush2.msra.mxu0 0.0
        %1829 = vmatprep.subr.mxu0 0.0
        %1830 = vmatpush2.msra.mxu0 0.0
        %1831 = vmatprep.subr.mxu0 0.0
        %1832 = vmatpush2.msra.mxu0 0.0
        %1833 = vmatprep.subr.mxu0 0.0
        %1834 = vmatpush2.msra.mxu0 0.0
        %1835 = vmatprep.subr.mxu0 0.0
        %1836 = vmatpush2.msra.mxu0 0.0
        %1837 = vmatprep.subr.mxu0 0.0
        %1838 = vmatpush2.msra.mxu0 0.0
        %1839 = vmatprep.subr.mxu0 0.0
        %1840 = vmatpush2.msra.mxu0 0.0
        %1841 = vmatprep.subr.mxu0 0.0
        %1842 = vmatpush2.msra.mxu0 0.0
        %1843 = vmatprep.subr.mxu0 0.0
        %1844 = vmatpush2.msra.mxu0 0.0
        %1845 = vmatprep.subr.mxu0 0.0
        %1846 = vmatpush2.msra.mxu0 0.0
        %1847 = vmatprep.subr.mxu0 0.0
        %1848 = vmatpush2.msra.mxu0 0.0
        %1849 = vmatprep.subr.mxu0 0.0
        %1850 = vmatpush2.msra.mxu0 0.0
        %1851 = vmatprep.subr.mxu0 0.0
        %1852 = vmatpush2.msra.mxu0 0.0
        %1853 = vmatprep.subr.mxu0 0.0
        %1854 = vmatpush2.msra.mxu0 0.0
        %1855 = vmatprep.mubr.f32.mxu0 0.0
        %1856 = vmatmul.mubr.f32.gmra.mxu0 %v1789
        %v1857 = vpop.f32.mrf.mxu0
        %v1858 = vadd.f32 %v1786, %v1857
        %v1859 = vpop.f32.mrf.mxu0
        %1860 = vdwg.mxu0
        %v1861 = vmul.f32 %v1858, 0.5
        %v1862 = vmul.f32 %v1858, %v1858
        %v1863 = vmul.f32 %v1862, %v1858
        %v1864 = vmul.f32 %v1863, 0.044715
        %v1865 = vadd.f32 %v1858, %v1864
        %v1866 = vmul.f32 %v1865, 0.7978846
        %v1867 = vtanh.pop %v1866
        %v1868 = vadd.f32 %v1867, 1.0
        %v1869 = vmul.f32 %v1861, %v1868
        %v1870 = vld [vmem:[%s9] sm:$0xff]
        %v1871 = vld [vmem:[%s9 + $0x8] sm:$0xff]
        %v1872 = vld [vmem:[%s9 + $0x10] sm:$0xff]
        %v1873 = vld [vmem:[%s9 + $0x18] sm:$0xff]
        %v1874 = vld [vmem:[%s9 + $0x20] sm:$0xff]
        %v1875 = vld [vmem:[%s9 + $0x28] sm:$0xff]
        %v1876 = vld [vmem:[%s9 + $0x30] sm:$0xff]
        %v1877 = vld [vmem:[%s9 + $0x38] sm:$0xff]
        %v1878 = vld [vmem:[%s9 + $0x40] sm:$0xff]
        %v1879 = vld [vmem:[%s9 + $0x48] sm:$0xff]
        %v1880 = vld [vmem:[%s9 + $0x50] sm:$0xff]
        %v1881 = vld [vmem:[%s9 + $0x58] sm:$0xff]
        %v1882 = vld [vmem:[%s9 + $0x60] sm:$0xff]
        %v1883 = vld [vmem:[%s9 + $0x68] sm:$0xff]
        %v1884 = vld [vmem:[%s9 + $0x70] sm:$0xff]
        %v1885 = vld [vmem:[%s9 + $0x78] sm:$0xff]
        %v1886 = vlaneseq
        %v1887 = vshrl.u32 %v1886, 7
        %v1888 = vsub.s32 0, %v1887
        %v1889 = vrot.slane %v418, %v1888
        %1890 = vmatprep.subr.mxu0 0.0
        %1891 = vmatpush1.msra.mxu0 %v1885
        %1892 = vmatprep.subr.mxu0 0.0
        %1893 = vmatpush1.msra.mxu0 %v1884
        %1894 = vmatprep.subr.mxu0 0.0
        %1895 = vmatpush1.msra.mxu0 %v1883
        %1896 = vmatprep.subr.mxu0 0.0
        %1897 = vmatpush1.msra.mxu0 %v1882
        %1898 = vmatprep.subr.mxu0 0.0
        %1899 = vmatpush1.msra.mxu0 %v1881
        %1900 = vmatprep.subr.mxu0 0.0
        %1901 = vmatpush1.msra.mxu0 %v1880
        %1902 = vmatprep.subr.mxu0 0.0
        %1903 = vmatpush1.msra.mxu0 %v1879
        %1904 = vmatprep.subr.mxu0 0.0
        %1905 = vmatpush1.msra.mxu0 %v1878
        %1906 = vmatprep.subr.mxu0 0.0
        %1907 = vmatpush1.msra.mxu0 %v1877
        %1908 = vmatprep.subr.mxu0 0.0
        %1909 = vmatpush1.msra.mxu0 %v1876
        %1910 = vmatprep.subr.mxu0 0.0
        %1911 = vmatpush1.msra.mxu0 %v1875
        %1912 = vmatprep.subr.mxu0 0.0
        %1913 = vmatpush1.msra.mxu0 %v1874
        %1914 = vmatprep.subr.mxu0 0.0
        %1915 = vmatpush1.msra.mxu0 %v1873
        %1916 = vmatprep.subr.mxu0 0.0
        %1917 = vmatpush1.msra.mxu0 %v1872
        %1918 = vmatprep.subr.mxu0 0.0
        %1919 = vmatpush1.msra.mxu0 %v1871
        %1920 = vmatprep.subr.mxu0 0.0
        %1921 = vmatpush1.msra.mxu0 %v1870
        %1922 = vmatprep.subr.mxu0 0.0
        %1923 = vmatpush2.msra.mxu0 0.0
        %1924 = vmatprep.subr.mxu0 0.0
        %1925 = vmatpush2.msra.mxu0 0.0
        %1926 = vmatprep.subr.mxu0 0.0
        %1927 = vmatpush2.msra.mxu0 0.0
        %1928 = vmatprep.subr.mxu0 0.0
        %1929 = vmatpush2.msra.mxu0 0.0
        %1930 = vmatprep.subr.mxu0 0.0
        %1931 = vmatpush2.msra.mxu0 0.0
        %1932 = vmatprep.subr.mxu0 0.0
        %1933 = vmatpush2.msra.mxu0 0.0
        %1934 = vmatprep.subr.mxu0 0.0
        %1935 = vmatpush2.msra.mxu0 0.0
        %1936 = vmatprep.subr.mxu0 0.0
        %1937 = vmatpush2.msra.mxu0 0.0
        %1938 = vmatprep.subr.mxu0 0.0
        %1939 = vmatpush2.msra.mxu0 0.0
        %1940 = vmatprep.subr.mxu0 0.0
        %1941 = vmatpush2.msra.mxu0 0.0
        %1942 = vmatprep.subr.mxu0 0.0
        %1943 = vmatpush2.msra.mxu0 0.0
        %1944 = vmatprep.subr.mxu0 0.0
        %1945 = vmatpush2.msra.mxu0 0.0
        %1946 = vmatprep.subr.mxu0 0.0
        %1947 = vmatpush2.msra.mxu0 0.0
        %1948 = vmatprep.subr.mxu0 0.0
        %1949 = vmatpush2.msra.mxu0 0.0
        %1950 = vmatprep.subr.mxu0 0.0
        %1951 = vmatpush2.msra.mxu0 0.0
        %1952 = vmatprep.subr.mxu0 0.0
        %1953 = vmatpush2.msra.mxu0 0.0
        %1954 = vmatprep.mubr.f32.mxu0 0.0
        %1955 = vmatmul.mubr.f32.gmra.mxu0 %v1869
        %v1956 = vpop.f32.mrf.mxu0
        %v1957 = vadd.f32 %v1889, %v1956
        %v1958 = vpop.f32.mrf.mxu0
        %1959 = vdwg.mxu0
        %v1960 = vadd.f32 %v1745, %v1957
        %1961 = vst.msk [vmem:[%s404] sm:$0xff] %vm683, %v1960
        %s1962 = sand.u32 %s288, 1
        %s1963 = scalar_lea.sflag [#allocation5], %s1962
        %s1964 = sand.u32 %s288, 1
        %s1965 = smul.addr %s1964, 8
        %s1966 = scalar_lea.vmem [#allocation4], %s1965
        // Predicated region
        $region69: #{tpu_custom_call.1} parent=63 // pred_check
          %p1967 = pneg %p298
        $region70: #{tpu_custom_call.1} parent=63 // pred_check_branch
          %1969 = sbr.rel (%p1967) target = $region72
        $region71: #{tpu_custom_call.1} parent=63 // pred_region
          %s1971 = ssub.s32 128, 128
          %1972 = vsyncadd %s1963, %s1971
          %s1973 = smul.addr %s29, 2
          %s1974 = sadd.s32 %s30, %s1973
          %s1975 = smul.addr %s1974, 128
          %s1976 = scalar_lea.hbm %s11, %s1975
          %s1978 = sshll.u32 %s1966, 4
          %s1979 = int_to_ptr.vmem [resolvable:$true] %s1978
          %1981 = dma.vmem_to_hbm [thread:$0]  %s1979, 128, %s1976, %s1963
        $region72: #{tpu_custom_call.1} parent=63 // pred_fallthru
          _
      $region64: #{tpu_custom_call.1} parent=5 // pred_fallthru
        _
      %p1982 = scmp.le.s32.totalorder 2, %s20
      // Predicated region
      $region73: #{tpu_custom_call.1} parent=5 // pred_check
        %p1983 = pneg %p1982
      $region74: #{tpu_custom_call.1} parent=5 // pred_check_branch
        %1985 = sbr.rel (%p1983) target = $region76
      $region75: #{tpu_custom_call.1} parent=5 // pred_region
        %s1986 = ssub.s32 %s20, 2
        // Predicated region
        $region77: #{tpu_custom_call.1} parent=75 // pred_check
          %p1987 = pneg %p304
        $region78: #{tpu_custom_call.1} parent=75 // pred_check_branch
          %1989 = sbr.rel (%p1987) target = $region80
        $region79: #{tpu_custom_call.1} parent=75 // pred_region
          %s1990 = sand.u32 %s289, 1
          %s1991 = scalar_lea.sflag [#allocation5], %s1990
          %s1992 = sand.u32 %s289, 1
          %s1993 = smul.addr %s1992, 8
          %s1994 = scalar_lea.vmem [#allocation4], %s1993
          %1995 = dma.done %s1991, 128
        $region80: #{tpu_custom_call.1} parent=75 // pred_fallthru
          _
      $region76: #{tpu_custom_call.1} parent=5 // pred_fallthru
        _
    $region6: #{tpu_custom_call.1} parent=1 // loop_footer
      %s24 = sadd.s32 1, %s20
    $region7: #{tpu_custom_call.1} parent=1 // loop_footer_branch
      %19 = sbr.rel target = $region3
    $region8: #{tpu_custom_call.1} parent=1 // loop_exit
      _
    %1996 = vsyncpa [#allocation5], 1
    %s1997 = scalar_lea.sflag [#allocation5], 1
    %1998 = vsyncpa %s1997, 1

// kernel: tpu_custom_call.1
$region0: #{tpu_custom_call.1}
  #allocation0 [shape = 'u32[]', space=smem, size = 0x4, offset = 0x4, fixed_abs, tag = 'smem constant byte address 0x4 - core index']
  #allocation1 [shape = 'u32[144,128]{1,0:T(1,128)}', space=vmem, size = 0x12000, scoped, tag = 'internal scratch']
  #allocation2 [shape = 'f32[4,8,16]{2,1,0:T(8,128)}', space=vmem, size = 0x4000, scoped, tag = 'scratch operand']
  #allocation3 [shape = 'f32[4,8,16]{2,1,0:T(8,128)}', space=vmem, size = 0x4000, scoped, tag = 'scratch operand']
  %s0 = inlined_call_operand.vmem [shape: f32[2,16,32], index: 0, kind: input, shape index: {}]
  %s1 = inlined_call_operand.vmem [shape: f32[2,1,16], index: 1, kind: input, shape index: {}]
  %s2 = inlined_call_operand.vmem [shape: f32[32,32], index: 2, kind: input, shape index: {}]
  %s3 = inlined_call_operand.vmem [shape: f32[32,1], index: 3, kind: input, shape index: {}]
  %s4 = inlined_call_operand.vmem [shape: f32[64,32], index: 4, kind: input, shape index: {}]
  %s5 = inlined_call_operand.vmem [shape: f32[64,1], index: 5, kind: input, shape index: {}]
  %s6 = inlined_call_operand.vmem [shape: f32[32,32], index: 6, kind: input, shape index: {}]
  %s7 = inlined_call_operand.vmem [shape: f32[32,128], index: 7, kind: input, shape index: {}]
  %s8 = inlined_call_operand.vmem [shape: f32[1,128], index: 8, kind: input, shape index: {}]
  %s9 = inlined_call_operand.vmem [shape: f32[128,32], index: 9, kind: input, shape index: {}]
  %s10 = inlined_call_operand.vmem [shape: f32[6,32], index: 10, kind: input, shape index: {}]
  %s11 = inlined_call_operand.hbm [shape: f32[2,16,32], index: 11, kind: output, shape index: {}]
  %s12 = sld [smem:[#allocation0]]
  $region81: #{tpu_custom_call.1} parent=0
    _
  %s14 = ssub.s32 1, %s12
  %s15 = scalar_select 0, %s14, %s12
  $region1: #{tpu_custom_call.1} parent=0
    #allocation4 [shape = 'u8[8192]{0}', space=vmem, size = 0x2000, scoped, tag = 'output window, operand 0']
    #allocation5 [shape = 's32[2]{0}', space=sflag, size = 0x8, scoped, tag = 'scoped memory for tpu_custom_call.1']
    %16 = vsyncpa [#allocation5], 0
    %s17 = scalar_lea.sflag [#allocation5], 1
    %18 = vsyncpa %s17, 0
    loop: start=0, step=1, limit=6
    $region2: #{tpu_custom_call.1} parent=1 // loop_pre_header
      _
    $region3: #{tpu_custom_call.1} parent=1 // loop_header
      %s20 = sphi 0, %s24
      %p21 = scmp.ge.s32.totalorder %s20, 6
      %s27 = sphi 0, %s39
      %s28 = sphi 0, %s35
      %s29 = sphi 0, %s27
      %s30 = sphi 0, %s28
      %s31 = sphi 0, %s29
      %s32 = sphi 0, %s30
      %s42 = sphi 0, %s44
      %s45 = sphi 0, %s42
      %s46 = sphi 0, %s45
      %s62 = sphi 0, %s46
      %s68 = sphi 0, %s70
      %s71 = sphi 0, %s68
      %s72 = sphi 0, %s71
      %s88 = sphi 0, %s72
      %s92 = sphi 0, %s92
      %s94 = sphi 0, %s92
      %s95 = sphi 0, %s94
      %s109 = sphi 0, %s95
      %s113 = sphi 0, %s113
      %s115 = sphi 0, %s113
      %s116 = sphi 0, %s115
      %s130 = sphi 0, %s116
      %s134 = sphi 0, %s134
      %s136 = sphi 0, %s134
      %s137 = sphi 0, %s136
      %s151 = sphi 0, %s137
      %s155 = sphi 0, %s155
      %s157 = sphi 0, %s155
      %s158 = sphi 0, %s157
      %s172 = sphi 0, %s158
      %s176 = sphi 0, %s176
      %s178 = sphi 0, %s176
      %s179 = sphi 0, %s178
      %s193 = sphi 0, %s179
      %s197 = sphi 0, %s197
      %s199 = sphi 0, %s197
      %s200 = sphi 0, %s199
      %s214 = sphi 0, %s200
      %s218 = sphi 0, %s218
      %s220 = sphi 0, %s218
      %s221 = sphi 0, %s220
      %s235 = sphi 0, %s221
      %s239 = sphi 0, %s239
      %s241 = sphi 0, %s239
      %s242 = sphi 0, %s241
      %s256 = sphi 0, %s242
      %s260 = sphi 0, %s260
      %s262 = sphi 0, %s260
      %s263 = sphi 0, %s262
      %s277 = sphi 0, %s263
      %s285 = sphi 0, %s287
      %s288 = sphi 0, %s285
      %s289 = sphi 0, %s288
      %s305 = sphi 0, %s289
    $region4: #{tpu_custom_call.1} parent=1 // loop_header_branch
      %23 = sbr.rel (%p21) target = $region8
    $region5: #{tpu_custom_call.1} parent=1 // loop_body
      %s25 = ssub.s32 %s20, 1
      %s26 = ssub.s32 %s20, 2
      %s33 = sadd.s32 1, %s28
      %p34 = scmp.ge.s32.totalorder %s33, 2
      %s35 = scalar_select %p34, 0, %s33
      %s36 = sadd.s32 1, %s27
      %s37 = scalar_select %p34, %s36, %s27
      %p38 = scmp.ge.s32.totalorder %s37, 2
      %s39 = scalar_select %p38, 0, %s37
      %s40 = ssub.s32 %s27, %s39
      %p41 = scmp.eq.s32.totalorder %s40, 0
      %s43 = sadd.s32 %s42, 1
      %s44 = scalar_select %p41, %s42, %s43
      %p47 = pneg %p41
      %p48 = scmp.eq.s32.totalorder %s20, 3
      %p49 = por %p47, %p48
      %p50 = scmp.ne.s32.totalorder %s42, %s45
      %p51 = scmp.eq.s32.totalorder %s20, 0
      %p52 = por %p50, %p51
      %p53 = scmp.ne.s32.totalorder %s42, %s45
      %p54 = scmp.eq.s32.totalorder %s25, 3
      %p55 = por %p53, %p54
      %p56 = scmp.ne.s32.totalorder %s45, %s46
      %p57 = scmp.eq.s32.totalorder %s25, 0
      %p58 = por %p56, %p57
      %p59 = scmp.ne.s32.totalorder %s45, %s46
      %p60 = scmp.eq.s32.totalorder %s26, 3
      %p61 = por %p59, %p60
      %p63 = scmp.ne.s32.totalorder %s46, %s62
      %p64 = scmp.eq.s32.totalorder %s26, 0
      %p65 = por %p63, %p64
      %s66 = ssub.s32 %s27, %s39
      %p67 = scmp.eq.s32.totalorder %s66, 0
      %s69 = sadd.s32 %s68, 1
      %s70 = scalar_select %p67, %s68, %s69
      %p73 = pneg %p67
      %p74 = scmp.eq.s32.totalorder %s20, 3
      %p75 = por %p73, %p74
      %p76 = scmp.ne.s32.totalorder %s68, %s71
      %p77 = scmp.eq.s32.totalorder %s20, 0
      %p78 = por %p76, %p77
      %p79 = scmp.ne.s32.totalorder %s68, %s71
      %p80 = scmp.eq.s32.totalorder %s25, 3
      %p81 = por %p79, %p80
      %p82 = scmp.ne.s32.totalorder %s71, %s72
      %p83 = scmp.eq.s32.totalorder %s25, 0
      %p84 = por %p82, %p83
      %p85 = scmp.ne.s32.totalorder %s71, %s72
      %p86 = scmp.eq.s32.totalorder %s26, 3
      %p87 = por %p85, %p86
      %p89 = scmp.ne.s32.totalorder %s72, %s88
      %p90 = scmp.eq.s32.totalorder %s26, 0
      %p91 = por %p89, %p90
      %s93 = sadd.s32 %s92, 1
      %p96 = scmp.eq.s32.totalorder %s20, 3
      %p97 = scmp.ne.s32.totalorder %s92, %s94
      %p98 = scmp.eq.s32.totalorder %s20, 0
      %p99 = por %p97, %p98
      %p100 = scmp.ne.s32.totalorder %s92, %s94
      %p101 = scmp.eq.s32.totalorder %s25, 3
      %p102 = por %p100, %p101
      %p103 = scmp.ne.s32.totalorder %s94, %s95
      %p104 = scmp.eq.s32.totalorder %s25, 0
      %p105 = por %p103, %p104
      %p106 = scmp.ne.s32.totalorder %s94, %s95
      %p107 = scmp.eq.s32.totalorder %s26, 3
      %p108 = por %p106, %p107
      %p110 = scmp.ne.s32.totalorder %s95, %s109
      %p111 = scmp.eq.s32.totalorder %s26, 0
      %p112 = por %p110, %p111
      %s114 = sadd.s32 %s113, 1
      %p117 = scmp.eq.s32.totalorder %s20, 3
      %p118 = scmp.ne.s32.totalorder %s113, %s115
      %p119 = scmp.eq.s32.totalorder %s20, 0
      %p120 = por %p118, %p119
      %p121 = scmp.ne.s32.totalorder %s113, %s115
      %p122 = scmp.eq.s32.totalorder %s25, 3
      %p123 = por %p121, %p122
      %p124 = scmp.ne.s32.totalorder %s115, %s116
      %p125 = scmp.eq.s32.totalorder %s25, 0
      %p126 = por %p124, %p125
      %p127 = scmp.ne.s32.totalorder %s115, %s116
      %p128 = scmp.eq.s32.totalorder %s26, 3
      %p129 = por %p127, %p128
      %p131 = scmp.ne.s32.totalorder %s116, %s130
      %p132 = scmp.eq.s32.totalorder %s26, 0
      %p133 = por %p131, %p132
      %s135 = sadd.s32 %s134, 1
      %p138 = scmp.eq.s32.totalorder %s20, 3
      %p139 = scmp.ne.s32.totalorder %s134, %s136
      %p140 = scmp.eq.s32.totalorder %s20, 0
      %p141 = por %p139, %p140
      %p142 = scmp.ne.s32.totalorder %s134, %s136
      %p143 = scmp.eq.s32.totalorder %s25, 3
      %p144 = por %p142, %p143
      %p145 = scmp.ne.s32.totalorder %s136, %s137
      %p146 = scmp.eq.s32.totalorder %s25, 0
      %p147 = por %p145, %p146
      %p148 = scmp.ne.s32.totalorder %s136, %s137
      %p149 = scmp.eq.s32.totalorder %s26, 3
      %p150 = por %p148, %p149
      %p152 = scmp.ne.s32.totalorder %s137, %s151
      %p153 = scmp.eq.s32.totalorder %s26, 0
      %p154 = por %p152, %p153
      %s156 = sadd.s32 %s155, 1
      %p159 = scmp.eq.s32.totalorder %s20, 3
      %p160 = scmp.ne.s32.totalorder %s155, %s157
      %p161 = scmp.eq.s32.totalorder %s20, 0
      %p162 = por %p160, %p161
      %p163 = scmp.ne.s32.totalorder %s155, %s157
      %p164 = scmp.eq.s32.totalorder %s25, 3
      %p165 = por %p163, %p164
      %p166 = scmp.ne.s32.totalorder %s157, %s158
      %p167 = scmp.eq.s32.totalorder %s25, 0
      %p168 = por %p166, %p167
      %p169 = scmp.ne.s32.totalorder %s157, %s158
      %p170 = scmp.eq.s32.totalorder %s26, 3
      %p171 = por %p169, %p170
      %p173 = scmp.ne.s32.totalorder %s158, %s172
      %p174 = scmp.eq.s32.totalorder %s26, 0
      %p175 = por %p173, %p174
      %s177 = sadd.s32 %s176, 1
      %p180 = scmp.eq.s32.totalorder %s20, 3
      %p181 = scmp.ne.s32.totalorder %s176, %s178
      %p182 = scmp.eq.s32.totalorder %s20, 0
      %p183 = por %p181, %p182
      %p184 = scmp.ne.s32.totalorder %s176, %s178
      %p185 = scmp.eq.s32.totalorder %s25, 3
      %p186 = por %p184, %p185
      %p187 = scmp.ne.s32.totalorder %s178, %s179
      %p188 = scmp.eq.s32.totalorder %s25, 0
      %p189 = por %p187, %p188
      %p190 = scmp.ne.s32.totalorder %s178, %s179
      %p191 = scmp.eq.s32.totalorder %s26, 3
      %p192 = por %p190, %p191
      %p194 = scmp.ne.s32.totalorder %s179, %s193
      %p195 = scmp.eq.s32.totalorder %s26, 0
      %p196 = por %p194, %p195
      %s198 = sadd.s32 %s197, 1
      %p201 = scmp.eq.s32.totalorder %s20, 3
      %p202 = scmp.ne.s32.totalorder %s197, %s199
      %p203 = scmp.eq.s32.totalorder %s20, 0
      %p204 = por %p202, %p203
      %p205 = scmp.ne.s32.totalorder %s197, %s199
      %p206 = scmp.eq.s32.totalorder %s25, 3
      %p207 = por %p205, %p206
      %p208 = scmp.ne.s32.totalorder %s199, %s200
      %p209 = scmp.eq.s32.totalorder %s25, 0
      %p210 = por %p208, %p209
      %p211 = scmp.ne.s32.totalorder %s199, %s200
      %p212 = scmp.eq.s32.totalorder %s26, 3
      %p213 = por %p211, %p212
      %p215 = scmp.ne.s32.totalorder %s200, %s214
      %p216 = scmp.eq.s32.totalorder %s26, 0
      %p217 = por %p215, %p216
      %s219 = sadd.s32 %s218, 1
      %p222 = scmp.eq.s32.totalorder %s20, 3
      %p223 = scmp.ne.s32.totalorder %s218, %s220
      %p224 = scmp.eq.s32.totalorder %s20, 0
      %p225 = por %p223, %p224
      %p226 = scmp.ne.s32.totalorder %s218, %s220
      %p227 = scmp.eq.s32.totalorder %s25, 3
      %p228 = por %p226, %p227
      %p229 = scmp.ne.s32.totalorder %s220, %s221
      %p230 = scmp.eq.s32.totalorder %s25, 0
      %p231 = por %p229, %p230
      %p232 = scmp.ne.s32.totalorder %s220, %s221
      %p233 = scmp.eq.s32.totalorder %s26, 3
      %p234 = por %p232, %p233
      %p236 = scmp.ne.s32.totalorder %s221, %s235
      %p237 = scmp.eq.s32.totalorder %s26, 0
      %p238 = por %p236, %p237
      %s240 = sadd.s32 %s239, 1
      %p243 = scmp.eq.s32.totalorder %s20, 3
      %p244 = scmp.ne.s32.totalorder %s239, %s241
      %p245 = scmp.eq.s32.totalorder %s20, 0
      %p246 = por %p244, %p245
      %p247 = scmp.ne.s32.totalorder %s239, %s241
      %p248 = scmp.eq.s32.totalorder %s25, 3
      %p249 = por %p247, %p248
      %p250 = scmp.ne.s32.totalorder %s241, %s242
      %p251 = scmp.eq.s32.totalorder %s25, 0
      %p252 = por %p250, %p251
      %p253 = scmp.ne.s32.totalorder %s241, %s242
      %p254 = scmp.eq.s32.totalorder %s26, 3
      %p255 = por %p253, %p254
      %p257 = scmp.ne.s32.totalorder %s242, %s256
      %p258 = scmp.eq.s32.totalorder %s26, 0
      %p259 = por %p257, %p258
      %s261 = sadd.s32 %s260, 1
      %p264 = scmp.eq.s32.totalorder %s20, 3
      %p265 = scmp.ne.s32.totalorder %s260, %s262
      %p266 = scmp.eq.s32.totalorder %s20, 0
      %p267 = por %p265, %p266
      %p268 = scmp.ne.s32.totalorder %s260, %s262
      %p269 = scmp.eq.s32.totalorder %s25, 3
      %p270 = por %p268, %p269
      %p271 = scmp.ne.s32.totalorder %s262, %s263
      %p272 = scmp.eq.s32.totalorder %s25, 0
      %p273 = por %p271, %p272
      %p274 = scmp.ne.s32.totalorder %s262, %s263
      %p275 = scmp.eq.s32.totalorder %s26, 3
      %p276 = por %p274, %p275
      %p278 = scmp.ne.s32.totalorder %s263, %s277
      %p279 = scmp.eq.s32.totalorder %s26, 0
      %p280 = por %p278, %p279
      %s281 = ssub.s32 %s27, %s39
      %s282 = ssub.s32 %s28, %s35
      %s283 = sor.u32 %s281, %s282
      %p284 = scmp.eq.s32.totalorder %s283, 0
      %s286 = sadd.s32 %s285, 1
      %s287 = scalar_select %p284, %s285, %s286
      %p290 = pneg %p284
      %p291 = scmp.eq.s32.totalorder %s20, 3
      %p292 = por %p290, %p291
      %p293 = scmp.ne.s32.totalorder %s285, %s288
      %p294 = scmp.eq.s32.totalorder %s20, 0
      %p295 = por %p293, %p294
      %p296 = scmp.ne.s32.totalorder %s285, %s288
      %p297 = scmp.eq.s32.totalorder %s25, 3
      %p298 = por %p296, %p297
      %p299 = scmp.ne.s32.totalorder %s288, %s289
      %p300 = scmp.eq.s32.totalorder %s25, 0
      %p301 = por %p299, %p300
      %p302 = scmp.ne.s32.totalorder %s288, %s289
      %p303 = scmp.eq.s32.totalorder %s26, 3
      %p304 = por %p302, %p303
      %p306 = scmp.ne.s32.totalorder %s289, %s305
      %p307 = scmp.eq.s32.totalorder %s26, 0
      %p308 = por %p306, %p307
      %p309 = scmp.le.s32.totalorder 1, %s20
      %p310 = scmp.lt.s32.totalorder %s20, 5
      %p311 = pnand %p309, %p310
      %p312 = pneg %p311
      // Predicated region
      $region9: #{tpu_custom_call.1} parent=5 // pred_check
        _
      $region10: #{tpu_custom_call.1} parent=5 // pred_check_branch
        %314 = sbr.rel (%p311) target = $region12
      $region11: #{tpu_custom_call.1} parent=5 // pred_region
        %s315 = ssub.s32 %s20, 1
        // Predicated region
        $region13: #{tpu_custom_call.1} parent=11 // pred_check
          %p316 = pneg %p105
        $region14: #{tpu_custom_call.1} parent=11 // pred_check_branch
          %318 = sbr.rel (%p316) target = $region16
        $region15: #{tpu_custom_call.1} parent=11 // pred_region
          _
        $region16: #{tpu_custom_call.1} parent=11 // pred_fallthru
          _
        // Predicated region
        $region17: #{tpu_custom_call.1} parent=11 // pred_check
          %p319 = pneg %p126
        $region18: #{tpu_custom_call.1} parent=11 // pred_check_branch
          %321 = sbr.rel (%p319) target = $region20
        $region19: #{tpu_custom_call.1} parent=11 // pred_region
          _
        $region20: #{tpu_custom_call.1} parent=11 // pred_fallthru
          _
        // Predicated region
        $region21: #{tpu_custom_call.1} parent=11 // pred_check
          %p322 = pneg %p147
        $region22: #{tpu_custom_call.1} parent=11 // pred_check_branch
          %324 = sbr.rel (%p322) target = $region24
        $region23: #{tpu_custom_call.1} parent=11 // pred_region
          _
        $region24: #{tpu_custom_call.1} parent=11 // pred_fallthru
          _
        // Predicated region
        $region25: #{tpu_custom_call.1} parent=11 // pred_check
          %p325 = pneg %p168
        $region26: #{tpu_custom_call.1} parent=11 // pred_check_branch
          %327 = sbr.rel (%p325) target = $region28
        $region27: #{tpu_custom_call.1} parent=11 // pred_region
          _
        $region28: #{tpu_custom_call.1} parent=11 // pred_fallthru
          _
        // Predicated region
        $region29: #{tpu_custom_call.1} parent=11 // pred_check
          %p328 = pneg %p189
        $region30: #{tpu_custom_call.1} parent=11 // pred_check_branch
          %330 = sbr.rel (%p328) target = $region32
        $region31: #{tpu_custom_call.1} parent=11 // pred_region
          _
        $region32: #{tpu_custom_call.1} parent=11 // pred_fallthru
          _
        // Predicated region
        $region33: #{tpu_custom_call.1} parent=11 // pred_check
          %p331 = pneg %p210
        $region34: #{tpu_custom_call.1} parent=11 // pred_check_branch
          %333 = sbr.rel (%p331) target = $region36
        $region35: #{tpu_custom_call.1} parent=11 // pred_region
          _
        $region36: #{tpu_custom_call.1} parent=11 // pred_fallthru
          _
        // Predicated region
        $region37: #{tpu_custom_call.1} parent=11 // pred_check
          %p334 = pneg %p231
        $region38: #{tpu_custom_call.1} parent=11 // pred_check_branch
          %336 = sbr.rel (%p334) target = $region40
        $region39: #{tpu_custom_call.1} parent=11 // pred_region
          _
        $region40: #{tpu_custom_call.1} parent=11 // pred_fallthru
          _
        // Predicated region
        $region41: #{tpu_custom_call.1} parent=11 // pred_check
          %p337 = pneg %p252
        $region42: #{tpu_custom_call.1} parent=11 // pred_check_branch
          %339 = sbr.rel (%p337) target = $region44
        $region43: #{tpu_custom_call.1} parent=11 // pred_region
          _
        $region44: #{tpu_custom_call.1} parent=11 // pred_fallthru
          _
        // Predicated region
        $region45: #{tpu_custom_call.1} parent=11 // pred_check
          %p340 = pneg %p273
        $region46: #{tpu_custom_call.1} parent=11 // pred_check_branch
          %342 = sbr.rel (%p340) target = $region48
        $region47: #{tpu_custom_call.1} parent=11 // pred_region
          _
        $region48: #{tpu_custom_call.1} parent=11 // pred_fallthru
          _
      $region12: #{tpu_custom_call.1} parent=5 // pred_fallthru
        _
      %p343 = scmp.lt.s32.totalorder %s20, 4
      // Predicated region
      $region49: #{tpu_custom_call.1} parent=5 // pred_check
        %p344 = pneg %p343
      $region50: #{tpu_custom_call.1} parent=5 // pred_check_branch
        %346 = sbr.rel (%p344) target = $region52
      $region51: #{tpu_custom_call.1} parent=5 // pred_region
        // Predicated region
        $region53: #{tpu_custom_call.1} parent=51 // pred_check
          %p347 = pneg %p52
        $region54: #{tpu_custom_call.1} parent=51 // pred_check_branch
          %349 = sbr.rel (%p347) target = $region56
        $region55: #{tpu_custom_call.1} parent=51 // pred_region
          %p350 = scmp.lt.s32.totalorder %s27, 1
          %s351 = scalar_select %p350, %s27, 1
          %s352 = smul.addr %s351, 2
          %s353 = smul.addr %s352, 8
          %s354 = scalar_lea.vmem %s0, %s353
        $region56: #{tpu_custom_call.1} parent=51 // pred_fallthru
          _
        // Predicated region
        $region57: #{tpu_custom_call.1} parent=51 // pred_check
          %p355 = pneg %p78
        $region58: #{tpu_custom_call.1} parent=51 // pred_check_branch
          %357 = sbr.rel (%p355) target = $region60
        $region59: #{tpu_custom_call.1} parent=51 // pred_region
          %p358 = scmp.lt.s32.totalorder %s27, 1
          %s359 = scalar_select %p358, %s27, 1
          %s360 = scalar_lea.vmem %s1, %s359
        $region60: #{tpu_custom_call.1} parent=51 // pred_fallthru
          _
      $region52: #{tpu_custom_call.1} parent=5 // pred_fallthru
        _
      %p361 = scmp.le.s32.totalorder 1, %s20
      %p362 = scmp.lt.s32.totalorder %s20, 5
      %p363 = pnand %p361, %p362
      %p364 = pneg %p363
      // Predicated region
      $region61: #{tpu_custom_call.1} parent=5 // pred_check
        _
      $region62: #{tpu_custom_call.1} parent=5 // pred_check_branch
        %366 = sbr.rel (%p363) target = $region64
      $region63: #{tpu_custom_call.1} parent=5 // pred_region
        %s367 = ssub.s32 %s20, 1
        %p368 = scmp.lt.s32.totalorder %s29, 1
        %s369 = scalar_select %p368, %s29, 1
        %s370 = smul.addr %s369, 2
        %s371 = smul.addr %s370, 8
        %s372 = scalar_lea.vmem %s0, %s371
        %p373 = pneg %p58
        %p374 = pneg %p55
        %p375 = scmp.lt.s32.totalorder %s29, 1
        %s376 = scalar_select %p375, %s29, 1
        %s377 = scalar_lea.vmem %s1, %s376
        %p378 = pneg %p84
        %p379 = pneg %p81
        %p380 = pneg %p105
        %p381 = pneg %p102
        %p382 = pneg %p126
        %p383 = pneg %p123
        %p384 = pneg %p147
        %p385 = pneg %p144
        %p386 = pneg %p168
        %p387 = pneg %p165
        %p388 = pneg %p189
        %p389 = pneg %p186
        %p390 = pneg %p210
        %p391 = pneg %p207
        %p392 = pneg %p231
        %p393 = pneg %p228
        %p394 = pneg %p252
        %p395 = pneg %p249
        %p396 = pneg %p273
        %p397 = pneg %p270
        %p398 = pneg %p301
        %p399 = pneg %p298
        %s400 = sand.u32 %s288, 1
        %s401 = scalar_lea.sflag [#allocation5], %s400
        %s402 = sand.u32 %s288, 1
        %s403 = smul.addr %s402, 8
        %s404 = scalar_lea.vmem [#allocation4], %s403
        %p405 = scmp.lt.s32.totalorder %s29, 1
        %s406 = scalar_select %p405, %s29, 1
        %s407 = smul.addr %s406, 2
        %s408 = smul.addr %s407, 8
        %s409 = scalar_lea.vmem %s0, %s408
        %p410 = scmp.lt.s32.totalorder %s29, 1
        %s411 = scalar_select %p410, %s29, 1
        %s412 = scalar_lea.vmem %s1, %s411
        %v413 = vld [vmem:[%s10] sm:$0x1]
        %v414 = vld [vmem:[%s10 + $0x1] sm:$0x1]
        %v415 = vld [vmem:[%s10 + $0x2] sm:$0x1]
        %v416 = vld [vmem:[%s10 + $0x3] sm:$0x1]
        %v417 = vld [vmem:[%s10 + $0x4] sm:$0x1]
        %v418 = vld [vmem:[%s10 + $0x5] sm:$0x1]
        %p419 = scmp.eq.s32.totalorder %s30, 0
        // Predicated region
        $region65: #{tpu_custom_call.1} parent=63 // pred_check
          %p420 = pneg %p419
        $region66: #{tpu_custom_call.1} parent=63 // pred_check_branch
          %422 = sbr.rel (%p420) target = $region68
        $region67: #{tpu_custom_call.1} parent=63 // pred_region
          %v423 = vld [vmem:[%s409] sm:$0xff]
          %v424 = vld [vmem:[%s409 + $0x8] sm:$0xff]
          %vm425 = vcmask 261120
          %v426 = vsel %vm425, %v423, 0.0
          %427 = vadd.xlane.f32.xlu0 %v426
          %v428 = vpop.xlane.xlu0 %427
          %v429 = vsel %vm425, %v424, 0.0
          %430 = vadd.xlane.f32.xlu0 %v429
          %v431 = vpop.xlane.xlu0 %430
          %v432 = vmul.f32 %v428, 0.03125
          %v433 = vmul.f32 %v431, 0.03125
          %v434 = vsub.f32 %v423, %v432
          %v435 = vsub.f32 %v424, %v433
          %v436 = vmul.f32 %v434, %v434
          %v437 = vmul.f32 %v435, %v435
          %v438 = vsel %vm425, %v436, 0.0
          %439 = vadd.xlane.f32.xlu0 %v438
          %v440 = vpop.xlane.xlu0 %439
          %v441 = vsel %vm425, %v437, 0.0
          %442 = vadd.xlane.f32.xlu0 %v441
          %v443 = vpop.xlane.xlu0 %442
          %v444 = vmul.f32 %v440, 0.032258064
          %v445 = vmul.f32 %v443, 0.032258064
          %v446 = vrsqrt.pop %v444
          %v447 = vmul.f32 %v444, %v446
          %vm448 = vcmp.eq.f32.partialorder %v444, inf
          %v449 = vsel %vm448, %v444, %v447
          %vm450 = vcmp.eq.f32.partialorder %v444, 0.0
          %v451 = vand.u32 %v444, 2147483648
          %v452 = vsel %vm450, %v451, %v449
          %v453 = vrsqrt.pop %v445
          %v454 = vmul.f32 %v445, %v453
          %vm455 = vcmp.eq.f32.partialorder %v445, inf
          %v456 = vsel %vm455, %v445, %v454
          %vm457 = vcmp.eq.f32.partialorder %v445, 0.0
          %v458 = vand.u32 %v445, 2147483648
          %v459 = vsel %vm457, %v458, %v456
          %v460 = vadd.f32 %v452, 1e-06
          %v461 = vadd.f32 %v459, 1e-06
          %v462 = vrcp.pop %v460
          %v463 = vmul.f32 1.0, %v462
          %v464 = vrcp.pop %v461
          %v465 = vmul.f32 1.0, %v464
          %v466 = vmul.f32 %v434, %v463
          %v467 = vmul.f32 %v435, %v465
          %v468 = vlaneseq
          %v469 = vshrl.u32 %v468, 7
          %v470 = vsub.s32 0, %v469
          %v471 = vrot.slane %v413, %v470
          %v472 = vmul.f32 %v471, %v466
          %v473 = vmul.f32 %v471, %v467
          %v474 = vlaneseq
          %v475 = vshrl.u32 %v474, 7
          %v476 = vsub.s32 0, %v475
          %v477 = vrot.slane %v414, %v476
          %v478 = vadd.f32 %v472, %v477
          %v479 = vadd.f32 %v473, %v477
          %v480 = vld [vmem:[%s4] sm:$0xff]
          %v481 = vld [vmem:[%s4 + $0x8] sm:$0xff]
          %v482 = vld [vmem:[%s4 + $0x10] sm:$0xff]
          %v483 = vld [vmem:[%s4 + $0x18] sm:$0xff]
          %v484 = vld [vmem:[%s4 + $0x20] sm:$0xff]
          %v485 = vld [vmem:[%s4 + $0x28] sm:$0xff]
          %v486 = vld [vmem:[%s4 + $0x30] sm:$0xff]
          %v487 = vld [vmem:[%s4 + $0x38] sm:$0xff]
          %v488 = vld [vmem:[%s5] sm:$0xff]
          %v489 = vld [vmem:[%s5 + $0x8] sm:$0xff]
          %v490 = vld [vmem:[%s5 + $0x10] sm:$0xff]
          %v491 = vld [vmem:[%s5 + $0x18] sm:$0xff]
          %v492 = vld [vmem:[%s5 + $0x20] sm:$0xff]
          %v493 = vld [vmem:[%s5 + $0x28] sm:$0xff]
          %v494 = vld [vmem:[%s5 + $0x30] sm:$0xff]
          %v495 = vld [vmem:[%s5 + $0x38] sm:$0xff]
          %497 = vset.pattern.permute.xlu0 0
          %498 = vperm.xlu0 %497, %v488
          %v499 = vpop.permute.xlu0 %498
          %502 = vset.pattern.permute.xlu0 0
          %503 = vperm.xlu0 %502, %v489
          %v504 = vpop.permute.xlu0 %503
          %507 = vset.pattern.permute.xlu0 0
          %508 = vperm.xlu0 %507, %v490
          %v509 = vpop.permute.xlu0 %508
          %512 = vset.pattern.permute.xlu0 0
          %513 = vperm.xlu0 %512, %v491
          %v514 = vpop.permute.xlu0 %513
          %517 = vset.pattern.permute.xlu0 0
          %518 = vperm.xlu0 %517, %v492
          %v519 = vpop.permute.xlu0 %518
          %522 = vset.pattern.permute.xlu0 0
          %523 = vperm.xlu0 %522, %v493
          %v524 = vpop.permute.xlu0 %523
          %527 = vset.pattern.permute.xlu0 0
          %528 = vperm.xlu0 %527, %v494
          %v529 = vpop.permute.xlu0 %528
          %532 = vset.pattern.permute.xlu0 0
          %533 = vperm.xlu0 %532, %v495
          %v534 = vpop.permute.xlu0 %533
          %v537 = vsel %vm425, %v480, 0
          %v540 = vsel %vm425, %v481, 0
          %v543 = vsel %vm425, %v482, 0
          %v546 = vsel %vm425, %v483, 0
          %v549 = vsel %vm425, %v484, 0
          %v552 = vsel %vm425, %v485, 0
          %v555 = vsel %vm425, %v486, 0
          %v558 = vsel %vm425, %v487, 0
          %v561 = vsel %vm425, %v478, 0
          %v564 = vsel %vm425, %v479, 0
          %566 = vmatprep.subr.mxu0 0.0
          %567 = vmatpush1.xpose.msra.mxu0 0.0
          %568 = vmatprep.subr.mxu0 0.0
          %569 = vmatpush1.xpose.msra.mxu0 0.0
          %570 = vmatprep.subr.mxu0 0.0
          %571 = vmatpush1.xpose.msra.mxu0 0.0
          %572 = vmatprep.subr.mxu0 0.0
          %573 = vmatpush1.xpose.msra.mxu0 0.0
          %574 = vmatprep.subr.mxu0 0.0
          %575 = vmatpush1.xpose.msra.mxu0 0.0
          %576 = vmatprep.subr.mxu0 0.0
          %577 = vmatpush1.xpose.msra.mxu0 0.0
          %578 = vmatprep.subr.mxu0 0.0
          %579 = vmatpush1.xpose.msra.mxu0 0.0
          %580 = vmatprep.subr.mxu0 0.0
          %581 = vmatpush1.xpose.msra.mxu0 0.0
          %582 = vmatprep.subr.mxu0 0.0
          %583 = vmatpush1.xpose.msra.mxu0 0.0
          %584 = vmatprep.subr.mxu0 0.0
          %585 = vmatpush1.xpose.msra.mxu0 0.0
          %586 = vmatprep.subr.mxu0 0.0
          %587 = vmatpush1.xpose.msra.mxu0 0.0
          %588 = vmatprep.subr.mxu0 0.0
          %589 = vmatpush1.xpose.msra.mxu0 0.0
          %590 = vmatprep.subr.mxu0 0.0
          %591 = vmatpush1.xpose.msra.mxu0 0.0
          %592 = vmatprep.subr.mxu0 0.0
          %593 = vmatpush1.xpose.msra.mxu0 0.0
          %594 = vmatprep.subr.mxu0 0.0
          %595 = vmatpush1.xpose.msra.mxu0 %v564
          %596 = vmatprep.subr.mxu0 0.0
          %597 = vmatpush1.xpose.msra.mxu0 %v561
          %598 = vmatprep.subr.mxu0 0.0
          %599 = vmatpush2.xpose.msra.mxu0 0.0
          %600 = vmatprep.subr.mxu0 0.0
          %601 = vmatpush2.xpose.msra.mxu0 0.0
          %602 = vmatprep.subr.mxu0 0.0
          %603 = vmatpush2.xpose.msra.mxu0 0.0
          %604 = vmatprep.subr.mxu0 0.0
          %605 = vmatpush2.xpose.msra.mxu0 0.0
          %606 = vmatprep.subr.mxu0 0.0
          %607 = vmatpush2.xpose.msra.mxu0 0.0
          %608 = vmatprep.subr.mxu0 0.0
          %609 = vmatpush2.xpose.msra.mxu0 0.0
          %610 = vmatprep.subr.mxu0 0.0
          %611 = vmatpush2.xpose.msra.mxu0 0.0
          %612 = vmatprep.subr.mxu0 0.0
          %613 = vmatpush2.xpose.msra.mxu0 0.0
          %614 = vmatprep.subr.mxu0 0.0
          %615 = vmatpush2.xpose.msra.mxu0 0.0
          %616 = vmatprep.subr.mxu0 0.0
          %617 = vmatpush2.xpose.msra.mxu0 0.0
          %618 = vmatprep.subr.mxu0 0.0
          %619 = vmatpush2.xpose.msra.mxu0 0.0
          %620 = vmatprep.subr.mxu0 0.0
          %621 = vmatpush2.xpose.msra.mxu0 0.0
          %622 = vmatprep.subr.mxu0 0.0
          %623 = vmatpush2.xpose.msra.mxu0 0.0
          %624 = vmatprep.subr.mxu0 0.0
          %625 = vmatpush2.xpose.msra.mxu0 0.0
          %626 = vmatprep.subr.mxu0 0.0
          %627 = vmatpush2.xpose.msra.mxu0 0.0
          %628 = vmatprep.subr.mxu0 0.0
          %629 = vmatpush2.xpose.msra.mxu0 0.0
          %630 = vmatprep.mubr.f32.mxu0 0.0
          %631 = vmatmul.mubr.f32.gmra.mxu0 %v537
          %v632 = vpop.f32.mrf.mxu0
          %v633 = vadd.f32 %v499, %v632
          %v634 = vpop.f32.mrf.mxu0
          %635 = vmatprep.mubr.f32.mxu0 0.0
          %636 = vmatmul.mubr.f32.gmra.mxu0 %v540
          %v637 = vpop.f32.mrf.mxu0
          %v638 = vadd.f32 %v504, %v637
          %v639 = vpop.f32.mrf.mxu0
          %640 = vmatprep.mubr.f32.mxu0 0.0
          %641 = vmatmul.mubr.f32.gmra.mxu0 %v543
          %v642 = vpop.f32.mrf.mxu0
          %v643 = vadd.f32 %v509, %v642
          %v644 = vpop.f32.mrf.mxu0
          %645 = vmatprep.mubr.f32.mxu0 0.0
          %646 = vmatmul.mubr.f32.gmra.mxu0 %v546
          %v647 = vpop.f32.mrf.mxu0
          %v648 = vadd.f32 %v514, %v647
          %v649 = vpop.f32.mrf.mxu0
          %650 = vmatprep.mubr.f32.mxu0 0.0
          %651 = vmatmul.mubr.f32.gmra.mxu0 %v549
          %v652 = vpop.f32.mrf.mxu0
          %v653 = vadd.f32 %v519, %v652
          %v654 = vpop.f32.mrf.mxu0
          %655 = vmatprep.mubr.f32.mxu0 0.0
          %656 = vmatmul.mubr.f32.gmra.mxu0 %v552
          %v657 = vpop.f32.mrf.mxu0
          %v658 = vadd.f32 %v524, %v657
          %v659 = vpop.f32.mrf.mxu0
          %660 = vmatprep.mubr.f32.mxu0 0.0
          %661 = vmatmul.mubr.f32.gmra.mxu0 %v555
          %v662 = vpop.f32.mrf.mxu0
          %v663 = vadd.f32 %v529, %v662
          %v664 = vpop.f32.mrf.mxu0
          %665 = vmatprep.mubr.f32.mxu0 0.0
          %666 = vmatmul.mubr.f32.gmra.mxu0 %v558
          %v667 = vpop.f32.mrf.mxu0
          %v668 = vadd.f32 %v534, %v667
          %v669 = vpop.f32.mrf.mxu0
          %670 = vdwg.mxu0
          %vm671 = vcmask 130048
          %672 = vst.msk [vmem:[#allocation2] sm:$0xff] %vm671, %v633
          %673 = vst.msk [vmem:[#allocation2 + $0x8] sm:$0xff] %vm671, %v638
          %674 = vst.msk [vmem:[#allocation2 + $0x10] sm:$0xff] %vm671, %v643
          %675 = vst.msk [vmem:[#allocation2 + $0x18] sm:$0xff] %vm671, %v648
          %676 = vst.msk [vmem:[#allocation3] sm:$0xff] %vm671, %v653
          %677 = vst.msk [vmem:[#allocation3 + $0x8] sm:$0xff] %vm671, %v658
          %678 = vst.msk [vmem:[#allocation3 + $0x10] sm:$0xff] %vm671, %v663
          %679 = vst.msk [vmem:[#allocation3 + $0x18] sm:$0xff] %vm671, %v668
        $region68: #{tpu_custom_call.1} parent=63 // pred_fallthru
          _
        %s680 = smul.u32 %s30, 8
        %s681 = scalar_lea.vmem %s409, %s680
        %v682 = vld [vmem:[%s681] sm:$0xff]
        %vm683 = vcmask 261120
        %v684 = vsel %vm683, %v682, 0.0
        %685 = vadd.xlane.f32.xlu0 %v684
        %v686 = vpop.xlane.xlu0 %685
        %v687 = vmul.f32 %v686, 0.03125
        %v688 = vsub.f32 %v682, %v687
        %v689 = vmul.f32 %v688, %v688
        %v690 = vsel %vm683, %v689, 0.0
        %691 = vadd.xlane.f32.xlu0 %v690
        %v692 = vpop.xlane.xlu0 %691
        %v693 = vmul.f32 %v692, 0.032258064
        %v694 = vrsqrt.pop %v693
        %v695 = vmul.f32 %v693, %v694
        %vm696 = vcmp.eq.f32.partialorder %v693, inf
        %v697 = vsel %vm696, %v693, %v695
        %vm698 = vcmp.eq.f32.partialorder %v693, 0.0
        %v699 = vand.u32 %v693, 2147483648
        %v700 = vsel %vm698, %v699, %v697
        %v701 = vadd.f32 %v700, 1e-06
        %v702 = vrcp.pop %v701
        %v703 = vmul.f32 1.0, %v702
        %v704 = vmul.f32 %v688, %v703
        %v705 = vlaneseq
        %v706 = vshrl.u32 %v705, 7
        %v707 = vsub.s32 0, %v706
        %v708 = vrot.slane %v413, %v707
        %v709 = vmul.f32 %v708, %v704
        %v710 = vlaneseq
        %v711 = vshrl.u32 %v710, 7
        %v712 = vsub.s32 0, %v711
        %v713 = vrot.slane %v414, %v712
        %v714 = vadd.f32 %v709, %v713
        %v715 = vld [vmem:[%s2] sm:$0xff]
        %v716 = vld [vmem:[%s2 + $0x8] sm:$0xff]
        %v717 = vld [vmem:[%s2 + $0x10] sm:$0xff]
        %v718 = vld [vmem:[%s2 + $0x18] sm:$0xff]
        %v719 = vld [vmem:[%s3] sm:$0xff]
        %v720 = vld [vmem:[%s3 + $0x8] sm:$0xff]
        %v721 = vld [vmem:[%s3 + $0x10] sm:$0xff]
        %v722 = vld [vmem:[%s3 + $0x18] sm:$0xff]
        %724 = vset.pattern.permute.xlu0 0
        %725 = vperm.xlu0 %724, %v719
        %v726 = vpop.permute.xlu0 %725
        %729 = vset.pattern.permute.xlu0 0
        %730 = vperm.xlu0 %729, %v720
        %v731 = vpop.permute.xlu0 %730
        %734 = vset.pattern.permute.xlu0 0
        %735 = vperm.xlu0 %734, %v721
        %v736 = vpop.permute.xlu0 %735
        %739 = vset.pattern.permute.xlu0 0
        %740 = vperm.xlu0 %739, %v722
        %v741 = vpop.permute.xlu0 %740
        %v744 = vsel %vm683, %v715, 0
        %v747 = vsel %vm683, %v716, 0
        %v750 = vsel %vm683, %v717, 0
        %v753 = vsel %vm683, %v718, 0
        %v756 = vsel %vm683, %v714, 0
        %758 = vmatprep.subr.mxu0 0.0
        %759 = vmatpush1.xpose.msra.mxu0 0.0
        %760 = vmatprep.subr.mxu0 0.0
        %761 = vmatpush1.xpose.msra.mxu0 0.0
        %762 = vmatprep.subr.mxu0 0.0
        %763 = vmatpush1.xpose.msra.mxu0 0.0
        %764 = vmatprep.subr.mxu0 0.0
        %765 = vmatpush1.xpose.msra.mxu0 0.0
        %766 = vmatprep.subr.mxu0 0.0
        %767 = vmatpush1.xpose.msra.mxu0 0.0
        %768 = vmatprep.subr.mxu0 0.0
        %769 = vmatpush1.xpose.msra.mxu0 0.0
        %770 = vmatprep.subr.mxu0 0.0
        %771 = vmatpush1.xpose.msra.mxu0 0.0
        %772 = vmatprep.subr.mxu0 0.0
        %773 = vmatpush1.xpose.msra.mxu0 0.0
        %774 = vmatprep.subr.mxu0 0.0
        %775 = vmatpush1.xpose.msra.mxu0 0.0
        %776 = vmatprep.subr.mxu0 0.0
        %777 = vmatpush1.xpose.msra.mxu0 0.0
        %778 = vmatprep.subr.mxu0 0.0
        %779 = vmatpush1.xpose.msra.mxu0 0.0
        %780 = vmatprep.subr.mxu0 0.0
        %781 = vmatpush1.xpose.msra.mxu0 0.0
        %782 = vmatprep.subr.mxu0 0.0
        %783 = vmatpush1.xpose.msra.mxu0 0.0
        %784 = vmatprep.subr.mxu0 0.0
        %785 = vmatpush1.xpose.msra.mxu0 0.0
        %786 = vmatprep.subr.mxu0 0.0
        %787 = vmatpush1.xpose.msra.mxu0 0.0
        %788 = vmatprep.subr.mxu0 0.0
        %789 = vmatpush1.xpose.msra.mxu0 %v756
        %790 = vmatprep.subr.mxu0 0.0
        %791 = vmatpush2.xpose.msra.mxu0 0.0
        %792 = vmatprep.subr.mxu0 0.0
        %793 = vmatpush2.xpose.msra.mxu0 0.0
        %794 = vmatprep.subr.mxu0 0.0
        %795 = vmatpush2.xpose.msra.mxu0 0.0
        %796 = vmatprep.subr.mxu0 0.0
        %797 = vmatpush2.xpose.msra.mxu0 0.0
        %798 = vmatprep.subr.mxu0 0.0
        %799 = vmatpush2.xpose.msra.mxu0 0.0
        %800 = vmatprep.subr.mxu0 0.0
        %801 = vmatpush2.xpose.msra.mxu0 0.0
        %802 = vmatprep.subr.mxu0 0.0
        %803 = vmatpush2.xpose.msra.mxu0 0.0
        %804 = vmatprep.subr.mxu0 0.0
        %805 = vmatpush2.xpose.msra.mxu0 0.0
        %806 = vmatprep.subr.mxu0 0.0
        %807 = vmatpush2.xpose.msra.mxu0 0.0
        %808 = vmatprep.subr.mxu0 0.0
        %809 = vmatpush2.xpose.msra.mxu0 0.0
        %810 = vmatprep.subr.mxu0 0.0
        %811 = vmatpush2.xpose.msra.mxu0 0.0
        %812 = vmatprep.subr.mxu0 0.0
        %813 = vmatpush2.xpose.msra.mxu0 0.0
        %814 = vmatprep.subr.mxu0 0.0
        %815 = vmatpush2.xpose.msra.mxu0 0.0
        %816 = vmatprep.subr.mxu0 0.0
        %817 = vmatpush2.xpose.msra.mxu0 0.0
        %818 = vmatprep.subr.mxu0 0.0
        %819 = vmatpush2.xpose.msra.mxu0 0.0
        %820 = vmatprep.subr.mxu0 0.0
        %821 = vmatpush2.xpose.msra.mxu0 0.0
        %822 = vmatprep.mubr.f32.mxu0 0.0
        %823 = vmatmul.mubr.f32.gmra.mxu0 %v744
        %v824 = vpop.f32.mrf.mxu0
        %v825 = vadd.f32 %v726, %v824
        %v826 = vpop.f32.mrf.mxu0
        %827 = vmatprep.mubr.f32.mxu0 0.0
        %828 = vmatmul.mubr.f32.gmra.mxu0 %v747
        %v829 = vpop.f32.mrf.mxu0
        %v830 = vadd.f32 %v731, %v829
        %v831 = vpop.f32.mrf.mxu0
        %832 = vmatprep.mubr.f32.mxu0 0.0
        %833 = vmatmul.mubr.f32.gmra.mxu0 %v750
        %v834 = vpop.f32.mrf.mxu0
        %v835 = vadd.f32 %v736, %v834
        %v836 = vpop.f32.mrf.mxu0
        %837 = vmatprep.mubr.f32.mxu0 0.0
        %838 = vmatmul.mubr.f32.gmra.mxu0 %v753
        %v839 = vpop.f32.mrf.mxu0
        %v840 = vadd.f32 %v741, %v839
        %v841 = vpop.f32.mrf.mxu0
        %842 = vdwg.mxu0
        %v843 = vld [vmem:[#allocation2] sm:$0xff]
        %v844 = vld [vmem:[#allocation2 + $0x8] sm:$0xff]
        %v845 = vld [vmem:[#allocation2 + $0x10] sm:$0xff]
        %v846 = vld [vmem:[#allocation2 + $0x18] sm:$0xff]
        %v847 = vld [vmem:[%s412] sm:$0x1]
        %v849 = vlaneseq
        %v850 = vshrl.u32 %v849, 7
        %v851 = vsub.s32 0, %v850
        %v852 = vrot.slane %v847, %v851
        %854 = vxpose.xlu0.b32.start [1/16] %v825, 128
        %855 = vxpose.xlu0.b32.cont [2/16] 0.0, 128
        %856 = vxpose.xlu0.b32.cont [3/16] 0.0, 128
        %857 = vxpose.xlu0.b32.cont [4/16] 0.0, 128
        %858 = vxpose.xlu0.b32.cont [5/16] 0.0, 128
        %859 = vxpose.xlu0.b32.cont [6/16] 0.0, 128
        %860 = vxpose.xlu0.b32.cont [7/16] 0.0, 128
        %861 = vxpose.xlu0.b32.cont [8/16] 0.0, 128
        %862 = vxpose.xlu0.b32.cont [9/16] 0.0, 128
        %863 = vxpose.xlu0.b32.cont [10/16] 0.0, 128
        %864 = vxpose.xlu0.b32.cont [11/16] 0.0, 128
        %865 = vxpose.xlu0.b32.cont [12/16] 0.0, 128
        %866 = vxpose.xlu0.b32.cont [13/16] 0.0, 128
        %867 = vxpose.xlu0.b32.cont [14/16] 0.0, 128
        %868 = vxpose.xlu0.b32.cont [15/16] 0.0, 128
        %869 = vxpose.xlu0.b32.end [16/16] 0.0, 128
        %v870 = vpop.trf.xlu0
        %v871 = vpop.trf.xlu0
        %v872 = vpop.trf.xlu0
        %v873 = vpop.trf.xlu0
        %v874 = vpop.trf.xlu0
        %v875 = vpop.trf.xlu0
        %v876 = vpop.trf.xlu0
        %v877 = vpop.trf.xlu0
        %v878 = vpop.trf.xlu0
        %v879 = vpop.trf.xlu0
        %v880 = vpop.trf.xlu0
        %v881 = vpop.trf.xlu0
        %v882 = vpop.trf.xlu0
        %v883 = vpop.trf.xlu0
        %v884 = vpop.trf.xlu0
        %v885 = vpop.trf.xlu0
        %vm886 = vcmask 64512
        %v888 = vsel %vm886, %v870, 0
        %890 = vmatprep.subr.mxu0 0.0
        %891 = vmatpush1.msra.mxu0 0.0
        %892 = vmatprep.subr.mxu0 0.0
        %893 = vmatpush1.msra.mxu0 0.0
        %894 = vmatprep.subr.mxu0 0.0
        %895 = vmatpush1.msra.mxu0 0.0
        %896 = vmatprep.subr.mxu0 0.0
        %897 = vmatpush1.msra.mxu0 0.0
        %898 = vmatprep.subr.mxu0 0.0
        %899 = vmatpush1.msra.mxu0 0.0
        %900 = vmatprep.subr.mxu0 0.0
        %901 = vmatpush1.msra.mxu0 0.0
        %902 = vmatprep.subr.mxu0 0.0
        %903 = vmatpush1.msra.mxu0 0.0
        %904 = vmatprep.subr.mxu0 0.0
        %905 = vmatpush1.msra.mxu0 0.0
        %906 = vmatprep.subr.mxu0 0.0
        %907 = vmatpush1.msra.mxu0 0.0
        %908 = vmatprep.subr.mxu0 0.0
        %909 = vmatpush1.msra.mxu0 0.0
        %910 = vmatprep.subr.mxu0 0.0
        %911 = vmatpush1.msra.mxu0 0.0
        %912 = vmatprep.subr.mxu0 0.0
        %913 = vmatpush1.msra.mxu0 0.0
        %914 = vmatprep.subr.mxu0 0.0
        %915 = vmatpush1.msra.mxu0 0.0
        %916 = vmatprep.subr.mxu0 0.0
        %917 = vmatpush1.msra.mxu0 0.0
        %918 = vmatprep.subr.mxu0 0.0
        %919 = vmatpush1.msra.mxu0 0.0
        %920 = vmatprep.subr.mxu0 0.0
        %921 = vmatpush1.msra.mxu0 %v843
        %922 = vmatprep.subr.mxu0 0.0
        %923 = vmatpush2.msra.mxu0 0.0
        %924 = vmatprep.subr.mxu0 0.0
        %925 = vmatpush2.msra.mxu0 0.0
        %926 = vmatprep.subr.mxu0 0.0
        %927 = vmatpush2.msra.mxu0 0.0
        %928 = vmatprep.subr.mxu0 0.0
        %929 = vmatpush2.msra.mxu0 0.0
        %930 = vmatprep.subr.mxu0 0.0
        %931 = vmatpush2.msra.mxu0 0.0
        %932 = vmatprep.subr.mxu0 0.0
        %933 = vmatpush2.msra.mxu0 0.0
        %934 = vmatprep.subr.mxu0 0.0
        %935 = vmatpush2.msra.mxu0 0.0
        %936 = vmatprep.subr.mxu0 0.0
        %937 = vmatpush2.msra.mxu0 0.0
        %938 = vmatprep.subr.mxu0 0.0
        %939 = vmatpush2.msra.mxu0 0.0
        %940 = vmatprep.subr.mxu0 0.0
        %941 = vmatpush2.msra.mxu0 0.0
        %942 = vmatprep.subr.mxu0 0.0
        %943 = vmatpush2.msra.mxu0 0.0
        %944 = vmatprep.subr.mxu0 0.0
        %945 = vmatpush2.msra.mxu0 0.0
        %946 = vmatprep.subr.mxu0 0.0
        %947 = vmatpush2.msra.mxu0 0.0
        %948 = vmatprep.subr.mxu0 0.0
        %949 = vmatpush2.msra.mxu0 0.0
        %950 = vmatprep.subr.mxu0 0.0
        %951 = vmatpush2.msra.mxu0 0.0
        %952 = vmatprep.subr.mxu0 0.0
        %953 = vmatpush2.msra.mxu0 0.0
        %954 = vmatprep.mubr.f32.mxu0 0.0
        %955 = vmatmul.mubr.f32.gmra.mxu0 %v888
        %v956 = vpop.f32.mrf.mxu0
        %v957 = vadd.f32 %v852, %v956
        %v958 = vpop.f32.mrf.mxu0
        %959 = vdwg.mxu0
        %960 = vxpose.xlu0.b32.start [1/16] %v830, 128
        %961 = vxpose.xlu0.b32.cont [2/16] 0.0, 128
        %962 = vxpose.xlu0.b32.cont [3/16] 0.0, 128
        %963 = vxpose.xlu0.b32.cont [4/16] 0.0, 128
        %964 = vxpose.xlu0.b32.cont [5/16] 0.0, 128
        %965 = vxpose.xlu0.b32.cont [6/16] 0.0, 128
        %966 = vxpose.xlu0.b32.cont [7/16] 0.0, 128
        %967 = vxpose.xlu0.b32.cont [8/16] 0.0, 128
        %968 = vxpose.xlu0.b32.cont [9/16] 0.0, 128
        %969 = vxpose.xlu0.b32.cont [10/16] 0.0, 128
        %970 = vxpose.xlu0.b32.cont [11/16] 0.0, 128
        %971 = vxpose.xlu0.b32.cont [12/16] 0.0, 128
        %972 = vxpose.xlu0.b32.cont [13/16] 0.0, 128
        %973 = vxpose.xlu0.b32.cont [14/16] 0.0, 128
        %974 = vxpose.xlu0.b32.cont [15/16] 0.0, 128
        %975 = vxpose.xlu0.b32.end [16/16] 0.0, 128
        %v976 = vpop.trf.xlu0
        %v977 = vpop.trf.xlu0
        %v978 = vpop.trf.xlu0
        %v979 = vpop.trf.xlu0
        %v980 = vpop.trf.xlu0
        %v981 = vpop.trf.xlu0
        %v982 = vpop.trf.xlu0
        %v983 = vpop.trf.xlu0
        %v984 = vpop.trf.xlu0
        %v985 = vpop.trf.xlu0
        %v986 = vpop.trf.xlu0
        %v987 = vpop.trf.xlu0
        %v988 = vpop.trf.xlu0
        %v989 = vpop.trf.xlu0
        %v990 = vpop.trf.xlu0
        %v991 = vpop.trf.xlu0
        %v993 = vsel %vm886, %v976, 0
        %995 = vmatprep.subr.mxu0 0.0
        %996 = vmatpush1.msra.mxu0 0.0
        %997 = vmatprep.subr.mxu0 0.0
        %998 = vmatpush1.msra.mxu0 0.0
        %999 = vmatprep.subr.mxu0 0.0
        %1000 = vmatpush1.msra.mxu0 0.0
        %1001 = vmatprep.subr.mxu0 0.0
        %1002 = vmatpush1.msra.mxu0 0.0
        %1003 = vmatprep.subr.mxu0 0.0
        %1004 = vmatpush1.msra.mxu0 0.0
        %1005 = vmatprep.subr.mxu0 0.0
        %1006 = vmatpush1.msra.mxu0 0.0
        %1007 = vmatprep.subr.mxu0 0.0
        %1008 = vmatpush1.msra.mxu0 0.0
        %1009 = vmatprep.subr.mxu0 0.0
        %1010 = vmatpush1.msra.mxu0 0.0
        %1011 = vmatprep.subr.mxu0 0.0
        %1012 = vmatpush1.msra.mxu0 0.0
        %1013 = vmatprep.subr.mxu0 0.0
        %1014 = vmatpush1.msra.mxu0 0.0
        %1015 = vmatprep.subr.mxu0 0.0
        %1016 = vmatpush1.msra.mxu0 0.0
        %1017 = vmatprep.subr.mxu0 0.0
        %1018 = vmatpush1.msra.mxu0 0.0
        %1019 = vmatprep.subr.mxu0 0.0
        %1020 = vmatpush1.msra.mxu0 0.0
        %1021 = vmatprep.subr.mxu0 0.0
        %1022 = vmatpush1.msra.mxu0 0.0
        %1023 = vmatprep.subr.mxu0 0.0
        %1024 = vmatpush1.msra.mxu0 0.0
        %1025 = vmatprep.subr.mxu0 0.0
        %1026 = vmatpush1.msra.mxu0 %v844
        %1027 = vmatprep.subr.mxu0 0.0
        %1028 = vmatpush2.msra.mxu0 0.0
        %1029 = vmatprep.subr.mxu0 0.0
        %1030 = vmatpush2.msra.mxu0 0.0
        %1031 = vmatprep.subr.mxu0 0.0
        %1032 = vmatpush2.msra.mxu0 0.0
        %1033 = vmatprep.subr.mxu0 0.0
        %1034 = vmatpush2.msra.mxu0 0.0
        %1035 = vmatprep.subr.mxu0 0.0
        %1036 = vmatpush2.msra.mxu0 0.0
        %1037 = vmatprep.subr.mxu0 0.0
        %1038 = vmatpush2.msra.mxu0 0.0
        %1039 = vmatprep.subr.mxu0 0.0
        %1040 = vmatpush2.msra.mxu0 0.0
        %1041 = vmatprep.subr.mxu0 0.0
        %1042 = vmatpush2.msra.mxu0 0.0
        %1043 = vmatprep.subr.mxu0 0.0
        %1044 = vmatpush2.msra.mxu0 0.0
        %1045 = vmatprep.subr.mxu0 0.0
        %1046 = vmatpush2.msra.mxu0 0.0
        %1047 = vmatprep.subr.mxu0 0.0
        %1048 = vmatpush2.msra.mxu0 0.0
        %1049 = vmatprep.subr.mxu0 0.0
        %1050 = vmatpush2.msra.mxu0 0.0
        %1051 = vmatprep.subr.mxu0 0.0
        %1052 = vmatpush2.msra.mxu0 0.0
        %1053 = vmatprep.subr.mxu0 0.0
        %1054 = vmatpush2.msra.mxu0 0.0
        %1055 = vmatprep.subr.mxu0 0.0
        %1056 = vmatpush2.msra.mxu0 0.0
        %1057 = vmatprep.subr.mxu0 0.0
        %1058 = vmatpush2.msra.mxu0 0.0
        %1059 = vmatprep.mubr.f32.mxu0 0.0
        %1060 = vmatmul.mubr.f32.gmra.mxu0 %v993
        %v1061 = vpop.f32.mrf.mxu0
        %v1062 = vadd.f32 %v852, %v1061
        %v1063 = vpop.f32.mrf.mxu0
        %1064 = vdwg.mxu0
        %1065 = vxpose.xlu0.b32.start [1/16] %v835, 128
        %1066 = vxpose.xlu0.b32.cont [2/16] 0.0, 128
        %1067 = vxpose.xlu0.b32.cont [3/16] 0.0, 128
        %1068 = vxpose.xlu0.b32.cont [4/16] 0.0, 128
        %1069 = vxpose.xlu0.b32.cont [5/16] 0.0, 128
        %1070 = vxpose.xlu0.b32.cont [6/16] 0.0, 128
        %1071 = vxpose.xlu0.b32.cont [7/16] 0.0, 128
        %1072 = vxpose.xlu0.b32.cont [8/16] 0.0, 128
        %1073 = vxpose.xlu0.b32.cont [9/16] 0.0, 128
        %1074 = vxpose.xlu0.b32.cont [10/16] 0.0, 128
        %1075 = vxpose.xlu0.b32.cont [11/16] 0.0, 128
        %1076 = vxpose.xlu0.b32.cont [12/16] 0.0, 128
        %1077 = vxpose.xlu0.b32.cont [13/16] 0.0, 128
        %1078 = vxpose.xlu0.b32.cont [14/16] 0.0, 128
        %1079 = vxpose.xlu0.b32.cont [15/16] 0.0, 128
        %1080 = vxpose.xlu0.b32.end [16/16] 0.0, 128
        %v1081 = vpop.trf.xlu0
        %v1082 = vpop.trf.xlu0
        %v1083 = vpop.trf.xlu0
        %v1084 = vpop.trf.xlu0
        %v1085 = vpop.trf.xlu0
        %v1086 = vpop.trf.xlu0
        %v1087 = vpop.trf.xlu0
        %v1088 = vpop.trf.xlu0
        %v1089 = vpop.trf.xlu0
        %v1090 = vpop.trf.xlu0
        %v1091 = vpop.trf.xlu0
        %v1092 = vpop.trf.xlu0
        %v1093 = vpop.trf.xlu0
        %v1094 = vpop.trf.xlu0
        %v1095 = vpop.trf.xlu0
        %v1096 = vpop.trf.xlu0
        %v1098 = vsel %vm886, %v1081, 0
        %1100 = vmatprep.subr.mxu0 0.0
        %1101 = vmatpush1.msra.mxu0 0.0
        %1102 = vmatprep.subr.mxu0 0.0
        %1103 = vmatpush1.msra.mxu0 0.0
        %1104 = vmatprep.subr.mxu0 0.0
        %1105 = vmatpush1.msra.mxu0 0.0
        %1106 = vmatprep.subr.mxu0 0.0
        %1107 = vmatpush1.msra.mxu0 0.0
        %1108 = vmatprep.subr.mxu0 0.0
        %1109 = vmatpush1.msra.mxu0 0.0
        %1110 = vmatprep.subr.mxu0 0.0
        %1111 = vmatpush1.msra.mxu0 0.0
        %1112 = vmatprep.subr.mxu0 0.0
        %1113 = vmatpush1.msra.mxu0 0.0
        %1114 = vmatprep.subr.mxu0 0.0
        %1115 = vmatpush1.msra.mxu0 0.0
        %1116 = vmatprep.subr.mxu0 0.0
        %1117 = vmatpush1.msra.mxu0 0.0
        %1118 = vmatprep.subr.mxu0 0.0
        %1119 = vmatpush1.msra.mxu0 0.0
        %1120 = vmatprep.subr.mxu0 0.0
        %1121 = vmatpush1.msra.mxu0 0.0
        %1122 = vmatprep.subr.mxu0 0.0
        %1123 = vmatpush1.msra.mxu0 0.0
        %1124 = vmatprep.subr.mxu0 0.0
        %1125 = vmatpush1.msra.mxu0 0.0
        %1126 = vmatprep.subr.mxu0 0.0
        %1127 = vmatpush1.msra.mxu0 0.0
        %1128 = vmatprep.subr.mxu0 0.0
        %1129 = vmatpush1.msra.mxu0 0.0
        %1130 = vmatprep.subr.mxu0 0.0
        %1131 = vmatpush1.msra.mxu0 %v845
        %1132 = vmatprep.subr.mxu0 0.0
        %1133 = vmatpush2.msra.mxu0 0.0
        %1134 = vmatprep.subr.mxu0 0.0
        %1135 = vmatpush2.msra.mxu0 0.0
        %1136 = vmatprep.subr.mxu0 0.0
        %1137 = vmatpush2.msra.mxu0 0.0
        %1138 = vmatprep.subr.mxu0 0.0
        %1139 = vmatpush2.msra.mxu0 0.0
        %1140 = vmatprep.subr.mxu0 0.0
        %1141 = vmatpush2.msra.mxu0 0.0
        %1142 = vmatprep.subr.mxu0 0.0
        %1143 = vmatpush2.msra.mxu0 0.0
        %1144 = vmatprep.subr.mxu0 0.0
        %1145 = vmatpush2.msra.mxu0 0.0
        %1146 = vmatprep.subr.mxu0 0.0
        %1147 = vmatpush2.msra.mxu0 0.0
        %1148 = vmatprep.subr.mxu0 0.0
        %1149 = vmatpush2.msra.mxu0 0.0
        %1150 = vmatprep.subr.mxu0 0.0
        %1151 = vmatpush2.msra.mxu0 0.0
        %1152 = vmatprep.subr.mxu0 0.0
        %1153 = vmatpush2.msra.mxu0 0.0
        %1154 = vmatprep.subr.mxu0 0.0
        %1155 = vmatpush2.msra.mxu0 0.0
        %1156 = vmatprep.subr.mxu0 0.0
        %1157 = vmatpush2.msra.mxu0 0.0
        %1158 = vmatprep.subr.mxu0 0.0
        %1159 = vmatpush2.msra.mxu0 0.0
        %1160 = vmatprep.subr.mxu0 0.0
        %1161 = vmatpush2.msra.mxu0 0.0
        %1162 = vmatprep.subr.mxu0 0.0
        %1163 = vmatpush2.msra.mxu0 0.0
        %1164 = vmatprep.mubr.f32.mxu0 0.0
        %1165 = vmatmul.mubr.f32.gmra.mxu0 %v1098
        %v1166 = vpop.f32.mrf.mxu0
        %v1167 = vadd.f32 %v852, %v1166
        %v1168 = vpop.f32.mrf.mxu0
        %1169 = vdwg.mxu0
        %1170 = vxpose.xlu0.b32.start [1/16] %v840, 128
        %1171 = vxpose.xlu0.b32.cont [2/16] 0.0, 128
        %1172 = vxpose.xlu0.b32.cont [3/16] 0.0, 128
        %1173 = vxpose.xlu0.b32.cont [4/16] 0.0, 128
        %1174 = vxpose.xlu0.b32.cont [5/16] 0.0, 128
        %1175 = vxpose.xlu0.b32.cont [6/16] 0.0, 128
        %1176 = vxpose.xlu0.b32.cont [7/16] 0.0, 128
        %1177 = vxpose.xlu0.b32.cont [8/16] 0.0, 128
        %1178 = vxpose.xlu0.b32.cont [9/16] 0.0, 128
        %1179 = vxpose.xlu0.b32.cont [10/16] 0.0, 128
        %1180 = vxpose.xlu0.b32.cont [11/16] 0.0, 128
        %1181 = vxpose.xlu0.b32.cont [12/16] 0.0, 128
        %1182 = vxpose.xlu0.b32.cont [13/16] 0.0, 128
        %1183 = vxpose.xlu0.b32.cont [14/16] 0.0, 128
        %1184 = vxpose.xlu0.b32.cont [15/16] 0.0, 128
        %1185 = vxpose.xlu0.b32.end [16/16] 0.0, 128
        %v1186 = vpop.trf.xlu0
        %v1187 = vpop.trf.xlu0
        %v1188 = vpop.trf.xlu0
        %v1189 = vpop.trf.xlu0
        %v1190 = vpop.trf.xlu0
        %v1191 = vpop.trf.xlu0
        %v1192 = vpop.trf.xlu0
        %v1193 = vpop.trf.xlu0
        %v1194 = vpop.trf.xlu0
        %v1195 = vpop.trf.xlu0
        %v1196 = vpop.trf.xlu0
        %v1197 = vpop.trf.xlu0
        %v1198 = vpop.trf.xlu0
        %v1199 = vpop.trf.xlu0
        %v1200 = vpop.trf.xlu0
        %v1201 = vpop.trf.xlu0
        %v1203 = vsel %vm886, %v1186, 0
        %1205 = vmatprep.subr.mxu0 0.0
        %1206 = vmatpush1.msra.mxu0 0.0
        %1207 = vmatprep.subr.mxu0 0.0
        %1208 = vmatpush1.msra.mxu0 0.0
        %1209 = vmatprep.subr.mxu0 0.0
        %1210 = vmatpush1.msra.mxu0 0.0
        %1211 = vmatprep.subr.mxu0 0.0
        %1212 = vmatpush1.msra.mxu0 0.0
        %1213 = vmatprep.subr.mxu0 0.0
        %1214 = vmatpush1.msra.mxu0 0.0
        %1215 = vmatprep.subr.mxu0 0.0
        %1216 = vmatpush1.msra.mxu0 0.0
        %1217 = vmatprep.subr.mxu0 0.0
        %1218 = vmatpush1.msra.mxu0 0.0
        %1219 = vmatprep.subr.mxu0 0.0
        %1220 = vmatpush1.msra.mxu0 0.0
        %1221 = vmatprep.subr.mxu0 0.0
        %1222 = vmatpush1.msra.mxu0 0.0
        %1223 = vmatprep.subr.mxu0 0.0
        %1224 = vmatpush1.msra.mxu0 0.0
        %1225 = vmatprep.subr.mxu0 0.0
        %1226 = vmatpush1.msra.mxu0 0.0
        %1227 = vmatprep.subr.mxu0 0.0
        %1228 = vmatpush1.msra.mxu0 0.0
        %1229 = vmatprep.subr.mxu0 0.0
        %1230 = vmatpush1.msra.mxu0 0.0
        %1231 = vmatprep.subr.mxu0 0.0
        %1232 = vmatpush1.msra.mxu0 0.0
        %1233 = vmatprep.subr.mxu0 0.0
        %1234 = vmatpush1.msra.mxu0 0.0
        %1235 = vmatprep.subr.mxu0 0.0
        %1236 = vmatpush1.msra.mxu0 %v846
        %1237 = vmatprep.subr.mxu0 0.0
        %1238 = vmatpush2.msra.mxu0 0.0
        %1239 = vmatprep.subr.mxu0 0.0
        %1240 = vmatpush2.msra.mxu0 0.0
        %1241 = vmatprep.subr.mxu0 0.0
        %1242 = vmatpush2.msra.mxu0 0.0
        %1243 = vmatprep.subr.mxu0 0.0
        %1244 = vmatpush2.msra.mxu0 0.0
        %1245 = vmatprep.subr.mxu0 0.0
        %1246 = vmatpush2.msra.mxu0 0.0
        %1247 = vmatprep.subr.mxu0 0.0
        %1248 = vmatpush2.msra.mxu0 0.0
        %1249 = vmatprep.subr.mxu0 0.0
        %1250 = vmatpush2.msra.mxu0 0.0
        %1251 = vmatprep.subr.mxu0 0.0
        %1252 = vmatpush2.msra.mxu0 0.0
        %1253 = vmatprep.subr.mxu0 0.0
        %1254 = vmatpush2.msra.mxu0 0.0
        %1255 = vmatprep.subr.mxu0 0.0
        %1256 = vmatpush2.msra.mxu0 0.0
        %1257 = vmatprep.subr.mxu0 0.0
        %1258 = vmatpush2.msra.mxu0 0.0
        %1259 = vmatprep.subr.mxu0 0.0
        %1260 = vmatpush2.msra.mxu0 0.0
        %1261 = vmatprep.subr.mxu0 0.0
        %1262 = vmatpush2.msra.mxu0 0.0
        %1263 = vmatprep.subr.mxu0 0.0
        %1264 = vmatpush2.msra.mxu0 0.0
        %1265 = vmatprep.subr.mxu0 0.0
        %1266 = vmatpush2.msra.mxu0 0.0
        %1267 = vmatprep.subr.mxu0 0.0
        %1268 = vmatpush2.msra.mxu0 0.0
        %1269 = vmatprep.mubr.f32.mxu0 0.0
        %1270 = vmatmul.mubr.f32.gmra.mxu0 %v1203
        %v1271 = vpop.f32.mrf.mxu0
        %v1272 = vadd.f32 %v852, %v1271
        %v1273 = vpop.f32.mrf.mxu0
        %1274 = vdwg.mxu0
        %vm1275 = vcmask 130048
        %v1276 = vsel %vm1275, %v957, -inf
        %1277 = vmax.xlane.f32.xlu0 %v1276
        %v1278 = vpop.xlane.xlu0 %1277
        %v1279 = vsel %vm1275, %v1062, -inf
        %1280 = vmax.xlane.f32.xlu0 %v1279
        %v1281 = vpop.xlane.xlu0 %1280
        %v1282 = vsel %vm1275, %v1167, -inf
        %1283 = vmax.xlane.f32.xlu0 %v1282
        %v1284 = vpop.xlane.xlu0 %1283
        %v1285 = vsel %vm1275, %v1272, -inf
        %1286 = vmax.xlane.f32.xlu0 %v1285
        %v1287 = vpop.xlane.xlu0 %1286
        %v1288 = vsub.f32 %v957, %v1278
        %v1289 = vsub.f32 %v1062, %v1281
        %v1290 = vsub.f32 %v1167, %v1284
        %v1291 = vsub.f32 %v1272, %v1287
        %v1292 = vmul.f32 %v1288, 1.442695
        %v1293 = vpow.pop %v1292
        %v1294 = vmul.f32 %v1289, 1.442695
        %v1295 = vpow.pop %v1294
        %v1296 = vmul.f32 %v1290, 1.442695
        %v1297 = vpow.pop %v1296
        %v1298 = vmul.f32 %v1291, 1.442695
        %v1299 = vpow.pop %v1298
        %v1300 = vsel %vm1275, %v1293, 0.0
        %1301 = vadd.xlane.f32.xlu0 %v1300
        %v1302 = vpop.xlane.xlu0 %1301
        %v1303 = vsel %vm1275, %v1295, 0.0
        %1304 = vadd.xlane.f32.xlu0 %v1303
        %v1305 = vpop.xlane.xlu0 %1304
        %v1306 = vsel %vm1275, %v1297, 0.0
        %1307 = vadd.xlane.f32.xlu0 %v1306
        %v1308 = vpop.xlane.xlu0 %1307
        %v1309 = vsel %vm1275, %v1299, 0.0
        %1310 = vadd.xlane.f32.xlu0 %v1309
        %v1311 = vpop.xlane.xlu0 %1310
        %v1312 = vrcp.pop %v1302
        %v1313 = vmul.f32 1.0, %v1312
        %v1314 = vrcp.pop %v1305
        %v1315 = vmul.f32 1.0, %v1314
        %v1316 = vrcp.pop %v1308
        %v1317 = vmul.f32 1.0, %v1316
        %v1318 = vrcp.pop %v1311
        %v1319 = vmul.f32 1.0, %v1318
        %v1320 = vmul.f32 %v1293, %v1313
        %v1321 = vmul.f32 %v1295, %v1315
        %v1322 = vmul.f32 %v1297, %v1317
        %v1323 = vmul.f32 %v1299, %v1319
        %v1324 = vld [vmem:[#allocation3] sm:$0xff]
        %v1325 = vld [vmem:[#allocation3 + $0x8] sm:$0xff]
        %v1326 = vld [vmem:[#allocation3 + $0x10] sm:$0xff]
        %v1327 = vld [vmem:[#allocation3 + $0x18] sm:$0xff]
        %v1329 = vsel %vm1275, %v1324, 0
        %v1332 = vsel %vm1275, %v1320, 0
        %1334 = vmatprep.subr.mxu0 0.0
        %1335 = vmatpush1.xpose.msra.mxu0 0.0
        %1336 = vmatprep.subr.mxu0 0.0
        %1337 = vmatpush1.xpose.msra.mxu0 0.0
        %1338 = vmatprep.subr.mxu0 0.0
        %1339 = vmatpush1.xpose.msra.mxu0 0.0
        %1340 = vmatprep.subr.mxu0 0.0
        %1341 = vmatpush1.xpose.msra.mxu0 0.0
        %1342 = vmatprep.subr.mxu0 0.0
        %1343 = vmatpush1.xpose.msra.mxu0 0.0
        %1344 = vmatprep.subr.mxu0 0.0
        %1345 = vmatpush1.xpose.msra.mxu0 0.0
        %1346 = vmatprep.subr.mxu0 0.0
        %1347 = vmatpush1.xpose.msra.mxu0 0.0
        %1348 = vmatprep.subr.mxu0 0.0
        %1349 = vmatpush1.xpose.msra.mxu0 0.0
        %1350 = vmatprep.subr.mxu0 0.0
        %1351 = vmatpush1.xpose.msra.mxu0 0.0
        %1352 = vmatprep.subr.mxu0 0.0
        %1353 = vmatpush1.xpose.msra.mxu0 0.0
        %1354 = vmatprep.subr.mxu0 0.0
        %1355 = vmatpush1.xpose.msra.mxu0 0.0
        %1356 = vmatprep.subr.mxu0 0.0
        %1357 = vmatpush1.xpose.msra.mxu0 0.0
        %1358 = vmatprep.subr.mxu0 0.0
        %1359 = vmatpush1.xpose.msra.mxu0 0.0
        %1360 = vmatprep.subr.mxu0 0.0
        %1361 = vmatpush1.xpose.msra.mxu0 0.0
        %1362 = vmatprep.subr.mxu0 0.0
        %1363 = vmatpush1.xpose.msra.mxu0 0.0
        %1364 = vmatprep.subr.mxu0 0.0
        %1365 = vmatpush1.xpose.msra.mxu0 %v1332
        %1366 = vmatprep.subr.mxu0 0.0
        %1367 = vmatpush2.xpose.msra.mxu0 0.0
        %1368 = vmatprep.subr.mxu0 0.0
        %1369 = vmatpush2.xpose.msra.mxu0 0.0
        %1370 = vmatprep.subr.mxu0 0.0
        %1371 = vmatpush2.xpose.msra.mxu0 0.0
        %1372 = vmatprep.subr.mxu0 0.0
        %1373 = vmatpush2.xpose.msra.mxu0 0.0
        %1374 = vmatprep.subr.mxu0 0.0
        %1375 = vmatpush2.xpose.msra.mxu0 0.0
        %1376 = vmatprep.subr.mxu0 0.0
        %1377 = vmatpush2.xpose.msra.mxu0 0.0
        %1378 = vmatprep.subr.mxu0 0.0
        %1379 = vmatpush2.xpose.msra.mxu0 0.0
        %1380 = vmatprep.subr.mxu0 0.0
        %1381 = vmatpush2.xpose.msra.mxu0 0.0
        %1382 = vmatprep.subr.mxu0 0.0
        %1383 = vmatpush2.xpose.msra.mxu0 0.0
        %1384 = vmatprep.subr.mxu0 0.0
        %1385 = vmatpush2.xpose.msra.mxu0 0.0
        %1386 = vmatprep.subr.mxu0 0.0
        %1387 = vmatpush2.xpose.msra.mxu0 0.0
        %1388 = vmatprep.subr.mxu0 0.0
        %1389 = vmatpush2.xpose.msra.mxu0 0.0
        %1390 = vmatprep.subr.mxu0 0.0
        %1391 = vmatpush2.xpose.msra.mxu0 0.0
        %1392 = vmatprep.subr.mxu0 0.0
        %1393 = vmatpush2.xpose.msra.mxu0 0.0
        %1394 = vmatprep.subr.mxu0 0.0
        %1395 = vmatpush2.xpose.msra.mxu0 0.0
        %1396 = vmatprep.subr.mxu0 0.0
        %1397 = vmatpush2.xpose.msra.mxu0 0.0
        %1398 = vmatprep.mubr.f32.mxu0 0.0
        %1399 = vmatmul.mubr.f32.gmra.mxu0 %v1329
        %v1400 = vpop.f32.mrf.mxu0
        %v1401 = vadd.f32 0.0, %v1400
        %v1402 = vpop.f32.mrf.mxu0
        %1403 = vdwg.mxu0
        %v1405 = vsel %vm1275, %v1325, 0
        %v1408 = vsel %vm1275, %v1321, 0
        %1410 = vmatprep.subr.mxu0 0.0
        %1411 = vmatpush1.xpose.msra.mxu0 0.0
        %1412 = vmatprep.subr.mxu0 0.0
        %1413 = vmatpush1.xpose.msra.mxu0 0.0
        %1414 = vmatprep.subr.mxu0 0.0
        %1415 = vmatpush1.xpose.msra.mxu0 0.0
        %1416 = vmatprep.subr.mxu0 0.0
        %1417 = vmatpush1.xpose.msra.mxu0 0.0
        %1418 = vmatprep.subr.mxu0 0.0
        %1419 = vmatpush1.xpose.msra.mxu0 0.0
        %1420 = vmatprep.subr.mxu0 0.0
        %1421 = vmatpush1.xpose.msra.mxu0 0.0
        %1422 = vmatprep.subr.mxu0 0.0
        %1423 = vmatpush1.xpose.msra.mxu0 0.0
        %1424 = vmatprep.subr.mxu0 0.0
        %1425 = vmatpush1.xpose.msra.mxu0 0.0
        %1426 = vmatprep.subr.mxu0 0.0
        %1427 = vmatpush1.xpose.msra.mxu0 0.0
        %1428 = vmatprep.subr.mxu0 0.0
        %1429 = vmatpush1.xpose.msra.mxu0 0.0
        %1430 = vmatprep.subr.mxu0 0.0
        %1431 = vmatpush1.xpose.msra.mxu0 0.0
        %1432 = vmatprep.subr.mxu0 0.0
        %1433 = vmatpush1.xpose.msra.mxu0 0.0
        %1434 = vmatprep.subr.mxu0 0.0
        %1435 = vmatpush1.xpose.msra.mxu0 0.0
        %1436 = vmatprep.subr.mxu0 0.0
        %1437 = vmatpush1.xpose.msra.mxu0 0.0
        %1438 = vmatprep.subr.mxu0 0.0
        %1439 = vmatpush1.xpose.msra.mxu0 0.0
        %1440 = vmatprep.subr.mxu0 0.0
        %1441 = vmatpush1.xpose.msra.mxu0 %v1408
        %1442 = vmatprep.subr.mxu0 0.0
        %1443 = vmatpush2.xpose.msra.mxu0 0.0
        %1444 = vmatprep.subr.mxu0 0.0
        %1445 = vmatpush2.xpose.msra.mxu0 0.0
        %1446 = vmatprep.subr.mxu0 0.0
        %1447 = vmatpush2.xpose.msra.mxu0 0.0
        %1448 = vmatprep.subr.mxu0 0.0
        %1449 = vmatpush2.xpose.msra.mxu0 0.0
        %1450 = vmatprep.subr.mxu0 0.0
        %1451 = vmatpush2.xpose.msra.mxu0 0.0
        %1452 = vmatprep.subr.mxu0 0.0
        %1453 = vmatpush2.xpose.msra.mxu0 0.0
        %1454 = vmatprep.subr.mxu0 0.0
        %1455 = vmatpush2.xpose.msra.mxu0 0.0
        %1456 = vmatprep.subr.mxu0 0.0
        %1457 = vmatpush2.xpose.msra.mxu0 0.0
        %1458 = vmatprep.subr.mxu0 0.0
        %1459 = vmatpush2.xpose.msra.mxu0 0.0
        %1460 = vmatprep.subr.mxu0 0.0
        %1461 = vmatpush2.xpose.msra.mxu0 0.0
        %1462 = vmatprep.subr.mxu0 0.0
        %1463 = vmatpush2.xpose.msra.mxu0 0.0
        %1464 = vmatprep.subr.mxu0 0.0
        %1465 = vmatpush2.xpose.msra.mxu0 0.0
        %1466 = vmatprep.subr.mxu0 0.0
        %1467 = vmatpush2.xpose.msra.mxu0 0.0
        %1468 = vmatprep.subr.mxu0 0.0
        %1469 = vmatpush2.xpose.msra.mxu0 0.0
        %1470 = vmatprep.subr.mxu0 0.0
        %1471 = vmatpush2.xpose.msra.mxu0 0.0
        %1472 = vmatprep.subr.mxu0 0.0
        %1473 = vmatpush2.xpose.msra.mxu0 0.0
        %1474 = vmatprep.mubr.f32.mxu0 0.0
        %1475 = vmatmul.mubr.f32.gmra.mxu0 %v1405
        %v1476 = vpop.f32.mrf.mxu0
        %v1477 = vadd.f32 0.0, %v1476
        %v1478 = vpop.f32.mrf.mxu0
        %1479 = vdwg.mxu0
        %v1481 = vsel %vm1275, %v1326, 0
        %v1484 = vsel %vm1275, %v1322, 0
        %1486 = vmatprep.subr.mxu0 0.0
        %1487 = vmatpush1.xpose.msra.mxu0 0.0
        %1488 = vmatprep.subr.mxu0 0.0
        %1489 = vmatpush1.xpose.msra.mxu0 0.0
        %1490 = vmatprep.subr.mxu0 0.0
        %1491 = vmatpush1.xpose.msra.mxu0 0.0
        %1492 = vmatprep.subr.mxu0 0.0
        %1493 = vmatpush1.xpose.msra.mxu0 0.0
        %1494 = vmatprep.subr.mxu0 0.0
        %1495 = vmatpush1.xpose.msra.mxu0 0.0
        %1496 = vmatprep.subr.mxu0 0.0
        %1497 = vmatpush1.xpose.msra.mxu0 0.0
        %1498 = vmatprep.subr.mxu0 0.0
        %1499 = vmatpush1.xpose.msra.mxu0 0.0
        %1500 = vmatprep.subr.mxu0 0.0
        %1501 = vmatpush1.xpose.msra.mxu0 0.0
        %1502 = vmatprep.subr.mxu0 0.0
        %1503 = vmatpush1.xpose.msra.mxu0 0.0
        %1504 = vmatprep.subr.mxu0 0.0
        %1505 = vmatpush1.xpose.msra.mxu0 0.0
        %1506 = vmatprep.subr.mxu0 0.0
        %1507 = vmatpush1.xpose.msra.mxu0 0.0
        %1508 = vmatprep.subr.mxu0 0.0
        %1509 = vmatpush1.xpose.msra.mxu0 0.0
        %1510 = vmatprep.subr.mxu0 0.0
        %1511 = vmatpush1.xpose.msra.mxu0 0.0
        %1512 = vmatprep.subr.mxu0 0.0
        %1513 = vmatpush1.xpose.msra.mxu0 0.0
        %1514 = vmatprep.subr.mxu0 0.0
        %1515 = vmatpush1.xpose.msra.mxu0 0.0
        %1516 = vmatprep.subr.mxu0 0.0
        %1517 = vmatpush1.xpose.msra.mxu0 %v1484
        %1518 = vmatprep.subr.mxu0 0.0
        %1519 = vmatpush2.xpose.msra.mxu0 0.0
        %1520 = vmatprep.subr.mxu0 0.0
        %1521 = vmatpush2.xpose.msra.mxu0 0.0
        %1522 = vmatprep.subr.mxu0 0.0
        %1523 = vmatpush2.xpose.msra.mxu0 0.0
        %1524 = vmatprep.subr.mxu0 0.0
        %1525 = vmatpush2.xpose.msra.mxu0 0.0
        %1526 = vmatprep.subr.mxu0 0.0
        %1527 = vmatpush2.xpose.msra.mxu0 0.0
        %1528 = vmatprep.subr.mxu0 0.0
        %1529 = vmatpush2.xpose.msra.mxu0 0.0
        %1530 = vmatprep.subr.mxu0 0.0
        %1531 = vmatpush2.xpose.msra.mxu0 0.0
        %1532 = vmatprep.subr.mxu0 0.0
        %1533 = vmatpush2.xpose.msra.mxu0 0.0
        %1534 = vmatprep.subr.mxu0 0.0
        %1535 = vmatpush2.xpose.msra.mxu0 0.0
        %1536 = vmatprep.subr.mxu0 0.0
        %1537 = vmatpush2.xpose.msra.mxu0 0.0
        %1538 = vmatprep.subr.mxu0 0.0
        %1539 = vmatpush2.xpose.msra.mxu0 0.0
        %1540 = vmatprep.subr.mxu0 0.0
        %1541 = vmatpush2.xpose.msra.mxu0 0.0
        %1542 = vmatprep.subr.mxu0 0.0
        %1543 = vmatpush2.xpose.msra.mxu0 0.0
        %1544 = vmatprep.subr.mxu0 0.0
        %1545 = vmatpush2.xpose.msra.mxu0 0.0
        %1546 = vmatprep.subr.mxu0 0.0
        %1547 = vmatpush2.xpose.msra.mxu0 0.0
        %1548 = vmatprep.subr.mxu0 0.0
        %1549 = vmatpush2.xpose.msra.mxu0 0.0
        %1550 = vmatprep.mubr.f32.mxu0 0.0
        %1551 = vmatmul.mubr.f32.gmra.mxu0 %v1481
        %v1552 = vpop.f32.mrf.mxu0
        %v1553 = vadd.f32 0.0, %v1552
        %v1554 = vpop.f32.mrf.mxu0
        %1555 = vdwg.mxu0
        %v1557 = vsel %vm1275, %v1327, 0
        %v1560 = vsel %vm1275, %v1323, 0
        %1562 = vmatprep.subr.mxu0 0.0
        %1563 = vmatpush1.xpose.msra.mxu0 0.0
        %1564 = vmatprep.subr.mxu0 0.0
        %1565 = vmatpush1.xpose.msra.mxu0 0.0
        %1566 = vmatprep.subr.mxu0 0.0
        %1567 = vmatpush1.xpose.msra.mxu0 0.0
        %1568 = vmatprep.subr.mxu0 0.0
        %1569 = vmatpush1.xpose.msra.mxu0 0.0
        %1570 = vmatprep.subr.mxu0 0.0
        %1571 = vmatpush1.xpose.msra.mxu0 0.0
        %1572 = vmatprep.subr.mxu0 0.0
        %1573 = vmatpush1.xpose.msra.mxu0 0.0
        %1574 = vmatprep.subr.mxu0 0.0
        %1575 = vmatpush1.xpose.msra.mxu0 0.0
        %1576 = vmatprep.subr.mxu0 0.0
        %1577 = vmatpush1.xpose.msra.mxu0 0.0
        %1578 = vmatprep.subr.mxu0 0.0
        %1579 = vmatpush1.xpose.msra.mxu0 0.0
        %1580 = vmatprep.subr.mxu0 0.0
        %1581 = vmatpush1.xpose.msra.mxu0 0.0
        %1582 = vmatprep.subr.mxu0 0.0
        %1583 = vmatpush1.xpose.msra.mxu0 0.0
        %1584 = vmatprep.subr.mxu0 0.0
        %1585 = vmatpush1.xpose.msra.mxu0 0.0
        %1586 = vmatprep.subr.mxu0 0.0
        %1587 = vmatpush1.xpose.msra.mxu0 0.0
        %1588 = vmatprep.subr.mxu0 0.0
        %1589 = vmatpush1.xpose.msra.mxu0 0.0
        %1590 = vmatprep.subr.mxu0 0.0
        %1591 = vmatpush1.xpose.msra.mxu0 0.0
        %1592 = vmatprep.subr.mxu0 0.0
        %1593 = vmatpush1.xpose.msra.mxu0 %v1560
        %1594 = vmatprep.subr.mxu0 0.0
        %1595 = vmatpush2.xpose.msra.mxu0 0.0
        %1596 = vmatprep.subr.mxu0 0.0
        %1597 = vmatpush2.xpose.msra.mxu0 0.0
        %1598 = vmatprep.subr.mxu0 0.0
        %1599 = vmatpush2.xpose.msra.mxu0 0.0
        %1600 = vmatprep.subr.mxu0 0.0
        %1601 = vmatpush2.xpose.msra.mxu0 0.0
        %1602 = vmatprep.subr.mxu0 0.0
        %1603 = vmatpush2.xpose.msra.mxu0 0.0
        %1604 = vmatprep.subr.mxu0 0.0
        %1605 = vmatpush2.xpose.msra.mxu0 0.0
        %1606 = vmatprep.subr.mxu0 0.0
        %1607 = vmatpush2.xpose.msra.mxu0 0.0
        %1608 = vmatprep.subr.mxu0 0.0
        %1609 = vmatpush2.xpose.msra.mxu0 0.0
        %1610 = vmatprep.subr.mxu0 0.0
        %1611 = vmatpush2.xpose.msra.mxu0 0.0
        %1612 = vmatprep.subr.mxu0 0.0
        %1613 = vmatpush2.xpose.msra.mxu0 0.0
        %1614 = vmatprep.subr.mxu0 0.0
        %1615 = vmatpush2.xpose.msra.mxu0 0.0
        %1616 = vmatprep.subr.mxu0 0.0
        %1617 = vmatpush2.xpose.msra.mxu0 0.0
        %1618 = vmatprep.subr.mxu0 0.0
        %1619 = vmatpush2.xpose.msra.mxu0 0.0
        %1620 = vmatprep.subr.mxu0 0.0
        %1621 = vmatpush2.xpose.msra.mxu0 0.0
        %1622 = vmatprep.subr.mxu0 0.0
        %1623 = vmatpush2.xpose.msra.mxu0 0.0
        %1624 = vmatprep.subr.mxu0 0.0
        %1625 = vmatpush2.xpose.msra.mxu0 0.0
        %1626 = vmatprep.mubr.f32.mxu0 0.0
        %1627 = vmatmul.mubr.f32.gmra.mxu0 %v1557
        %v1628 = vpop.f32.mrf.mxu0
        %v1629 = vadd.f32 0.0, %v1628
        %v1630 = vpop.f32.mrf.mxu0
        %1631 = vdwg.mxu0
        %v1632 = vld [vmem:[%s6] sm:$0xff]
        %v1633 = vld [vmem:[%s6 + $0x8] sm:$0xff]
        %v1634 = vld [vmem:[%s6 + $0x10] sm:$0xff]
        %v1635 = vld [vmem:[%s6 + $0x18] sm:$0xff]
        %v1636 = vlaneseq
        %v1637 = vshrl.u32 %v1636, 7
        %v1638 = vsub.s32 0, %v1637
        %v1639 = vrot.slane %v417, %v1638
        %1640 = vxpose.xlu0.b32.start [1/16] %v1401, 128
        %1641 = vxpose.xlu0.b32.cont [2/16] %v1477, 128
        %1642 = vxpose.xlu0.b32.cont [3/16] %v1553, 128
        %1643 = vxpose.xlu0.b32.cont [4/16] %v1629, 128
        %1644 = vxpose.xlu0.b32.cont [5/16] 0.0, 128
        %1645 = vxpose.xlu0.b32.cont [6/16] 0.0, 128
        %1646 = vxpose.xlu0.b32.cont [7/16] 0.0, 128
        %1647 = vxpose.xlu0.b32.cont [8/16] 0.0, 128
        %1648 = vxpose.xlu0.b32.cont [9/16] 0.0, 128
        %1649 = vxpose.xlu0.b32.cont [10/16] 0.0, 128
        %1650 = vxpose.xlu0.b32.cont [11/16] 0.0, 128
        %1651 = vxpose.xlu0.b32.cont [12/16] 0.0, 128
        %1652 = vxpose.xlu0.b32.cont [13/16] 0.0, 128
        %1653 = vxpose.xlu0.b32.cont [14/16] 0.0, 128
        %1654 = vxpose.xlu0.b32.cont [15/16] 0.0, 128
        %1655 = vxpose.xlu0.b32.end [16/16] 0.0, 128
        %v1656 = vpop.trf.xlu0
        %v1657 = vpop.trf.xlu0
        %v1658 = vpop.trf.xlu0
        %v1659 = vpop.trf.xlu0
        %v1660 = vpop.trf.xlu0
        %v1661 = vpop.trf.xlu0
        %v1662 = vpop.trf.xlu0
        %v1663 = vpop.trf.xlu0
        %v1664 = vpop.trf.xlu0
        %v1665 = vpop.trf.xlu0
        %v1666 = vpop.trf.xlu0
        %v1667 = vpop.trf.xlu0
        %v1668 = vpop.trf.xlu0
        %v1669 = vpop.trf.xlu0
        %v1670 = vpop.trf.xlu0
        %v1671 = vpop.trf.xlu0
        %v1673 = vsel %vm683, %v1656, 0
        %1675 = vmatprep.subr.mxu0 0.0
        %1676 = vmatpush1.msra.mxu0 0.0
        %1677 = vmatprep.subr.mxu0 0.0
        %1678 = vmatpush1.msra.mxu0 0.0
        %1679 = vmatprep.subr.mxu0 0.0
        %1680 = vmatpush1.msra.mxu0 0.0
        %1681 = vmatprep.subr.mxu0 0.0
        %1682 = vmatpush1.msra.mxu0 0.0
        %1683 = vmatprep.subr.mxu0 0.0
        %1684 = vmatpush1.msra.mxu0 0.0
        %1685 = vmatprep.subr.mxu0 0.0
        %1686 = vmatpush1.msra.mxu0 0.0
        %1687 = vmatprep.subr.mxu0 0.0
        %1688 = vmatpush1.msra.mxu0 0.0
        %1689 = vmatprep.subr.mxu0 0.0
        %1690 = vmatpush1.msra.mxu0 0.0
        %1691 = vmatprep.subr.mxu0 0.0
        %1692 = vmatpush1.msra.mxu0 0.0
        %1693 = vmatprep.subr.mxu0 0.0
        %1694 = vmatpush1.msra.mxu0 0.0
        %1695 = vmatprep.subr.mxu0 0.0
        %1696 = vmatpush1.msra.mxu0 0.0
        %1697 = vmatprep.subr.mxu0 0.0
        %1698 = vmatpush1.msra.mxu0 0.0
        %1699 = vmatprep.subr.mxu0 0.0
        %1700 = vmatpush1.msra.mxu0 %v1635
        %1701 = vmatprep.subr.mxu0 0.0
        %1702 = vmatpush1.msra.mxu0 %v1634
        %1703 = vmatprep.subr.mxu0 0.0
        %1704 = vmatpush1.msra.mxu0 %v1633
        %1705 = vmatprep.subr.mxu0 0.0
        %1706 = vmatpush1.msra.mxu0 %v1632
        %1707 = vmatprep.subr.mxu0 0.0
        %1708 = vmatpush2.msra.mxu0 0.0
        %1709 = vmatprep.subr.mxu0 0.0
        %1710 = vmatpush2.msra.mxu0 0.0
        %1711 = vmatprep.subr.mxu0 0.0
        %1712 = vmatpush2.msra.mxu0 0.0
        %1713 = vmatprep.subr.mxu0 0.0
        %1714 = vmatpush2.msra.mxu0 0.0
        %1715 = vmatprep.subr.mxu0 0.0
        %1716 = vmatpush2.msra.mxu0 0.0
        %1717 = vmatprep.subr.mxu0 0.0
        %1718 = vmatpush2.msra.mxu0 0.0
        %1719 = vmatprep.subr.mxu0 0.0
        %1720 = vmatpush2.msra.mxu0 0.0
        %1721 = vmatprep.subr.mxu0 0.0
        %1722 = vmatpush2.msra.mxu0 0.0
        %1723 = vmatprep.subr.mxu0 0.0
        %1724 = vmatpush2.msra.mxu0 0.0
        %1725 = vmatprep.subr.mxu0 0.0
        %1726 = vmatpush2.msra.mxu0 0.0
        %1727 = vmatprep.subr.mxu0 0.0
        %1728 = vmatpush2.msra.mxu0 0.0
        %1729 = vmatprep.subr.mxu0 0.0
        %1730 = vmatpush2.msra.mxu0 0.0
        %1731 = vmatprep.subr.mxu0 0.0
        %1732 = vmatpush2.msra.mxu0 0.0
        %1733 = vmatprep.subr.mxu0 0.0
        %1734 = vmatpush2.msra.mxu0 0.0
        %1735 = vmatprep.subr.mxu0 0.0
        %1736 = vmatpush2.msra.mxu0 0.0
        %1737 = vmatprep.subr.mxu0 0.0
        %1738 = vmatpush2.msra.mxu0 0.0
        %1739 = vmatprep.mubr.f32.mxu0 0.0
        %1740 = vmatmul.mubr.f32.gmra.mxu0 %v1673
        %v1741 = vpop.f32.mrf.mxu0
        %v1742 = vadd.f32 %v1639, %v1741
        %v1743 = vpop.f32.mrf.mxu0
        %1744 = vdwg.mxu0
        %v1745 = vadd.f32 %v682, %v1742
        %v1746 = vsel %vm683, %v1745, 0.0
        %1747 = vadd.xlane.f32.xlu0 %v1746
        %v1748 = vpop.xlane.xlu0 %1747
        %v1749 = vmul.f32 %v1748, 0.03125
        %v1750 = vsub.f32 %v1745, %v1749
        %v1751 = vmul.f32 %v1750, %v1750
        %v1752 = vsel %vm683, %v1751, 0.0
        %1753 = vadd.xlane.f32.xlu0 %v1752
        %v1754 = vpop.xlane.xlu0 %1753
        %v1755 = vmul.f32 %v1754, 0.032258064
        %v1756 = vrsqrt.pop %v1755
        %v1757 = vmul.f32 %v1755, %v1756
        %vm1758 = vcmp.eq.f32.partialorder %v1755, inf
        %v1759 = vsel %vm1758, %v1755, %v1757
        %vm1760 = vcmp.eq.f32.partialorder %v1755, 0.0
        %v1761 = vand.u32 %v1755, 2147483648
        %v1762 = vsel %vm1760, %v1761, %v1759
        %v1763 = vadd.f32 %v1762, 1e-06
        %v1764 = vrcp.pop %v1763
        %v1765 = vmul.f32 1.0, %v1764
        %v1766 = vmul.f32 %v1750, %v1765
        %v1767 = vlaneseq
        %v1768 = vshrl.u32 %v1767, 7
        %v1769 = vsub.s32 0, %v1768
        %v1770 = vrot.slane %v415, %v1769
        %v1771 = vmul.f32 %v1770, %v1766
        %v1772 = vlaneseq
        %v1773 = vshrl.u32 %v1772, 7
        %v1774 = vsub.s32 0, %v1773
        %v1775 = vrot.slane %v416, %v1774
        %v1776 = vadd.f32 %v1771, %v1775
        %v1777 = vld [vmem:[%s7] sm:$0xff]
        %v1778 = vld [vmem:[%s7 + $0x8] sm:$0xff]
        %v1779 = vld [vmem:[%s7 + $0x10] sm:$0xff]
        %v1780 = vld [vmem:[%s7 + $0x18] sm:$0xff]
        %v1781 = vld [vmem:[%s8] sm:$0x1]
        %v1783 = vlaneseq
        %v1784 = vshrl.u32 %v1783, 7
        %v1785 = vsub.s32 0, %v1784
        %v1786 = vrot.slane %v1781, %v1785
        %v1789 = vsel %vm683, %v1776, 0
        %1791 = vmatprep.subr.mxu0 0.0
        %1792 = vmatpush1.msra.mxu0 0.0
        %1793 = vmatprep.subr.mxu0 0.0
        %1794 = vmatpush1.msra.mxu0 0.0
        %1795 = vmatprep.subr.mxu0 0.0
        %1796 = vmatpush1.msra.mxu0 0.0
        %1797 = vmatprep.subr.mxu0 0.0
        %1798 = vmatpush1.msra.mxu0 0.0
        %1799 = vmatprep.subr.mxu0 0.0
        %1800 = vmatpush1.msra.mxu0 0.0
        %1801 = vmatprep.subr.mxu0 0.0
        %1802 = vmatpush1.msra.mxu0 0.0
        %1803 = vmatprep.subr.mxu0 0.0
        %1804 = vmatpush1.msra.mxu0 0.0
        %1805 = vmatprep.subr.mxu0 0.0
        %1806 = vmatpush1.msra.mxu0 0.0
        %1807 = vmatprep.subr.mxu0 0.0
        %1808 = vmatpush1.msra.mxu0 0.0
        %1809 = vmatprep.subr.mxu0 0.0
        %1810 = vmatpush1.msra.mxu0 0.0
        %1811 = vmatprep.subr.mxu0 0.0
        %1812 = vmatpush1.msra.mxu0 0.0
        %1813 = vmatprep.subr.mxu0 0.0
        %1814 = vmatpush1.msra.mxu0 0.0
        %1815 = vmatprep.subr.mxu0 0.0
        %1816 = vmatpush1.msra.mxu0 %v1780
        %1817 = vmatprep.subr.mxu0 0.0
        %1818 = vmatpush1.msra.mxu0 %v1779
        %1819 = vmatprep.subr.mxu0 0.0
        %1820 = vmatpush1.msra.mxu0 %v1778
        %1821 = vmatprep.subr.mxu0 0.0
        %1822 = vmatpush1.msra.mxu0 %v1777
        %1823 = vmatprep.subr.mxu0 0.0
        %1824 = vmatpush2.msra.mxu0 0.0
        %1825 = vmatprep.subr.mxu0 0.0
        %1826 = vmatpush2.msra.mxu0 0.0
        %1827 = vmatprep.subr.mxu0 0.0
        %1828 = vmatpush2.msra.mxu0 0.0
        %1829 = vmatprep.subr.mxu0 0.0
        %1830 = vmatpush2.msra.mxu0 0.0
        %1831 = vmatprep.subr.mxu0 0.0
        %1832 = vmatpush2.msra.mxu0 0.0
        %1833 = vmatprep.subr.mxu0 0.0
        %1834 = vmatpush2.msra.mxu0 0.0
        %1835 = vmatprep.subr.mxu0 0.0
        %1836 = vmatpush2.msra.mxu0 0.0
        %1837 = vmatprep.subr.mxu0 0.0
        %1838 = vmatpush2.msra.mxu0 0.0
        %1839 = vmatprep.subr.mxu0 0.0
        %1840 = vmatpush2.msra.mxu0 0.0
        %1841 = vmatprep.subr.mxu0 0.0
        %1842 = vmatpush2.msra.mxu0 0.0
        %1843 = vmatprep.subr.mxu0 0.0
        %1844 = vmatpush2.msra.mxu0 0.0
        %1845 = vmatprep.subr.mxu0 0.0
        %1846 = vmatpush2.msra.mxu0 0.0
        %1847 = vmatprep.subr.mxu0 0.0
        %1848 = vmatpush2.msra.mxu0 0.0
        %1849 = vmatprep.subr.mxu0 0.0
        %1850 = vmatpush2.msra.mxu0 0.0
        %1851 = vmatprep.subr.mxu0 0.0
        %1852 = vmatpush2.msra.mxu0 0.0
        %1853 = vmatprep.subr.mxu0 0.0
        %1854 = vmatpush2.msra.mxu0 0.0
        %1855 = vmatprep.mubr.f32.mxu0 0.0
        %1856 = vmatmul.mubr.f32.gmra.mxu0 %v1789
        %v1857 = vpop.f32.mrf.mxu0
        %v1858 = vadd.f32 %v1786, %v1857
        %v1859 = vpop.f32.mrf.mxu0
        %1860 = vdwg.mxu0
        %v1861 = vmul.f32 %v1858, 0.5
        %v1862 = vmul.f32 %v1858, %v1858
        %v1863 = vmul.f32 %v1862, %v1858
        %v1864 = vmul.f32 %v1863, 0.044715
        %v1865 = vadd.f32 %v1858, %v1864
        %v1866 = vmul.f32 %v1865, 0.7978846
        %v1867 = vtanh.pop %v1866
        %v1868 = vadd.f32 %v1867, 1.0
        %v1869 = vmul.f32 %v1861, %v1868
        %v1870 = vld [vmem:[%s9] sm:$0xff]
        %v1871 = vld [vmem:[%s9 + $0x8] sm:$0xff]
        %v1872 = vld [vmem:[%s9 + $0x10] sm:$0xff]
        %v1873 = vld [vmem:[%s9 + $0x18] sm:$0xff]
        %v1874 = vld [vmem:[%s9 + $0x20] sm:$0xff]
        %v1875 = vld [vmem:[%s9 + $0x28] sm:$0xff]
        %v1876 = vld [vmem:[%s9 + $0x30] sm:$0xff]
        %v1877 = vld [vmem:[%s9 + $0x38] sm:$0xff]
        %v1878 = vld [vmem:[%s9 + $0x40] sm:$0xff]
        %v1879 = vld [vmem:[%s9 + $0x48] sm:$0xff]
        %v1880 = vld [vmem:[%s9 + $0x50] sm:$0xff]
        %v1881 = vld [vmem:[%s9 + $0x58] sm:$0xff]
        %v1882 = vld [vmem:[%s9 + $0x60] sm:$0xff]
        %v1883 = vld [vmem:[%s9 + $0x68] sm:$0xff]
        %v1884 = vld [vmem:[%s9 + $0x70] sm:$0xff]
        %v1885 = vld [vmem:[%s9 + $0x78] sm:$0xff]
        %v1886 = vlaneseq
        %v1887 = vshrl.u32 %v1886, 7
        %v1888 = vsub.s32 0, %v1887
        %v1889 = vrot.slane %v418, %v1888
        %1890 = vmatprep.subr.mxu0 0.0
        %1891 = vmatpush1.msra.mxu0 %v1885
        %1892 = vmatprep.subr.mxu0 0.0
        %1893 = vmatpush1.msra.mxu0 %v1884
        %1894 = vmatprep.subr.mxu0 0.0
        %1895 = vmatpush1.msra.mxu0 %v1883
        %1896 = vmatprep.subr.mxu0 0.0
        %1897 = vmatpush1.msra.mxu0 %v1882
        %1898 = vmatprep.subr.mxu0 0.0
        %1899 = vmatpush1.msra.mxu0 %v1881
        %1900 = vmatprep.subr.mxu0 0.0
        %1901 = vmatpush1.msra.mxu0 %v1880
        %1902 = vmatprep.subr.mxu0 0.0
        %1903 = vmatpush1.msra.mxu0 %v1879
        %1904 = vmatprep.subr.mxu0 0.0
        %1905 = vmatpush1.msra.mxu0 %v1878
        %1906 = vmatprep.subr.mxu0 0.0
        %1907 = vmatpush1.msra.mxu0 %v1877
        %1908 = vmatprep.subr.mxu0 0.0
        %1909 = vmatpush1.msra.mxu0 %v1876
        %1910 = vmatprep.subr.mxu0 0.0
        %1911 = vmatpush1.msra.mxu0 %v1875
        %1912 = vmatprep.subr.mxu0 0.0
        %1913 = vmatpush1.msra.mxu0 %v1874
        %1914 = vmatprep.subr.mxu0 0.0
        %1915 = vmatpush1.msra.mxu0 %v1873
        %1916 = vmatprep.subr.mxu0 0.0
        %1917 = vmatpush1.msra.mxu0 %v1872
        %1918 = vmatprep.subr.mxu0 0.0
        %1919 = vmatpush1.msra.mxu0 %v1871
        %1920 = vmatprep.subr.mxu0 0.0
        %1921 = vmatpush1.msra.mxu0 %v1870
        %1922 = vmatprep.subr.mxu0 0.0
        %1923 = vmatpush2.msra.mxu0 0.0
        %1924 = vmatprep.subr.mxu0 0.0
        %1925 = vmatpush2.msra.mxu0 0.0
        %1926 = vmatprep.subr.mxu0 0.0
        %1927 = vmatpush2.msra.mxu0 0.0
        %1928 = vmatprep.subr.mxu0 0.0
        %1929 = vmatpush2.msra.mxu0 0.0
        %1930 = vmatprep.subr.mxu0 0.0
        %1931 = vmatpush2.msra.mxu0 0.0
        %1932 = vmatprep.subr.mxu0 0.0
        %1933 = vmatpush2.msra.mxu0 0.0
        %1934 = vmatprep.subr.mxu0 0.0
        %1935 = vmatpush2.msra.mxu0 0.0
        %1936 = vmatprep.subr.mxu0 0.0
        %1937 = vmatpush2.msra.mxu0 0.0
        %1938 = vmatprep.subr.mxu0 0.0
        %1939 = vmatpush2.msra.mxu0 0.0
        %1940 = vmatprep.subr.mxu0 0.0
        %1941 = vmatpush2.msra.mxu0 0.0
        %1942 = vmatprep.subr.mxu0 0.0
        %1943 = vmatpush2.msra.mxu0 0.0
        %1944 = vmatprep.subr.mxu0 0.0
        %1945 = vmatpush2.msra.mxu0 0.0
        %1946 = vmatprep.subr.mxu0 0.0
        %1947 = vmatpush2.msra.mxu0 0.0
        %1948 = vmatprep.subr.mxu0 0.0
        %1949 = vmatpush2.msra.mxu0 0.0
        %1950 = vmatprep.subr.mxu0 0.0
        %1951 = vmatpush2.msra.mxu0 0.0
        %1952 = vmatprep.subr.mxu0 0.0
        %1953 = vmatpush2.msra.mxu0 0.0
        %1954 = vmatprep.mubr.f32.mxu0 0.0
        %1955 = vmatmul.mubr.f32.gmra.mxu0 %v1869
        %v1956 = vpop.f32.mrf.mxu0
        %v1957 = vadd.f32 %v1889, %v1956
        %v1958 = vpop.f32.mrf.mxu0
        %1959 = vdwg.mxu0
        %v1960 = vadd.f32 %v1745, %v1957
        %1961 = vst.msk [vmem:[%s404] sm:$0xff] %vm683, %v1960
        %s1962 = sand.u32 %s288, 1
        %s1963 = scalar_lea.sflag [#allocation5], %s1962
        %s1964 = sand.u32 %s288, 1
        %s1965 = smul.addr %s1964, 8
        %s1966 = scalar_lea.vmem [#allocation4], %s1965
        // Predicated region
        $region69: #{tpu_custom_call.1} parent=63 // pred_check
          %p1967 = pneg %p298
        $region70: #{tpu_custom_call.1} parent=63 // pred_check_branch
          %1969 = sbr.rel (%p1967) target = $region72
        $region71: #{tpu_custom_call.1} parent=63 // pred_region
          %s1971 = ssub.s32 128, 128
          %1972 = vsyncadd %s1963, %s1971
          %s1973 = smul.addr %s29, 2
          %s1974 = sadd.s32 %s30, %s1973
          %s1975 = smul.addr %s1974, 128
          %s1976 = scalar_lea.hbm %s11, %s1975
          %s1978 = sshll.u32 %s1966, 4
          %s1979 = int_to_ptr.vmem [resolvable:$true] %s1978
          %1981 = dma.vmem_to_hbm [thread:$0]  %s1979, 128, %s1976, %s1963
        $region72: #{tpu_custom_call.1} parent=63 // pred_fallthru
          _
      $region64: #{tpu_custom_call.1} parent=5 // pred_fallthru
        _
      %p1982 = scmp.le.s32.totalorder 2, %s20
      // Predicated region
      $region73: #{tpu_custom_call.1} parent=5 // pred_check
        %p1983 = pneg %p1982
      $region74: #{tpu_custom_call.1} parent=5 // pred_check_branch
        %1985 = sbr.rel (%p1983) target = $region76
      $region75: #{tpu_custom_call.1} parent=5 // pred_region
        %s1986 = ssub.s32 %s20, 2
        // Predicated region
        $region77: #{tpu_custom_call.1} parent=75 // pred_check
          %p1987 = pneg %p304
        $region78: #{tpu_custom_call.1} parent=75 // pred_check_branch
          %1989 = sbr.rel (%p1987) target = $region80
        $region79: #{tpu_custom_call.1} parent=75 // pred_region
          %s1990 = sand.u32 %s289, 1
          %s1991 = scalar_lea.sflag [#allocation5], %s1990
          %s1992 = sand.u32 %s289, 1
          %s1993 = smul.addr %s1992, 8
          %s1994 = scalar_lea.vmem [#allocation4], %s1993
          %1995 = dma.done %s1991, 128
        $region80: #{tpu_custom_call.1} parent=75 // pred_fallthru
          _
      $region76: #{tpu_custom_call.1} parent=5 // pred_fallthru
        _
    $region6: #{tpu_custom_call.1} parent=1 // loop_footer
      %s24 = sadd.s32 1, %s20
    $region7: #{tpu_custom_call.1} parent=1 // loop_footer_branch
      %19 = sbr.rel target = $region3
    $region8: #{tpu_custom_call.1} parent=1 // loop_exit
      _
    %1996 = vsyncpa [#allocation5], 1
    %s1997 = scalar_lea.sflag [#allocation5], 1
    %1998 = vsyncpa %s1997, 1

</llo_original>
